<compile_context>
chip_gen: v7x
topology: tpu7x:2x2x1
jax: 0.10.0
libtpu: 0.0.40
codegen_flags: <defaults>
</compile_context>

<pallas_src>
import math
import functools

import numpy as np
import jax
import jax.numpy as jnp
from jax.experimental import pallas as pl
from jax.experimental.pallas import tpu as pltpu

NEG = -1e9  # stand-in for -inf so fully-masked math stays finite


# ---------------------------------------------------------------------------
# shared math helpers (f32 elementwise everywhere)
# ---------------------------------------------------------------------------
def _layernorm(x, g, b, eps=1e-5):
    mu = jnp.mean(x, axis=-1, keepdims=True)
    var = jnp.mean((x - mu) ** 2, axis=-1, keepdims=True)
    return (x - mu) * jax.lax.rsqrt(var + eps) * g + b


# ---------------------------------------------------------------------------
# kernel-side multi-head attention on a flattened (N = block_b*S, E) row slab
# ---------------------------------------------------------------------------
def _mha_block(xq, xkv, in_w_ref, in_b_ref, out_w_ref, out_b_ref,
               fmask, pad_neg, *, n_head, block_b, seq_len):
    """fmask: (S, S) additive; pad_neg: (Bt, 1, S) additive (already * NEG)."""
    N, E = xq.shape
    Bt, S, H = block_b, seq_len, n_head
    dh = E // H
    scale = 1.0 / math.sqrt(dh)

    # bf16 at the MXU inputs only, f32 accumulation (preferred_element_type).
    xq16 = xq.astype(jnp.bfloat16)
    xkv16 = xkv.astype(jnp.bfloat16)

    # Separate Q / K / V dots on Ref slices of the packed (E, 3E) weight:
    # slicing the Ref is a plain (offset) load, not an activation relayout.
    q = (jnp.dot(xq16, in_w_ref[:, 0:E],
                 preferred_element_type=jnp.float32) + in_b_ref[0:1, 0:E]) * scale
    k = jnp.dot(xkv16, in_w_ref[:, E:2 * E],
                preferred_element_type=jnp.float32) + in_b_ref[0:1, E:2 * E]
    v = jnp.dot(xkv16, in_w_ref[:, 2 * E:3 * E],
                preferred_element_type=jnp.float32) + in_b_ref[0:1, 2 * E:3 * E]

    # Per-head score/softmax/context (tiny dh=8 matmuls, batched over Bt);
    # masks are added straight onto the score tile — never materialised as a
    # standalone (Bt, S, S) array.
    ctx_heads = []
    for h in range(H):                              # static unroll, H small
        sl = slice(h * dh, (h + 1) * dh)
        qh = q[:, sl].reshape(Bt, S, dh)
        kh = k[:, sl].reshape(Bt, S, dh)
        vh = v[:, sl].reshape(Bt, S, dh)

        s = jnp.einsum('bqd,bkd->bqk', qh, kh,
                       preferred_element_type=jnp.float32)
        s = s + fmask[None, :, :] + pad_neg                     # (Bt, S, S)
        s = s - jnp.max(s, axis=-1, keepdims=True)
        p = jnp.exp(s)
        p = p * pl.reciprocal(jnp.sum(p, axis=-1, keepdims=True), approx=True)

        ctx = jnp.einsum('bqk,bkd->bqd', p, vh,
                         preferred_element_type=jnp.float32)
        ctx_heads.append(ctx.reshape(N, dh))

    # ONE lane-concat + ONE K=E output projection (replaces H accumulating
    # K=dh dots).
    ctx_all = jnp.concatenate(ctx_heads, axis=-1)               # (N, E)
    return jnp.dot(ctx_all.astype(jnp.bfloat16), out_w_ref[...],
                   preferred_element_type=jnp.float32) + out_b_ref[0:1, :]


# ---------------------------------------------------------------------------
# Pallas kernel: whole decoder layer for `block_b` batch elements per grid step
# ---------------------------------------------------------------------------
def decoder_kernel(tgt_ref, src_ref, fmask_ref, tgt_pad_ref, src_pad_ref,
                   sa_in_w_ref, sa_in_b_ref, sa_out_w_ref, sa_out_b_ref,
                   ca_in_w_ref, ca_in_b_ref, ca_out_w_ref, ca_out_b_ref,
                   ln_g_ref, ln_b_ref,
                   w1_ref, b1_ref, w2_ref, b2_ref,
                   out_ref, *, n_head, block_b, seq_len):
    Bt, S = block_b, seq_len
    tgt2 = tgt_ref[...]                    # (N, E) rows = (batch, seq) flattened
    src2 = src_ref[...]                    # (N, E)
    fmask = fmask_ref[...]                 # (S, S) additive
    tgt_pad_neg = tgt_pad_ref[...] * NEG   # (Bt, 1, S)  1.0==pad -> NEG
    src_pad_neg = src_pad_ref[...] * NEG   # (Bt, 1, S)

    # ----- self attention + residual + LayerNorm 1 -----
    sa = _mha_block(tgt2, tgt2, sa_in_w_ref, sa_in_b_ref,
                    sa_out_w_ref, sa_out_b_ref, fmask, tgt_pad_neg,
                    n_head=n_head, block_b=Bt, seq_len=S)
    x = _layernorm(tgt2 + sa, ln_g_ref[0:1, :], ln_b_ref[0:1, :])

    # ----- cross attention + residual + LayerNorm 2 -----
    ca = _mha_block(x, src2, ca_in_w_ref, ca_in_b_ref,
                    ca_out_w_ref, ca_out_b_ref, fmask, src_pad_neg,
                    n_head=n_head, block_b=Bt, seq_len=S)
    x = _layernorm(x + ca, ln_g_ref[1:2, :], ln_b_ref[1:2, :])

    # ----- feed-forward (dropout == identity in eval) + residual + LN 3 -----
    h = jnp.maximum(
        jnp.dot(x.astype(jnp.bfloat16), w1_ref[...],
                preferred_element_type=jnp.float32) + b1_ref[...], 0.0)
    ff = jnp.dot(h.astype(jnp.bfloat16), w2_ref[...],
                 preferred_element_type=jnp.float32) + b2_ref[...]
    x = _layernorm(x + ff, ln_g_ref[2:3, :], ln_b_ref[2:3, :])

    # Natural (N, E) row store — zero in-kernel relayout (see header comment).
    out_ref[...] = x.astype(out_ref.dtype)


def _default_block_b(B, S):
    """>=2 grid steps on 2-TC chips (v4/v5p/v7x) so "parallel" uses both cores;
    one fat step on single-TC chips (v5e/v6e) to amortise per-step overhead."""
    kind = ""
    try:
        kind = jax.devices()[0].device_kind.lower()
    except Exception:
        pass
    single_tc = any(t in kind for t in ("v2", "v3", "v5 lite", "v5e", "v6"))
    if (not single_tc) and B % 2 == 0 and ((B // 2) * S) % 8 == 0:
        return B // 2
    return B


def multivar_transformer_decoder(tgt, encoded_src, future_mask,
                                 src_pad_mask, tgt_pad_mask, params, n_head,
                                 block_b=None):
    B, S, E = tgt.shape
    F = params["w1"].shape[1]
    assert E % n_head == 0

    if block_b is None:
        block_b = _default_block_b(B, S)
    if B % block_b != 0 or (block_b != B and (block_b * S) % 8 != 0):
        block_b = B                          # safe fallback: one grid step
    Bt = block_b
    n_blocks = B // Bt
    N = Bt * S

    # flatten (B, S, E) -> (B*S, E): kernel works directly on row slabs
    tgt2 = tgt.reshape(B * S, E)
    src2 = encoded_src.reshape(B * S, E)
    tgt_pad3 = tgt_pad_mask.reshape(B, 1, S).astype(jnp.float32)
    src_pad3 = src_pad_mask.reshape(B, 1, S).astype(jnp.float32)

    # weight matrices in bf16 (MXU operands, half the resident VMEM);
    # biases / LayerNorm params stay f32 (added in f32).
    wdt = jnp.bfloat16
    sa_in_w = params["sa_in_w"].astype(wdt)
    sa_out_w = params["sa_out_w"].astype(wdt)
    ca_in_w = params["ca_in_w"].astype(wdt)
    ca_out_w = params["ca_out_w"].astype(wdt)
    w1 = params["w1"].astype(wdt)
    w2 = params["w2"].astype(wdt)

    def full(shape):
        return pl.BlockSpec(shape, lambda b, _n=len(shape): (0,) * _n)

    rows = pl.BlockSpec((N, E), lambda b: (b, 0))
    pads = pl.BlockSpec((Bt, 1, S), lambda b: (b, 0, 0))

    in_specs = [
        rows, rows,                   # tgt, encoded_src (flattened rows)
        full((S, S)),                 # future_mask
        pads, pads,                   # tgt_pad, src_pad
        full((E, 3 * E)), full((1, 3 * E)), full((E, E)), full((1, E)),   # self-attn
        full((E, 3 * E)), full((1, 3 * E)), full((E, E)), full((1, E)),   # cross-attn
        full((3, E)), full((3, E)),                                        # LN gamma/beta
        full((E, F)), full((1, F)), full((F, E)), full((1, E)),            # FFN
    ]

    kernel = functools.partial(decoder_kernel, n_head=n_head, block_b=Bt, seq_len=S)
    out_rows = pl.pallas_call(
        kernel,
        out_shape=jax.ShapeDtypeStruct((B * S, E), jnp.float32),
        grid_spec=pltpu.PrefetchScalarGridSpec(
            num_scalar_prefetch=0,
            grid=(n_blocks,),
            in_specs=in_specs,
            out_specs=pl.BlockSpec((N, E), lambda b: (b, 0)),
        ),
        # batch blocks are fully independent -> "parallel" (sharded on 2-TC chips)
        compiler_params=pltpu.CompilerParams(
            dimension_semantics=("parallel",),
            vmem_limit_bytes=32 * 1024 * 1024,   # v5e scoped default is only 16 MiB
        ),
    )(tgt2, src2, future_mask, tgt_pad3, src_pad3,
      sa_in_w, params["sa_in_b"], sa_out_w, params["sa_out_b"],
      ca_in_w, params["ca_in_b"], ca_out_w, params["ca_out_b"],
      params["ln_g"], params["ln_b"],
      w1, params["b1"], w2, params["b2"])
    return out_rows.reshape(B, S, E)


# ---------------------------------------------------------------------------
# independent pure-JAX reference (per-sample, straightforward style, f32)
# ---------------------------------------------------------------------------
def _mha_ref(xq, xkv, in_w, in_b, out_w, out_b, add_mask, n_head):
    S, E = xq.shape
    dh = E // n_head
    scale = 1.0 / math.sqrt(dh)
    q = xq @ in_w[:, 0:E] + in_b[0, 0:E]
    k = xkv @ in_w[:, E:2 * E] + in_b[0, E:2 * E]
    v = xkv @ in_w[:, 2 * E:] + in_b[0, 2 * E:]
    q = q.reshape(S, n_head, dh).transpose(1, 0, 2)
    k = k.reshape(S, n_head, dh).transpose(1, 0, 2)
    v = v.reshape(S, n_head, dh).transpose(1, 0, 2)
    s = jnp.einsum('hqd,hkd->hqk', q, k) * scale + add_mask[None]
    p = jax.nn.softmax(s, axis=-1)
    ctx = jnp.einsum('hqk,hkd->hqd', p, v).transpose(1, 0, 2).reshape(S, E)
    return ctx @ out_w + out_b[0]


def reference(tgt, src, fmask, src_pad, tgt_pad, params, n_head):
    def one(tgt_b, src_b, tpad_b, spad_b):
        mask_sa = fmask + tpad_b[None, :] * NEG
        sa = _mha_ref(tgt_b, tgt_b, params["sa_in_w"], params["sa_in_b"],
                      params["sa_out_w"], params["sa_out_b"], mask_sa, n_head)
        x = _layernorm(tgt_b + sa, params["ln_g"][0:1], params["ln_b"][0:1])
        mask_ca = fmask + spad_b[None, :] * NEG
        ca = _mha_ref(x, src_b, params["ca_in_w"], params["ca_in_b"],
                      params["ca_out_w"], params["ca_out_b"], mask_ca, n_head)
        x = _layernorm(x + ca, params["ln_g"][1:2], params["ln_b"][1:2])
        h = jnp.maximum(x @ params["w1"] + params["b1"], 0.0)
        ff = h @ params["w2"] + params["b2"]
        return _layernorm(x + ff, params["ln_g"][2:3], params["ln_b"][2:3])
    return jax.vmap(one)(tgt, src, tgt_pad, src_pad)


if __name__ == "__main__":
    B, S, E, H, FF = 2, 8, 32, 4, 64

    key = jax.random.PRNGKey(0)
    ks = jax.random.split(key, 16)

    def rnd(k, shape, scale=0.05):
        return jax.random.normal(k, shape, dtype=jnp.float32) * scale

    params = {
        "sa_in_w": rnd(ks[0], (E, 3 * E)), "sa_in_b": rnd(ks[1], (1, 3 * E)),
        "sa_out_w": rnd(ks[2], (E, E)), "sa_out_b": rnd(ks[3], (1, E)),
        "ca_in_w": rnd(ks[4], (E, 3 * E)), "ca_in_b": rnd(ks[5], (1, 3 * E)),
        "ca_out_w": rnd(ks[6], (E, E)), "ca_out_b": rnd(ks[7], (1, E)),
        "ln_g": jnp.ones((3, E), jnp.float32), "ln_b": jnp.zeros((3, E), jnp.float32),
        "w1": rnd(ks[8], (E, FF)), "b1": rnd(ks[9], (1, FF)),
        "w2": rnd(ks[10], (FF, E)), "b2": rnd(ks[11], (1, E)),
    }

    tgt = jax.random.normal(ks[12], (B, S, E), dtype=jnp.float32)
    encoded_src = jax.random.normal(ks[13], (B, S, E), dtype=jnp.float32)

    # causal future mask (additive): 0 on/below diagonal, NEG above
    idx = jnp.arange(S)
    future_mask = jnp.where(idx[:, None] >= idx[None, :], 0.0, NEG).astype(jnp.float32)

    # padding masks: pad last source position of batch 1; no target padding
    tgt_pad_mask = jnp.zeros((B, S), jnp.float32)
    src_pad_mask = jnp.zeros((B, S), jnp.float32).at[1, S - 1].set(1.0)

    out = multivar_transformer_decoder(
        tgt, encoded_src, future_mask, src_pad_mask, tgt_pad_mask, params, H)
    out = jax.block_until_ready(out)

    ref = reference(tgt, encoded_src, future_mask, src_pad_mask, tgt_pad_mask, params, H)
    np.testing.assert_allclose(np.asarray(out), np.asarray(ref), rtol=2e-2, atol=2e-2)

    print("KERNEL_OK")
</pallas_src>

<mosaic_0001>
module attributes {stable_mosaic.version = 11 : i64} {
  func.func @decoder_kernel(%arg0: i32, %arg1: memref<8x32xf32, #tpu.memory_space<vmem>>, %arg2: memref<8x32xf32, #tpu.memory_space<vmem>>, %arg3: memref<8x8xf32, #tpu.memory_space<vmem>>, %arg4: memref<1x1x8xf32, #tpu.memory_space<vmem>>, %arg5: memref<1x1x8xf32, #tpu.memory_space<vmem>>, %arg6: memref<32x96xbf16, #tpu.memory_space<vmem>>, %arg7: memref<1x96xf32, #tpu.memory_space<vmem>>, %arg8: memref<32x32xbf16, #tpu.memory_space<vmem>>, %arg9: memref<1x32xf32, #tpu.memory_space<vmem>>, %arg10: memref<32x96xbf16, #tpu.memory_space<vmem>>, %arg11: memref<1x96xf32, #tpu.memory_space<vmem>>, %arg12: memref<32x32xbf16, #tpu.memory_space<vmem>>, %arg13: memref<1x32xf32, #tpu.memory_space<vmem>>, %arg14: memref<3x32xf32, #tpu.memory_space<vmem>>, %arg15: memref<3x32xf32, #tpu.memory_space<vmem>>, %arg16: memref<32x64xbf16, #tpu.memory_space<vmem>>, %arg17: memref<1x64xf32, #tpu.memory_space<vmem>>, %arg18: memref<64x32xbf16, #tpu.memory_space<vmem>>, %arg19: memref<1x32xf32, #tpu.memory_space<vmem>>, %arg20: memref<8x32xf32, #tpu.memory_space<vmem>>) attributes {dimension_semantics = [#tpu.dimension_semantics<parallel>], iteration_bounds = array<i64: 2>, scalar_prefetch = 0 : i64, scratch_operands = 0 : i64, tpu.core_type = #tpu.core_type<tc>, window_params = [{transform_indices = @transform_0, window_bounds = array<i64: 8, 32>}, {transform_indices = @transform_1, window_bounds = array<i64: 8, 32>}, {pipeline_mode = #tpu.pipeline_mode<synchronous>, transform_indices = @transform_2, window_bounds = array<i64: 8, 8>}, {transform_indices = @transform_3, window_bounds = array<i64: 1, 1, 8>}, {transform_indices = @transform_4, window_bounds = array<i64: 1, 1, 8>}, {pipeline_mode = #tpu.pipeline_mode<synchronous>, transform_indices = @transform_5, window_bounds = array<i64: 32, 96>}, {pipeline_mode = #tpu.pipeline_mode<synchronous>, transform_indices = @transform_6, window_bounds = array<i64: 1, 96>}, {pipeline_mode = #tpu.pipeline_mode<synchronous>, transform_indices = @transform_7, window_bounds = array<i64: 32, 32>}, {pipeline_mode = #tpu.pipeline_mode<synchronous>, transform_indices = @transform_8, window_bounds = array<i64: 1, 32>}, {pipeline_mode = #tpu.pipeline_mode<synchronous>, transform_indices = @transform_9, window_bounds = array<i64: 32, 96>}, {pipeline_mode = #tpu.pipeline_mode<synchronous>, transform_indices = @transform_10, window_bounds = array<i64: 1, 96>}, {pipeline_mode = #tpu.pipeline_mode<synchronous>, transform_indices = @transform_11, window_bounds = array<i64: 32, 32>}, {pipeline_mode = #tpu.pipeline_mode<synchronous>, transform_indices = @transform_12, window_bounds = array<i64: 1, 32>}, {pipeline_mode = #tpu.pipeline_mode<synchronous>, transform_indices = @transform_13, window_bounds = array<i64: 3, 32>}, {pipeline_mode = #tpu.pipeline_mode<synchronous>, transform_indices = @transform_14, window_bounds = array<i64: 3, 32>}, {pipeline_mode = #tpu.pipeline_mode<synchronous>, transform_indices = @transform_15, window_bounds = array<i64: 32, 64>}, {pipeline_mode = #tpu.pipeline_mode<synchronous>, transform_indices = @transform_16, window_bounds = array<i64: 1, 64>}, {pipeline_mode = #tpu.pipeline_mode<synchronous>, transform_indices = @transform_17, window_bounds = array<i64: 64, 32>}, {pipeline_mode = #tpu.pipeline_mode<synchronous>, transform_indices = @transform_18, window_bounds = array<i64: 1, 32>}, {transform_indices = @transform_19, window_bounds = array<i64: 8, 32>}]} {
    %c0 = arith.constant 0 : index
    %c0_0 = arith.constant 0 : index
    %0 = vector.load %arg1[%c0, %c0_0] : memref<8x32xf32, #tpu.memory_space<vmem>>, vector<8x32xf32>
    %c0_1 = arith.constant 0 : index
    %c0_2 = arith.constant 0 : index
    %1 = vector.load %arg2[%c0_1, %c0_2] : memref<8x32xf32, #tpu.memory_space<vmem>>, vector<8x32xf32>
    %c0_3 = arith.constant 0 : index
    %c0_4 = arith.constant 0 : index
    %2 = vector.load %arg3[%c0_3, %c0_4] : memref<8x8xf32, #tpu.memory_space<vmem>>, vector<8x8xf32>
    %c0_5 = arith.constant 0 : index
    %c0_6 = arith.constant 0 : index
    %c0_7 = arith.constant 0 : index
    %3 = vector.load %arg4[%c0_5, %c0_6, %c0_7] : memref<1x1x8xf32, #tpu.memory_space<vmem>>, vector<1x1x8xf32>
    %cst = arith.constant -1.000000e+09 : f32
    %4 = vector.broadcast %cst : f32 to vector<1x1x8xf32>
    %5 = arith.mulf %3, %4 : vector<1x1x8xf32>
    %c0_8 = arith.constant 0 : index
    %c0_9 = arith.constant 0 : index
    %c0_10 = arith.constant 0 : index
    %6 = vector.load %arg5[%c0_8, %c0_9, %c0_10] : memref<1x1x8xf32, #tpu.memory_space<vmem>>, vector<1x1x8xf32>
    %cst_11 = arith.constant -1.000000e+09 : f32
    %7 = vector.broadcast %cst_11 : f32 to vector<1x1x8xf32>
    %8 = arith.mulf %6, %7 : vector<1x1x8xf32>
    %9 = arith.truncf %0 : vector<8x32xf32> to vector<8x32xbf16>
    %10 = arith.truncf %0 : vector<8x32xf32> to vector<8x32xbf16>
    %c0_12 = arith.constant 0 : index
    %c0_13 = arith.constant 0 : index
    %11 = vector.load %arg6[%c0_12, %c0_13] : memref<32x96xbf16, #tpu.memory_space<vmem>>, vector<32x32xbf16>
    %cst_14 = arith.constant dense<0.000000e+00> : vector<8x32xf32>
    %12 = tpu.matmul %9, %11, %cst_14 {dimension_numbers = #tpu.dot_dimension_numbers<[1], [0], [0], [1], [0, 0, 1, 1], [], []>} : vector<8x32xbf16>, vector<32x32xbf16>, vector<8x32xf32> -> vector<8x32xf32>
    %c0_15 = arith.constant 0 : index
    %c0_16 = arith.constant 0 : index
    %13 = vector.load %arg7[%c0_15, %c0_16] : memref<1x96xf32, #tpu.memory_space<vmem>>, vector<1x32xf32>
    %14 = vector.broadcast %13 : vector<1x32xf32> to vector<8x32xf32>
    %15 = arith.addf %12, %14 : vector<8x32xf32>
    %cst_17 = arith.constant 0.353553385 : f32
    %16 = vector.broadcast %cst_17 : f32 to vector<8x32xf32>
    %17 = arith.mulf %15, %16 : vector<8x32xf32>
    %c0_18 = arith.constant 0 : index
    %c32 = arith.constant 32 : index
    %18 = vector.load %arg6[%c0_18, %c32] : memref<32x96xbf16, #tpu.memory_space<vmem>>, vector<32x32xbf16>
    %cst_19 = arith.constant dense<0.000000e+00> : vector<8x32xf32>
    %19 = tpu.matmul %10, %18, %cst_19 {dimension_numbers = #tpu.dot_dimension_numbers<[1], [0], [0], [1], [0, 0, 1, 1], [], []>} : vector<8x32xbf16>, vector<32x32xbf16>, vector<8x32xf32> -> vector<8x32xf32>
    %c0_20 = arith.constant 0 : index
    %c32_21 = arith.constant 32 : index
    %20 = vector.load %arg7[%c0_20, %c32_21] : memref<1x96xf32, #tpu.memory_space<vmem>>, vector<1x32xf32>
    %21 = vector.broadcast %20 : vector<1x32xf32> to vector<8x32xf32>
    %22 = arith.addf %19, %21 : vector<8x32xf32>
    %c0_22 = arith.constant 0 : index
    %c64 = arith.constant 64 : index
    %23 = vector.load %arg6[%c0_22, %c64] : memref<32x96xbf16, #tpu.memory_space<vmem>>, vector<32x32xbf16>
    %cst_23 = arith.constant dense<0.000000e+00> : vector<8x32xf32>
    %24 = tpu.matmul %10, %23, %cst_23 {dimension_numbers = #tpu.dot_dimension_numbers<[1], [0], [0], [1], [0, 0, 1, 1], [], []>} : vector<8x32xbf16>, vector<32x32xbf16>, vector<8x32xf32> -> vector<8x32xf32>
    %c0_24 = arith.constant 0 : index
    %c64_25 = arith.constant 64 : index
    %25 = vector.load %arg7[%c0_24, %c64_25] : memref<1x96xf32, #tpu.memory_space<vmem>>, vector<1x32xf32>
    %26 = vector.broadcast %25 : vector<1x32xf32> to vector<8x32xf32>
    %27 = arith.addf %24, %26 : vector<8x32xf32>
    %28 = vector.extract_strided_slice %17 {offsets = [0, 0], sizes = [8, 8], strides = [1, 1]} : vector<8x32xf32> to vector<8x8xf32>
    %29 = vector.shape_cast %28 : vector<8x8xf32> to vector<1x8x8xf32>
    %30 = vector.extract_strided_slice %22 {offsets = [0, 0], sizes = [8, 8], strides = [1, 1]} : vector<8x32xf32> to vector<8x8xf32>
    %31 = vector.shape_cast %30 : vector<8x8xf32> to vector<1x8x8xf32>
    %32 = vector.extract_strided_slice %27 {offsets = [0, 0], sizes = [8, 8], strides = [1, 1]} : vector<8x32xf32> to vector<8x8xf32>
    %33 = vector.shape_cast %32 : vector<8x8xf32> to vector<1x8x8xf32>
    "tpu.trace_start"() <{level = 10 : i32, message = "bqd,bkd->bqk"}> : () -> ()
    %cst_26 = arith.constant dense<0.000000e+00> : vector<1x8x8xf32>
    %34 = tpu.matmul %29, %31, %cst_26 {dimension_numbers = #tpu.dot_dimension_numbers<[2], [2], [1], [1], [0, 0, 0, 1, 1, 1], [0], [0]>} : vector<1x8x8xf32>, vector<1x8x8xf32>, vector<1x8x8xf32> -> vector<1x8x8xf32>
    "tpu.trace_stop"() : () -> ()
    %35 = vector.shape_cast %2 : vector<8x8xf32> to vector<1x8x8xf32>
    %36 = arith.addf %34, %35 : vector<1x8x8xf32>
    %37 = vector.broadcast %5 : vector<1x1x8xf32> to vector<1x8x8xf32>
    %38 = arith.addf %36, %37 : vector<1x8x8xf32>
    %cst_27 = arith.constant dense<0xFF800000> : vector<1x8xf32>
    %39 = vector.multi_reduction <maximumf>, %38, %cst_27 [2] : vector<1x8x8xf32> to vector<1x8xf32>
    %40 = vector.shape_cast %39 : vector<1x8xf32> to vector<1x8x1xf32>
    %41 = vector.broadcast %40 : vector<1x8x1xf32> to vector<1x8x8xf32>
    %42 = arith.subf %38, %41 : vector<1x8x8xf32>
    %43 = math.exp %42 : vector<1x8x8xf32>
    %cst_28 = arith.constant dense<0.000000e+00> : vector<1x8xf32>
    %44 = vector.multi_reduction <add>, %43, %cst_28 [2] : vector<1x8x8xf32> to vector<1x8xf32>
    %45 = vector.shape_cast %44 : vector<1x8xf32> to vector<1x8x1xf32>
    %46 = tpu.reciprocal %45 {approx = true} : vector<1x8x1xf32> -> vector<1x8x1xf32>
    %47 = vector.broadcast %46 : vector<1x8x1xf32> to vector<1x8x8xf32>
    %48 = arith.mulf %43, %47 : vector<1x8x8xf32>
    "tpu.trace_start"() <{level = 10 : i32, message = "bqk,bkd->bqd"}> : () -> ()
    %cst_29 = arith.constant dense<0.000000e+00> : vector<1x8x8xf32>
    %49 = tpu.matmul %48, %33, %cst_29 {dimension_numbers = #tpu.dot_dimension_numbers<[2], [1], [1], [2], [0, 0, 0, 1, 1, 2], [0], [0]>} : vector<1x8x8xf32>, vector<1x8x8xf32>, vector<1x8x8xf32> -> vector<1x8x8xf32>
    "tpu.trace_stop"() : () -> ()
    %50 = vector.shape_cast %49 : vector<1x8x8xf32> to vector<8x8xf32>
    %51 = vector.extract_strided_slice %17 {offsets = [0, 8], sizes = [8, 8], strides = [1, 1]} : vector<8x32xf32> to vector<8x8xf32>
    %52 = vector.shape_cast %51 : vector<8x8xf32> to vector<1x8x8xf32>
    %53 = vector.extract_strided_slice %22 {offsets = [0, 8], sizes = [8, 8], strides = [1, 1]} : vector<8x32xf32> to vector<8x8xf32>
    %54 = vector.shape_cast %53 : vector<8x8xf32> to vector<1x8x8xf32>
    %55 = vector.extract_strided_slice %27 {offsets = [0, 8], sizes = [8, 8], strides = [1, 1]} : vector<8x32xf32> to vector<8x8xf32>
    %56 = vector.shape_cast %55 : vector<8x8xf32> to vector<1x8x8xf32>
    "tpu.trace_start"() <{level = 10 : i32, message = "bqd,bkd->bqk"}> : () -> ()
    %cst_30 = arith.constant dense<0.000000e+00> : vector<1x8x8xf32>
    %57 = tpu.matmul %52, %54, %cst_30 {dimension_numbers = #tpu.dot_dimension_numbers<[2], [2], [1], [1], [0, 0, 0, 1, 1, 1], [0], [0]>} : vector<1x8x8xf32>, vector<1x8x8xf32>, vector<1x8x8xf32> -> vector<1x8x8xf32>
    "tpu.trace_stop"() : () -> ()
    %58 = vector.shape_cast %2 : vector<8x8xf32> to vector<1x8x8xf32>
    %59 = arith.addf %57, %58 : vector<1x8x8xf32>
    %60 = vector.broadcast %5 : vector<1x1x8xf32> to vector<1x8x8xf32>
    %61 = arith.addf %59, %60 : vector<1x8x8xf32>
    %cst_31 = arith.constant dense<0xFF800000> : vector<1x8xf32>
    %62 = vector.multi_reduction <maximumf>, %61, %cst_31 [2] : vector<1x8x8xf32> to vector<1x8xf32>
    %63 = vector.shape_cast %62 : vector<1x8xf32> to vector<1x8x1xf32>
    %64 = vector.broadcast %63 : vector<1x8x1xf32> to vector<1x8x8xf32>
    %65 = arith.subf %61, %64 : vector<1x8x8xf32>
    %66 = math.exp %65 : vector<1x8x8xf32>
    %cst_32 = arith.constant dense<0.000000e+00> : vector<1x8xf32>
    %67 = vector.multi_reduction <add>, %66, %cst_32 [2] : vector<1x8x8xf32> to vector<1x8xf32>
    %68 = vector.shape_cast %67 : vector<1x8xf32> to vector<1x8x1xf32>
    %69 = tpu.reciprocal %68 {approx = true} : vector<1x8x1xf32> -> vector<1x8x1xf32>
    %70 = vector.broadcast %69 : vector<1x8x1xf32> to vector<1x8x8xf32>
    %71 = arith.mulf %66, %70 : vector<1x8x8xf32>
    "tpu.trace_start"() <{level = 10 : i32, message = "bqk,bkd->bqd"}> : () -> ()
    %cst_33 = arith.constant dense<0.000000e+00> : vector<1x8x8xf32>
    %72 = tpu.matmul %71, %56, %cst_33 {dimension_numbers = #tpu.dot_dimension_numbers<[2], [1], [1], [2], [0, 0, 0, 1, 1, 2], [0], [0]>} : vector<1x8x8xf32>, vector<1x8x8xf32>, vector<1x8x8xf32> -> vector<1x8x8xf32>
    "tpu.trace_stop"() : () -> ()
    %73 = vector.shape_cast %72 : vector<1x8x8xf32> to vector<8x8xf32>
    %74 = vector.extract_strided_slice %17 {offsets = [0, 16], sizes = [8, 8], strides = [1, 1]} : vector<8x32xf32> to vector<8x8xf32>
    %75 = vector.shape_cast %74 : vector<8x8xf32> to vector<1x8x8xf32>
    %76 = vector.extract_strided_slice %22 {offsets = [0, 16], sizes = [8, 8], strides = [1, 1]} : vector<8x32xf32> to vector<8x8xf32>
    %77 = vector.shape_cast %76 : vector<8x8xf32> to vector<1x8x8xf32>
    %78 = vector.extract_strided_slice %27 {offsets = [0, 16], sizes = [8, 8], strides = [1, 1]} : vector<8x32xf32> to vector<8x8xf32>
    %79 = vector.shape_cast %78 : vector<8x8xf32> to vector<1x8x8xf32>
    "tpu.trace_start"() <{level = 10 : i32, message = "bqd,bkd->bqk"}> : () -> ()
    %cst_34 = arith.constant dense<0.000000e+00> : vector<1x8x8xf32>
    %80 = tpu.matmul %75, %77, %cst_34 {dimension_numbers = #tpu.dot_dimension_numbers<[2], [2], [1], [1], [0, 0, 0, 1, 1, 1], [0], [0]>} : vector<1x8x8xf32>, vector<1x8x8xf32>, vector<1x8x8xf32> -> vector<1x8x8xf32>
    "tpu.trace_stop"() : () -> ()
    %81 = vector.shape_cast %2 : vector<8x8xf32> to vector<1x8x8xf32>
    %82 = arith.addf %80, %81 : vector<1x8x8xf32>
    %83 = vector.broadcast %5 : vector<1x1x8xf32> to vector<1x8x8xf32>
    %84 = arith.addf %82, %83 : vector<1x8x8xf32>
    %cst_35 = arith.constant dense<0xFF800000> : vector<1x8xf32>
    %85 = vector.multi_reduction <maximumf>, %84, %cst_35 [2] : vector<1x8x8xf32> to vector<1x8xf32>
    %86 = vector.shape_cast %85 : vector<1x8xf32> to vector<1x8x1xf32>
    %87 = vector.broadcast %86 : vector<1x8x1xf32> to vector<1x8x8xf32>
    %88 = arith.subf %84, %87 : vector<1x8x8xf32>
    %89 = math.exp %88 : vector<1x8x8xf32>
    %cst_36 = arith.constant dense<0.000000e+00> : vector<1x8xf32>
    %90 = vector.multi_reduction <add>, %89, %cst_36 [2] : vector<1x8x8xf32> to vector<1x8xf32>
    %91 = vector.shape_cast %90 : vector<1x8xf32> to vector<1x8x1xf32>
    %92 = tpu.reciprocal %91 {approx = true} : vector<1x8x1xf32> -> vector<1x8x1xf32>
    %93 = vector.broadcast %92 : vector<1x8x1xf32> to vector<1x8x8xf32>
    %94 = arith.mulf %89, %93 : vector<1x8x8xf32>
    "tpu.trace_start"() <{level = 10 : i32, message = "bqk,bkd->bqd"}> : () -> ()
    %cst_37 = arith.constant dense<0.000000e+00> : vector<1x8x8xf32>
    %95 = tpu.matmul %94, %79, %cst_37 {dimension_numbers = #tpu.dot_dimension_numbers<[2], [1], [1], [2], [0, 0, 0, 1, 1, 2], [0], [0]>} : vector<1x8x8xf32>, vector<1x8x8xf32>, vector<1x8x8xf32> -> vector<1x8x8xf32>
    "tpu.trace_stop"() : () -> ()
    %96 = vector.shape_cast %95 : vector<1x8x8xf32> to vector<8x8xf32>
    %97 = vector.extract_strided_slice %17 {offsets = [0, 24], sizes = [8, 8], strides = [1, 1]} : vector<8x32xf32> to vector<8x8xf32>
    %98 = vector.shape_cast %97 : vector<8x8xf32> to vector<1x8x8xf32>
    %99 = vector.extract_strided_slice %22 {offsets = [0, 24], sizes = [8, 8], strides = [1, 1]} : vector<8x32xf32> to vector<8x8xf32>
    %100 = vector.shape_cast %99 : vector<8x8xf32> to vector<1x8x8xf32>
    %101 = vector.extract_strided_slice %27 {offsets = [0, 24], sizes = [8, 8], strides = [1, 1]} : vector<8x32xf32> to vector<8x8xf32>
    %102 = vector.shape_cast %101 : vector<8x8xf32> to vector<1x8x8xf32>
    "tpu.trace_start"() <{level = 10 : i32, message = "bqd,bkd->bqk"}> : () -> ()
    %cst_38 = arith.constant dense<0.000000e+00> : vector<1x8x8xf32>
    %103 = tpu.matmul %98, %100, %cst_38 {dimension_numbers = #tpu.dot_dimension_numbers<[2], [2], [1], [1], [0, 0, 0, 1, 1, 1], [0], [0]>} : vector<1x8x8xf32>, vector<1x8x8xf32>, vector<1x8x8xf32> -> vector<1x8x8xf32>
    "tpu.trace_stop"() : () -> ()
    %104 = vector.shape_cast %2 : vector<8x8xf32> to vector<1x8x8xf32>
    %105 = arith.addf %103, %104 : vector<1x8x8xf32>
    %106 = vector.broadcast %5 : vector<1x1x8xf32> to vector<1x8x8xf32>
    %107 = arith.addf %105, %106 : vector<1x8x8xf32>
    %cst_39 = arith.constant dense<0xFF800000> : vector<1x8xf32>
    %108 = vector.multi_reduction <maximumf>, %107, %cst_39 [2] : vector<1x8x8xf32> to vector<1x8xf32>
    %109 = vector.shape_cast %108 : vector<1x8xf32> to vector<1x8x1xf32>
    %110 = vector.broadcast %109 : vector<1x8x1xf32> to vector<1x8x8xf32>
    %111 = arith.subf %107, %110 : vector<1x8x8xf32>
    %112 = math.exp %111 : vector<1x8x8xf32>
    %cst_40 = arith.constant dense<0.000000e+00> : vector<1x8xf32>
    %113 = vector.multi_reduction <add>, %112, %cst_40 [2] : vector<1x8x8xf32> to vector<1x8xf32>
    %114 = vector.shape_cast %113 : vector<1x8xf32> to vector<1x8x1xf32>
    %115 = tpu.reciprocal %114 {approx = true} : vector<1x8x1xf32> -> vector<1x8x1xf32>
    %116 = vector.broadcast %115 : vector<1x8x1xf32> to vector<1x8x8xf32>
    %117 = arith.mulf %112, %116 : vector<1x8x8xf32>
    "tpu.trace_start"() <{level = 10 : i32, message = "bqk,bkd->bqd"}> : () -> ()
    %cst_41 = arith.constant dense<0.000000e+00> : vector<1x8x8xf32>
    %118 = tpu.matmul %117, %102, %cst_41 {dimension_numbers = #tpu.dot_dimension_numbers<[2], [1], [1], [2], [0, 0, 0, 1, 1, 2], [0], [0]>} : vector<1x8x8xf32>, vector<1x8x8xf32>, vector<1x8x8xf32> -> vector<1x8x8xf32>
    "tpu.trace_stop"() : () -> ()
    %119 = vector.shape_cast %118 : vector<1x8x8xf32> to vector<8x8xf32>
    %120 = tpu.concatenate %50, %73, %96, %119 in 1 : vector<8x8xf32>, vector<8x8xf32>, vector<8x8xf32>, vector<8x8xf32> -> vector<8x32xf32>
    %121 = arith.truncf %120 : vector<8x32xf32> to vector<8x32xbf16>
    %c0_42 = arith.constant 0 : index
    %c0_43 = arith.constant 0 : index
    %122 = vector.load %arg8[%c0_42, %c0_43] : memref<32x32xbf16, #tpu.memory_space<vmem>>, vector<32x32xbf16>
    %cst_44 = arith.constant dense<0.000000e+00> : vector<8x32xf32>
    %123 = tpu.matmul %121, %122, %cst_44 {dimension_numbers = #tpu.dot_dimension_numbers<[1], [0], [0], [1], [0, 0, 1, 1], [], []>} : vector<8x32xbf16>, vector<32x32xbf16>, vector<8x32xf32> -> vector<8x32xf32>
    %c0_45 = arith.constant 0 : index
    %c0_46 = arith.constant 0 : index
    %124 = vector.load %arg9[%c0_45, %c0_46] : memref<1x32xf32, #tpu.memory_space<vmem>>, vector<1x32xf32>
    %125 = vector.broadcast %124 : vector<1x32xf32> to vector<8x32xf32>
    %126 = arith.addf %123, %125 : vector<8x32xf32>
    %127 = arith.addf %0, %126 : vector<8x32xf32>
    %c0_47 = arith.constant 0 : index
    %c0_48 = arith.constant 0 : index
    %128 = vector.load %arg14[%c0_47, %c0_48] : memref<3x32xf32, #tpu.memory_space<vmem>>, vector<1x32xf32>
    %c0_49 = arith.constant 0 : index
    %c0_50 = arith.constant 0 : index
    %129 = vector.load %arg15[%c0_49, %c0_50] : memref<3x32xf32, #tpu.memory_space<vmem>>, vector<1x32xf32>
    %cst_51 = arith.constant dense<0.000000e+00> : vector<8xf32>
    %130 = vector.multi_reduction <add>, %127, %cst_51 [1] : vector<8x32xf32> to vector<8xf32>
    %131 = vector.shape_cast %130 : vector<8xf32> to vector<8x1xf32>
    %cst_52 = arith.constant 3.200000e+01 : f32
    %132 = vector.broadcast %cst_52 : f32 to vector<8x1xf32>
    %133 = arith.divf %131, %132 : vector<8x1xf32>
    %134 = vector.broadcast %133 : vector<8x1xf32> to vector<8x32xf32>
    %135 = arith.subf %127, %134 : vector<8x32xf32>
    %136 = arith.mulf %135, %135 : vector<8x32xf32>
    %cst_53 = arith.constant dense<0.000000e+00> : vector<8xf32>
    %137 = vector.multi_reduction <add>, %136, %cst_53 [1] : vector<8x32xf32> to vector<8xf32>
    %138 = vector.shape_cast %137 : vector<8xf32> to vector<8x1xf32>
    %cst_54 = arith.constant 3.200000e+01 : f32
    %139 = vector.broadcast %cst_54 : f32 to vector<8x1xf32>
    %140 = arith.divf %138, %139 : vector<8x1xf32>
    %141 = vector.broadcast %133 : vector<8x1xf32> to vector<8x32xf32>
    %142 = arith.subf %127, %141 : vector<8x32xf32>
    %cst_55 = arith.constant 9.99999974E-6 : f32
    %143 = vector.broadcast %cst_55 : f32 to vector<8x1xf32>
    %144 = arith.addf %140, %143 : vector<8x1xf32>
    %145 = math.rsqrt %144 : vector<8x1xf32>
    %146 = vector.broadcast %145 : vector<8x1xf32> to vector<8x32xf32>
    %147 = arith.mulf %142, %146 : vector<8x32xf32>
    %148 = vector.broadcast %128 : vector<1x32xf32> to vector<8x32xf32>
    %149 = arith.mulf %147, %148 : vector<8x32xf32>
    %150 = vector.broadcast %129 : vector<1x32xf32> to vector<8x32xf32>
    %151 = arith.addf %149, %150 : vector<8x32xf32>
    %152 = arith.truncf %151 : vector<8x32xf32> to vector<8x32xbf16>
    %153 = arith.truncf %1 : vector<8x32xf32> to vector<8x32xbf16>
    %c0_56 = arith.constant 0 : index
    %c0_57 = arith.constant 0 : index
    %154 = vector.load %arg10[%c0_56, %c0_57] : memref<32x96xbf16, #tpu.memory_space<vmem>>, vector<32x32xbf16>
    %cst_58 = arith.constant dense<0.000000e+00> : vector<8x32xf32>
    %155 = tpu.matmul %152, %154, %cst_58 {dimension_numbers = #tpu.dot_dimension_numbers<[1], [0], [0], [1], [0, 0, 1, 1], [], []>} : vector<8x32xbf16>, vector<32x32xbf16>, vector<8x32xf32> -> vector<8x32xf32>
    %c0_59 = arith.constant 0 : index
    %c0_60 = arith.constant 0 : index
    %156 = vector.load %arg11[%c0_59, %c0_60] : memref<1x96xf32, #tpu.memory_space<vmem>>, vector<1x32xf32>
    %157 = vector.broadcast %156 : vector<1x32xf32> to vector<8x32xf32>
    %158 = arith.addf %155, %157 : vector<8x32xf32>
    %cst_61 = arith.constant 0.353553385 : f32
    %159 = vector.broadcast %cst_61 : f32 to vector<8x32xf32>
    %160 = arith.mulf %158, %159 : vector<8x32xf32>
    %c0_62 = arith.constant 0 : index
    %c32_63 = arith.constant 32 : index
    %161 = vector.load %arg10[%c0_62, %c32_63] : memref<32x96xbf16, #tpu.memory_space<vmem>>, vector<32x32xbf16>
    %cst_64 = arith.constant dense<0.000000e+00> : vector<8x32xf32>
    %162 = tpu.matmul %153, %161, %cst_64 {dimension_numbers = #tpu.dot_dimension_numbers<[1], [0], [0], [1], [0, 0, 1, 1], [], []>} : vector<8x32xbf16>, vector<32x32xbf16>, vector<8x32xf32> -> vector<8x32xf32>
    %c0_65 = arith.constant 0 : index
    %c32_66 = arith.constant 32 : index
    %163 = vector.load %arg11[%c0_65, %c32_66] : memref<1x96xf32, #tpu.memory_space<vmem>>, vector<1x32xf32>
    %164 = vector.broadcast %163 : vector<1x32xf32> to vector<8x32xf32>
    %165 = arith.addf %162, %164 : vector<8x32xf32>
    %c0_67 = arith.constant 0 : index
    %c64_68 = arith.constant 64 : index
    %166 = vector.load %arg10[%c0_67, %c64_68] : memref<32x96xbf16, #tpu.memory_space<vmem>>, vector<32x32xbf16>
    %cst_69 = arith.constant dense<0.000000e+00> : vector<8x32xf32>
    %167 = tpu.matmul %153, %166, %cst_69 {dimension_numbers = #tpu.dot_dimension_numbers<[1], [0], [0], [1], [0, 0, 1, 1], [], []>} : vector<8x32xbf16>, vector<32x32xbf16>, vector<8x32xf32> -> vector<8x32xf32>
    %c0_70 = arith.constant 0 : index
    %c64_71 = arith.constant 64 : index
    %168 = vector.load %arg11[%c0_70, %c64_71] : memref<1x96xf32, #tpu.memory_space<vmem>>, vector<1x32xf32>
    %169 = vector.broadcast %168 : vector<1x32xf32> to vector<8x32xf32>
    %170 = arith.addf %167, %169 : vector<8x32xf32>
    %171 = vector.extract_strided_slice %160 {offsets = [0, 0], sizes = [8, 8], strides = [1, 1]} : vector<8x32xf32> to vector<8x8xf32>
    %172 = vector.shape_cast %171 : vector<8x8xf32> to vector<1x8x8xf32>
    %173 = vector.extract_strided_slice %165 {offsets = [0, 0], sizes = [8, 8], strides = [1, 1]} : vector<8x32xf32> to vector<8x8xf32>
    %174 = vector.shape_cast %173 : vector<8x8xf32> to vector<1x8x8xf32>
    %175 = vector.extract_strided_slice %170 {offsets = [0, 0], sizes = [8, 8], strides = [1, 1]} : vector<8x32xf32> to vector<8x8xf32>
    %176 = vector.shape_cast %175 : vector<8x8xf32> to vector<1x8x8xf32>
    "tpu.trace_start"() <{level = 10 : i32, message = "bqd,bkd->bqk"}> : () -> ()
    %cst_72 = arith.constant dense<0.000000e+00> : vector<1x8x8xf32>
    %177 = tpu.matmul %172, %174, %cst_72 {dimension_numbers = #tpu.dot_dimension_numbers<[2], [2], [1], [1], [0, 0, 0, 1, 1, 1], [0], [0]>} : vector<1x8x8xf32>, vector<1x8x8xf32>, vector<1x8x8xf32> -> vector<1x8x8xf32>
    "tpu.trace_stop"() : () -> ()
    %178 = vector.shape_cast %2 : vector<8x8xf32> to vector<1x8x8xf32>
    %179 = arith.addf %177, %178 : vector<1x8x8xf32>
    %180 = vector.broadcast %8 : vector<1x1x8xf32> to vector<1x8x8xf32>
    %181 = arith.addf %179, %180 : vector<1x8x8xf32>
    %cst_73 = arith.constant dense<0xFF800000> : vector<1x8xf32>
    %182 = vector.multi_reduction <maximumf>, %181, %cst_73 [2] : vector<1x8x8xf32> to vector<1x8xf32>
    %183 = vector.shape_cast %182 : vector<1x8xf32> to vector<1x8x1xf32>
    %184 = vector.broadcast %183 : vector<1x8x1xf32> to vector<1x8x8xf32>
    %185 = arith.subf %181, %184 : vector<1x8x8xf32>
    %186 = math.exp %185 : vector<1x8x8xf32>
    %cst_74 = arith.constant dense<0.000000e+00> : vector<1x8xf32>
    %187 = vector.multi_reduction <add>, %186, %cst_74 [2] : vector<1x8x8xf32> to vector<1x8xf32>
    %188 = vector.shape_cast %187 : vector<1x8xf32> to vector<1x8x1xf32>
    %189 = tpu.reciprocal %188 {approx = true} : vector<1x8x1xf32> -> vector<1x8x1xf32>
    %190 = vector.broadcast %189 : vector<1x8x1xf32> to vector<1x8x8xf32>
    %191 = arith.mulf %186, %190 : vector<1x8x8xf32>
    "tpu.trace_start"() <{level = 10 : i32, message = "bqk,bkd->bqd"}> : () -> ()
    %cst_75 = arith.constant dense<0.000000e+00> : vector<1x8x8xf32>
    %192 = tpu.matmul %191, %176, %cst_75 {dimension_numbers = #tpu.dot_dimension_numbers<[2], [1], [1], [2], [0, 0, 0, 1, 1, 2], [0], [0]>} : vector<1x8x8xf32>, vector<1x8x8xf32>, vector<1x8x8xf32> -> vector<1x8x8xf32>
    "tpu.trace_stop"() : () -> ()
    %193 = vector.shape_cast %192 : vector<1x8x8xf32> to vector<8x8xf32>
    %194 = vector.extract_strided_slice %160 {offsets = [0, 8], sizes = [8, 8], strides = [1, 1]} : vector<8x32xf32> to vector<8x8xf32>
    %195 = vector.shape_cast %194 : vector<8x8xf32> to vector<1x8x8xf32>
    %196 = vector.extract_strided_slice %165 {offsets = [0, 8], sizes = [8, 8], strides = [1, 1]} : vector<8x32xf32> to vector<8x8xf32>
    %197 = vector.shape_cast %196 : vector<8x8xf32> to vector<1x8x8xf32>
    %198 = vector.extract_strided_slice %170 {offsets = [0, 8], sizes = [8, 8], strides = [1, 1]} : vector<8x32xf32> to vector<8x8xf32>
    %199 = vector.shape_cast %198 : vector<8x8xf32> to vector<1x8x8xf32>
    "tpu.trace_start"() <{level = 10 : i32, message = "bqd,bkd->bqk"}> : () -> ()
    %cst_76 = arith.constant dense<0.000000e+00> : vector<1x8x8xf32>
    %200 = tpu.matmul %195, %197, %cst_76 {dimension_numbers = #tpu.dot_dimension_numbers<[2], [2], [1], [1], [0, 0, 0, 1, 1, 1], [0], [0]>} : vector<1x8x8xf32>, vector<1x8x8xf32>, vector<1x8x8xf32> -> vector<1x8x8xf32>
    "tpu.trace_stop"() : () -> ()
    %201 = vector.shape_cast %2 : vector<8x8xf32> to vector<1x8x8xf32>
    %202 = arith.addf %200, %201 : vector<1x8x8xf32>
    %203 = vector.broadcast %8 : vector<1x1x8xf32> to vector<1x8x8xf32>
    %204 = arith.addf %202, %203 : vector<1x8x8xf32>
    %cst_77 = arith.constant dense<0xFF800000> : vector<1x8xf32>
    %205 = vector.multi_reduction <maximumf>, %204, %cst_77 [2] : vector<1x8x8xf32> to vector<1x8xf32>
    %206 = vector.shape_cast %205 : vector<1x8xf32> to vector<1x8x1xf32>
    %207 = vector.broadcast %206 : vector<1x8x1xf32> to vector<1x8x8xf32>
    %208 = arith.subf %204, %207 : vector<1x8x8xf32>
    %209 = math.exp %208 : vector<1x8x8xf32>
    %cst_78 = arith.constant dense<0.000000e+00> : vector<1x8xf32>
    %210 = vector.multi_reduction <add>, %209, %cst_78 [2] : vector<1x8x8xf32> to vector<1x8xf32>
    %211 = vector.shape_cast %210 : vector<1x8xf32> to vector<1x8x1xf32>
    %212 = tpu.reciprocal %211 {approx = true} : vector<1x8x1xf32> -> vector<1x8x1xf32>
    %213 = vector.broadcast %212 : vector<1x8x1xf32> to vector<1x8x8xf32>
    %214 = arith.mulf %209, %213 : vector<1x8x8xf32>
    "tpu.trace_start"() <{level = 10 : i32, message = "bqk,bkd->bqd"}> : () -> ()
    %cst_79 = arith.constant dense<0.000000e+00> : vector<1x8x8xf32>
    %215 = tpu.matmul %214, %199, %cst_79 {dimension_numbers = #tpu.dot_dimension_numbers<[2], [1], [1], [2], [0, 0, 0, 1, 1, 2], [0], [0]>} : vector<1x8x8xf32>, vector<1x8x8xf32>, vector<1x8x8xf32> -> vector<1x8x8xf32>
    "tpu.trace_stop"() : () -> ()
    %216 = vector.shape_cast %215 : vector<1x8x8xf32> to vector<8x8xf32>
    %217 = vector.extract_strided_slice %160 {offsets = [0, 16], sizes = [8, 8], strides = [1, 1]} : vector<8x32xf32> to vector<8x8xf32>
    %218 = vector.shape_cast %217 : vector<8x8xf32> to vector<1x8x8xf32>
    %219 = vector.extract_strided_slice %165 {offsets = [0, 16], sizes = [8, 8], strides = [1, 1]} : vector<8x32xf32> to vector<8x8xf32>
    %220 = vector.shape_cast %219 : vector<8x8xf32> to vector<1x8x8xf32>
    %221 = vector.extract_strided_slice %170 {offsets = [0, 16], sizes = [8, 8], strides = [1, 1]} : vector<8x32xf32> to vector<8x8xf32>
    %222 = vector.shape_cast %221 : vector<8x8xf32> to vector<1x8x8xf32>
    "tpu.trace_start"() <{level = 10 : i32, message = "bqd,bkd->bqk"}> : () -> ()
    %cst_80 = arith.constant dense<0.000000e+00> : vector<1x8x8xf32>
    %223 = tpu.matmul %218, %220, %cst_80 {dimension_numbers = #tpu.dot_dimension_numbers<[2], [2], [1], [1], [0, 0, 0, 1, 1, 1], [0], [0]>} : vector<1x8x8xf32>, vector<1x8x8xf32>, vector<1x8x8xf32> -> vector<1x8x8xf32>
    "tpu.trace_stop"() : () -> ()
    %224 = vector.shape_cast %2 : vector<8x8xf32> to vector<1x8x8xf32>
    %225 = arith.addf %223, %224 : vector<1x8x8xf32>
    %226 = vector.broadcast %8 : vector<1x1x8xf32> to vector<1x8x8xf32>
    %227 = arith.addf %225, %226 : vector<1x8x8xf32>
    %cst_81 = arith.constant dense<0xFF800000> : vector<1x8xf32>
    %228 = vector.multi_reduction <maximumf>, %227, %cst_81 [2] : vector<1x8x8xf32> to vector<1x8xf32>
    %229 = vector.shape_cast %228 : vector<1x8xf32> to vector<1x8x1xf32>
    %230 = vector.broadcast %229 : vector<1x8x1xf32> to vector<1x8x8xf32>
    %231 = arith.subf %227, %230 : vector<1x8x8xf32>
    %232 = math.exp %231 : vector<1x8x8xf32>
    %cst_82 = arith.constant dense<0.000000e+00> : vector<1x8xf32>
    %233 = vector.multi_reduction <add>, %232, %cst_82 [2] : vector<1x8x8xf32> to vector<1x8xf32>
    %234 = vector.shape_cast %233 : vector<1x8xf32> to vector<1x8x1xf32>
    %235 = tpu.reciprocal %234 {approx = true} : vector<1x8x1xf32> -> vector<1x8x1xf32>
    %236 = vector.broadcast %235 : vector<1x8x1xf32> to vector<1x8x8xf32>
    %237 = arith.mulf %232, %236 : vector<1x8x8xf32>
    "tpu.trace_start"() <{level = 10 : i32, message = "bqk,bkd->bqd"}> : () -> ()
    %cst_83 = arith.constant dense<0.000000e+00> : vector<1x8x8xf32>
    %238 = tpu.matmul %237, %222, %cst_83 {dimension_numbers = #tpu.dot_dimension_numbers<[2], [1], [1], [2], [0, 0, 0, 1, 1, 2], [0], [0]>} : vector<1x8x8xf32>, vector<1x8x8xf32>, vector<1x8x8xf32> -> vector<1x8x8xf32>
    "tpu.trace_stop"() : () -> ()
    %239 = vector.shape_cast %238 : vector<1x8x8xf32> to vector<8x8xf32>
    %240 = vector.extract_strided_slice %160 {offsets = [0, 24], sizes = [8, 8], strides = [1, 1]} : vector<8x32xf32> to vector<8x8xf32>
    %241 = vector.shape_cast %240 : vector<8x8xf32> to vector<1x8x8xf32>
    %242 = vector.extract_strided_slice %165 {offsets = [0, 24], sizes = [8, 8], strides = [1, 1]} : vector<8x32xf32> to vector<8x8xf32>
    %243 = vector.shape_cast %242 : vector<8x8xf32> to vector<1x8x8xf32>
    %244 = vector.extract_strided_slice %170 {offsets = [0, 24], sizes = [8, 8], strides = [1, 1]} : vector<8x32xf32> to vector<8x8xf32>
    %245 = vector.shape_cast %244 : vector<8x8xf32> to vector<1x8x8xf32>
    "tpu.trace_start"() <{level = 10 : i32, message = "bqd,bkd->bqk"}> : () -> ()
    %cst_84 = arith.constant dense<0.000000e+00> : vector<1x8x8xf32>
    %246 = tpu.matmul %241, %243, %cst_84 {dimension_numbers = #tpu.dot_dimension_numbers<[2], [2], [1], [1], [0, 0, 0, 1, 1, 1], [0], [0]>} : vector<1x8x8xf32>, vector<1x8x8xf32>, vector<1x8x8xf32> -> vector<1x8x8xf32>
    "tpu.trace_stop"() : () -> ()
    %247 = vector.shape_cast %2 : vector<8x8xf32> to vector<1x8x8xf32>
    %248 = arith.addf %246, %247 : vector<1x8x8xf32>
    %249 = vector.broadcast %8 : vector<1x1x8xf32> to vector<1x8x8xf32>
    %250 = arith.addf %248, %249 : vector<1x8x8xf32>
    %cst_85 = arith.constant dense<0xFF800000> : vector<1x8xf32>
    %251 = vector.multi_reduction <maximumf>, %250, %cst_85 [2] : vector<1x8x8xf32> to vector<1x8xf32>
    %252 = vector.shape_cast %251 : vector<1x8xf32> to vector<1x8x1xf32>
    %253 = vector.broadcast %252 : vector<1x8x1xf32> to vector<1x8x8xf32>
    %254 = arith.subf %250, %253 : vector<1x8x8xf32>
    %255 = math.exp %254 : vector<1x8x8xf32>
    %cst_86 = arith.constant dense<0.000000e+00> : vector<1x8xf32>
    %256 = vector.multi_reduction <add>, %255, %cst_86 [2] : vector<1x8x8xf32> to vector<1x8xf32>
    %257 = vector.shape_cast %256 : vector<1x8xf32> to vector<1x8x1xf32>
    %258 = tpu.reciprocal %257 {approx = true} : vector<1x8x1xf32> -> vector<1x8x1xf32>
    %259 = vector.broadcast %258 : vector<1x8x1xf32> to vector<1x8x8xf32>
    %260 = arith.mulf %255, %259 : vector<1x8x8xf32>
    "tpu.trace_start"() <{level = 10 : i32, message = "bqk,bkd->bqd"}> : () -> ()
    %cst_87 = arith.constant dense<0.000000e+00> : vector<1x8x8xf32>
    %261 = tpu.matmul %260, %245, %cst_87 {dimension_numbers = #tpu.dot_dimension_numbers<[2], [1], [1], [2], [0, 0, 0, 1, 1, 2], [0], [0]>} : vector<1x8x8xf32>, vector<1x8x8xf32>, vector<1x8x8xf32> -> vector<1x8x8xf32>
    "tpu.trace_stop"() : () -> ()
    %262 = vector.shape_cast %261 : vector<1x8x8xf32> to vector<8x8xf32>
    %263 = tpu.concatenate %193, %216, %239, %262 in 1 : vector<8x8xf32>, vector<8x8xf32>, vector<8x8xf32>, vector<8x8xf32> -> vector<8x32xf32>
    %264 = arith.truncf %263 : vector<8x32xf32> to vector<8x32xbf16>
    %c0_88 = arith.constant 0 : index
    %c0_89 = arith.constant 0 : index
    %265 = vector.load %arg12[%c0_88, %c0_89] : memref<32x32xbf16, #tpu.memory_space<vmem>>, vector<32x32xbf16>
    %cst_90 = arith.constant dense<0.000000e+00> : vector<8x32xf32>
    %266 = tpu.matmul %264, %265, %cst_90 {dimension_numbers = #tpu.dot_dimension_numbers<[1], [0], [0], [1], [0, 0, 1, 1], [], []>} : vector<8x32xbf16>, vector<32x32xbf16>, vector<8x32xf32> -> vector<8x32xf32>
    %c0_91 = arith.constant 0 : index
    %c0_92 = arith.constant 0 : index
    %267 = vector.load %arg13[%c0_91, %c0_92] : memref<1x32xf32, #tpu.memory_space<vmem>>, vector<1x32xf32>
    %268 = vector.broadcast %267 : vector<1x32xf32> to vector<8x32xf32>
    %269 = arith.addf %266, %268 : vector<8x32xf32>
    %270 = arith.addf %151, %269 : vector<8x32xf32>
    %c1 = arith.constant 1 : index
    %c0_93 = arith.constant 0 : index
    %271 = vector.load %arg14[%c1, %c0_93] : memref<3x32xf32, #tpu.memory_space<vmem>>, vector<1x32xf32>
    %c1_94 = arith.constant 1 : index
    %c0_95 = arith.constant 0 : index
    %272 = vector.load %arg15[%c1_94, %c0_95] : memref<3x32xf32, #tpu.memory_space<vmem>>, vector<1x32xf32>
    %cst_96 = arith.constant dense<0.000000e+00> : vector<8xf32>
    %273 = vector.multi_reduction <add>, %270, %cst_96 [1] : vector<8x32xf32> to vector<8xf32>
    %274 = vector.shape_cast %273 : vector<8xf32> to vector<8x1xf32>
    %cst_97 = arith.constant 3.200000e+01 : f32
    %275 = vector.broadcast %cst_97 : f32 to vector<8x1xf32>
    %276 = arith.divf %274, %275 : vector<8x1xf32>
    %277 = vector.broadcast %276 : vector<8x1xf32> to vector<8x32xf32>
    %278 = arith.subf %270, %277 : vector<8x32xf32>
    %279 = arith.mulf %278, %278 : vector<8x32xf32>
    %cst_98 = arith.constant dense<0.000000e+00> : vector<8xf32>
    %280 = vector.multi_reduction <add>, %279, %cst_98 [1] : vector<8x32xf32> to vector<8xf32>
    %281 = vector.shape_cast %280 : vector<8xf32> to vector<8x1xf32>
    %cst_99 = arith.constant 3.200000e+01 : f32
    %282 = vector.broadcast %cst_99 : f32 to vector<8x1xf32>
    %283 = arith.divf %281, %282 : vector<8x1xf32>
    %284 = vector.broadcast %276 : vector<8x1xf32> to vector<8x32xf32>
    %285 = arith.subf %270, %284 : vector<8x32xf32>
    %cst_100 = arith.constant 9.99999974E-6 : f32
    %286 = vector.broadcast %cst_100 : f32 to vector<8x1xf32>
    %287 = arith.addf %283, %286 : vector<8x1xf32>
    %288 = math.rsqrt %287 : vector<8x1xf32>
    %289 = vector.broadcast %288 : vector<8x1xf32> to vector<8x32xf32>
    %290 = arith.mulf %285, %289 : vector<8x32xf32>
    %291 = vector.broadcast %271 : vector<1x32xf32> to vector<8x32xf32>
    %292 = arith.mulf %290, %291 : vector<8x32xf32>
    %293 = vector.broadcast %272 : vector<1x32xf32> to vector<8x32xf32>
    %294 = arith.addf %292, %293 : vector<8x32xf32>
    %295 = arith.truncf %294 : vector<8x32xf32> to vector<8x32xbf16>
    %c0_101 = arith.constant 0 : index
    %c0_102 = arith.constant 0 : index
    %296 = vector.load %arg16[%c0_101, %c0_102] : memref<32x64xbf16, #tpu.memory_space<vmem>>, vector<32x64xbf16>
    %cst_103 = arith.constant dense<0.000000e+00> : vector<8x64xf32>
    %297 = tpu.matmul %295, %296, %cst_103 {dimension_numbers = #tpu.dot_dimension_numbers<[1], [0], [0], [1], [0, 0, 1, 1], [], []>} : vector<8x32xbf16>, vector<32x64xbf16>, vector<8x64xf32> -> vector<8x64xf32>
    %c0_104 = arith.constant 0 : index
    %c0_105 = arith.constant 0 : index
    %298 = vector.load %arg17[%c0_104, %c0_105] : memref<1x64xf32, #tpu.memory_space<vmem>>, vector<1x64xf32>
    %299 = vector.broadcast %298 : vector<1x64xf32> to vector<8x64xf32>
    %300 = arith.addf %297, %299 : vector<8x64xf32>
    %cst_106 = arith.constant 0.000000e+00 : f32
    %301 = vector.broadcast %cst_106 : f32 to vector<8x64xf32>
    %302 = arith.maximumf %300, %301 : vector<8x64xf32>
    %303 = arith.truncf %302 : vector<8x64xf32> to vector<8x64xbf16>
    %c0_107 = arith.constant 0 : index
    %c0_108 = arith.constant 0 : index
    %304 = vector.load %arg18[%c0_107, %c0_108] : memref<64x32xbf16, #tpu.memory_space<vmem>>, vector<64x32xbf16>
    %cst_109 = arith.constant dense<0.000000e+00> : vector<8x32xf32>
    %305 = tpu.matmul %303, %304, %cst_109 {dimension_numbers = #tpu.dot_dimension_numbers<[1], [0], [0], [1], [0, 0, 1, 1], [], []>} : vector<8x64xbf16>, vector<64x32xbf16>, vector<8x32xf32> -> vector<8x32xf32>
    %c0_110 = arith.constant 0 : index
    %c0_111 = arith.constant 0 : index
    %306 = vector.load %arg19[%c0_110, %c0_111] : memref<1x32xf32, #tpu.memory_space<vmem>>, vector<1x32xf32>
    %307 = vector.broadcast %306 : vector<1x32xf32> to vector<8x32xf32>
    %308 = arith.addf %305, %307 : vector<8x32xf32>
    %309 = arith.addf %294, %308 : vector<8x32xf32>
    %c2 = arith.constant 2 : index
    %c0_112 = arith.constant 0 : index
    %310 = vector.load %arg14[%c2, %c0_112] : memref<3x32xf32, #tpu.memory_space<vmem>>, vector<1x32xf32>
    %c2_113 = arith.constant 2 : index
    %c0_114 = arith.constant 0 : index
    %311 = vector.load %arg15[%c2_113, %c0_114] : memref<3x32xf32, #tpu.memory_space<vmem>>, vector<1x32xf32>
    %cst_115 = arith.constant dense<0.000000e+00> : vector<8xf32>
    %312 = vector.multi_reduction <add>, %309, %cst_115 [1] : vector<8x32xf32> to vector<8xf32>
    %313 = vector.shape_cast %312 : vector<8xf32> to vector<8x1xf32>
    %cst_116 = arith.constant 3.200000e+01 : f32
    %314 = vector.broadcast %cst_116 : f32 to vector<8x1xf32>
    %315 = arith.divf %313, %314 : vector<8x1xf32>
    %316 = vector.broadcast %315 : vector<8x1xf32> to vector<8x32xf32>
    %317 = arith.subf %309, %316 : vector<8x32xf32>
    %318 = arith.mulf %317, %317 : vector<8x32xf32>
    %cst_117 = arith.constant dense<0.000000e+00> : vector<8xf32>
    %319 = vector.multi_reduction <add>, %318, %cst_117 [1] : vector<8x32xf32> to vector<8xf32>
    %320 = vector.shape_cast %319 : vector<8xf32> to vector<8x1xf32>
    %cst_118 = arith.constant 3.200000e+01 : f32
    %321 = vector.broadcast %cst_118 : f32 to vector<8x1xf32>
    %322 = arith.divf %320, %321 : vector<8x1xf32>
    %323 = vector.broadcast %315 : vector<8x1xf32> to vector<8x32xf32>
    %324 = arith.subf %309, %323 : vector<8x32xf32>
    %cst_119 = arith.constant 9.99999974E-6 : f32
    %325 = vector.broadcast %cst_119 : f32 to vector<8x1xf32>
    %326 = arith.addf %322, %325 : vector<8x1xf32>
    %327 = math.rsqrt %326 : vector<8x1xf32>
    %328 = vector.broadcast %327 : vector<8x1xf32> to vector<8x32xf32>
    %329 = arith.mulf %324, %328 : vector<8x32xf32>
    %330 = vector.broadcast %310 : vector<1x32xf32> to vector<8x32xf32>
    %331 = arith.mulf %329, %330 : vector<8x32xf32>
    %332 = vector.broadcast %311 : vector<1x32xf32> to vector<8x32xf32>
    %333 = arith.addf %331, %332 : vector<8x32xf32>
    %c0_120 = arith.constant 0 : index
    %c0_121 = arith.constant 0 : index
    %334 = vector.load %arg20[%c0_120, %c0_121] : memref<8x32xf32, #tpu.memory_space<vmem>>, vector<8x32xf32>
    tpu.vector_store %arg20[%c0_120, %c0_121], %333 {strides = array<i32>} : memref<8x32xf32, #tpu.memory_space<vmem>>, vector<8x32xf32>,
    return
  }
  func.func @transform_0(%arg0: i32) -> (i32, i32) {
    %c0_i32 = arith.constant 0 : i32
    %c0_i32_0 = arith.constant 0 : i32
    return %arg0, %c0_i32 : i32, i32
  }
  func.func @transform_1(%arg0: i32) -> (i32, i32) {
    %c0_i32 = arith.constant 0 : i32
    %c0_i32_0 = arith.constant 0 : i32
    return %arg0, %c0_i32 : i32, i32
  }
  func.func @transform_2(%arg0: i32) -> (i32, i32) {
    %c0_i32 = arith.constant 0 : i32
    %c0_i32_0 = arith.constant 0 : i32
    %c0_i32_1 = arith.constant 0 : i32
    return %c0_i32, %c0_i32_0 : i32, i32
  }
  func.func @transform_3(%arg0: i32) -> (i32, i32, i32) {
    %c0_i32 = arith.constant 0 : i32
    %c0_i32_0 = arith.constant 0 : i32
    %c0_i32_1 = arith.constant 0 : i32
    return %arg0, %c0_i32, %c0_i32_0 : i32, i32, i32
  }
  func.func @transform_4(%arg0: i32) -> (i32, i32, i32) {
    %c0_i32 = arith.constant 0 : i32
    %c0_i32_0 = arith.constant 0 : i32
    %c0_i32_1 = arith.constant 0 : i32
    return %arg0, %c0_i32, %c0_i32_0 : i32, i32, i32
  }
  func.func @transform_5(%arg0: i32) -> (i32, i32) {
    %c0_i32 = arith.constant 0 : i32
    %c0_i32_0 = arith.constant 0 : i32
    %c0_i32_1 = arith.constant 0 : i32
    return %c0_i32, %c0_i32_0 : i32, i32
  }
  func.func @transform_6(%arg0: i32) -> (i32, i32) {
    %c0_i32 = arith.constant 0 : i32
    %c0_i32_0 = arith.constant 0 : i32
    %c0_i32_1 = arith.constant 0 : i32
    return %c0_i32, %c0_i32_0 : i32, i32
  }
  func.func @transform_7(%arg0: i32) -> (i32, i32) {
    %c0_i32 = arith.constant 0 : i32
    %c0_i32_0 = arith.constant 0 : i32
    %c0_i32_1 = arith.constant 0 : i32
    return %c0_i32, %c0_i32_0 : i32, i32
  }
  func.func @transform_8(%arg0: i32) -> (i32, i32) {
    %c0_i32 = arith.constant 0 : i32
    %c0_i32_0 = arith.constant 0 : i32
    %c0_i32_1 = arith.constant 0 : i32
    return %c0_i32, %c0_i32_0 : i32, i32
  }
  func.func @transform_9(%arg0: i32) -> (i32, i32) {
    %c0_i32 = arith.constant 0 : i32
    %c0_i32_0 = arith.constant 0 : i32
    %c0_i32_1 = arith.constant 0 : i32
    return %c0_i32, %c0_i32_0 : i32, i32
  }
  func.func @transform_10(%arg0: i32) -> (i32, i32) {
    %c0_i32 = arith.constant 0 : i32
    %c0_i32_0 = arith.constant 0 : i32
    %c0_i32_1 = arith.constant 0 : i32
    return %c0_i32, %c0_i32_0 : i32, i32
  }
  func.func @transform_11(%arg0: i32) -> (i32, i32) {
    %c0_i32 = arith.constant 0 : i32
    %c0_i32_0 = arith.constant 0 : i32
    %c0_i32_1 = arith.constant 0 : i32
    return %c0_i32, %c0_i32_0 : i32, i32
  }
  func.func @transform_12(%arg0: i32) -> (i32, i32) {
    %c0_i32 = arith.constant 0 : i32
    %c0_i32_0 = arith.constant 0 : i32
    %c0_i32_1 = arith.constant 0 : i32
    return %c0_i32, %c0_i32_0 : i32, i32
  }
  func.func @transform_13(%arg0: i32) -> (i32, i32) {
    %c0_i32 = arith.constant 0 : i32
    %c0_i32_0 = arith.constant 0 : i32
    %c0_i32_1 = arith.constant 0 : i32
    return %c0_i32, %c0_i32_0 : i32, i32
  }
  func.func @transform_14(%arg0: i32) -> (i32, i32) {
    %c0_i32 = arith.constant 0 : i32
    %c0_i32_0 = arith.constant 0 : i32
    %c0_i32_1 = arith.constant 0 : i32
    return %c0_i32, %c0_i32_0 : i32, i32
  }
  func.func @transform_15(%arg0: i32) -> (i32, i32) {
    %c0_i32 = arith.constant 0 : i32
    %c0_i32_0 = arith.constant 0 : i32
    %c0_i32_1 = arith.constant 0 : i32
    return %c0_i32, %c0_i32_0 : i32, i32
  }
  func.func @transform_16(%arg0: i32) -> (i32, i32) {
    %c0_i32 = arith.constant 0 : i32
    %c0_i32_0 = arith.constant 0 : i32
    %c0_i32_1 = arith.constant 0 : i32
    return %c0_i32, %c0_i32_0 : i32, i32
  }
  func.func @transform_17(%arg0: i32) -> (i32, i32) {
    %c0_i32 = arith.constant 0 : i32
    %c0_i32_0 = arith.constant 0 : i32
    %c0_i32_1 = arith.constant 0 : i32
    return %c0_i32, %c0_i32_0 : i32, i32
  }
  func.func @transform_18(%arg0: i32) -> (i32, i32) {
    %c0_i32 = arith.constant 0 : i32
    %c0_i32_0 = arith.constant 0 : i32
    %c0_i32_1 = arith.constant 0 : i32
    return %c0_i32, %c0_i32_0 : i32, i32
  }
  func.func @transform_19(%arg0: i32) -> (i32, i32) {
    %c0_i32 = arith.constant 0 : i32
    %c0_i32_0 = arith.constant 0 : i32
    return %arg0, %c0_i32 : i32, i32
  }
}

</mosaic_0001>

<llo_original>
// kernel: tpu_custom_call.1
$region0: #{tpu_custom_call.1}
  #allocation0 [shape = 'u32[]', space=smem, size = 0x4, offset = 0x4, fixed_abs, tag = 'smem constant byte address 0x4 - core index']
  #allocation1 [shape = 'u32[144,128]{1,0:T(1,128)}', space=vmem, size = 0x12000, scoped, tag = 'internal scratch']
  %s0 = inlined_call_operand.vmem [shape: f32[16,32], index: 0, kind: input, shape index: {}]
  %s1 = inlined_call_operand.vmem [shape: f32[16,32], index: 1, kind: input, shape index: {}]
  %s2 = inlined_call_operand.hbm [shape: f32[8,8], index: 2, kind: input, shape index: {}]
  %s3 = inlined_call_operand.hbm [shape: f32[2,1,8], index: 3, kind: input, shape index: {}]
  %s4 = inlined_call_operand.hbm [shape: f32[2,1,8], index: 4, kind: input, shape index: {}]
  %s5 = inlined_call_operand.vmem [shape: bf16[32,96], index: 5, kind: input, shape index: {}]
  %s6 = inlined_call_operand.vmem [shape: f32[1,96], index: 6, kind: input, shape index: {}]
  %s7 = inlined_call_operand.hbm [shape: bf16[32,32], index: 7, kind: input, shape index: {}]
  %s8 = inlined_call_operand.hbm [shape: f32[1,32], index: 8, kind: input, shape index: {}]
  %s9 = inlined_call_operand.vmem [shape: bf16[32,96], index: 9, kind: input, shape index: {}]
  %s10 = inlined_call_operand.hbm [shape: f32[1,96], index: 10, kind: input, shape index: {}]
  %s11 = inlined_call_operand.hbm [shape: bf16[32,32], index: 11, kind: input, shape index: {}]
  %s12 = inlined_call_operand.hbm [shape: f32[1,32], index: 12, kind: input, shape index: {}]
  %s13 = inlined_call_operand.hbm [shape: f32[3,32], index: 13, kind: input, shape index: {}]
  %s14 = inlined_call_operand.vmem [shape: f32[3,32], index: 14, kind: input, shape index: {}]
  %s15 = inlined_call_operand.vmem [shape: bf16[32,64], index: 15, kind: input, shape index: {}]
  %s16 = inlined_call_operand.vmem [shape: f32[1,64], index: 16, kind: input, shape index: {}]
  %s17 = inlined_call_operand.vmem [shape: bf16[64,32], index: 17, kind: input, shape index: {}]
  %s18 = inlined_call_operand.vmem [shape: f32[1,32], index: 18, kind: input, shape index: {}]
  %s19 = inlined_call_operand.hbm [shape: f32[16,32], index: 19, kind: output, shape index: {}]
  %s20 = sld [smem:[#allocation0]]
  $region145: #{tpu_custom_call.1} parent=0
    _
  %s22 = ssub.s32 1, %s20
  %s23 = scalar_select 0, %s22, %s20
  $region1: #{tpu_custom_call.1} parent=0
    #allocation2 [shape = 'u8[4096]{0}', space=vmem, size = 0x1000, scoped, tag = 'input window, operand 2, single buffered']
    #allocation3 [shape = 's32[2]{0}', space=sflag, size = 0x8, scoped, tag = 'scoped memory for tpu_custom_call.1']
    #allocation4 [shape = 's32[2]{0}', space=sflag, size = 0x8, scoped, tag = 'scoped memory for tpu_custom_call.1']
    #allocation5 [shape = 'u8[1024]{0}', space=vmem, size = 0x400, scoped, tag = 'input window, operand 3']
    #allocation6 [shape = 's32[2]{0}', space=sflag, size = 0x8, scoped, tag = 'scoped memory for tpu_custom_call.1']
    #allocation7 [shape = 'u8[1024]{0}', space=vmem, size = 0x400, scoped, tag = 'input window, operand 4']
    #allocation8 [shape = 'u8[8192]{0}', space=vmem, size = 0x2000, scoped, tag = 'input window, operand 7, single buffered']
    #allocation9 [shape = 's32[1]{0}', space=sflag, size = 0x4, scoped, tag = 'scoped memory for tpu_custom_call.1']
    #allocation10 [shape = 'u8[512]{0}', space=vmem, size = 0x400, scoped, tag = 'input window, operand 8, single buffered']
    #allocation11 [shape = 'u8[512]{0}', space=vmem, size = 0x400, scoped, tag = 'input window, operand 10, single buffered']
    #allocation12 [shape = 's32[1]{0}', space=sflag, size = 0x4, scoped, tag = 'scoped memory for tpu_custom_call.1']
    #allocation13 [shape = 'u8[8192]{0}', space=vmem, size = 0x2000, scoped, tag = 'input window, operand 11, single buffered']
    #allocation14 [shape = 'u8[512]{0}', space=vmem, size = 0x400, scoped, tag = 'input window, operand 12, single buffered']
    #allocation15 [shape = 's32[1]{0}', space=sflag, size = 0x4, scoped, tag = 'scoped memory for tpu_custom_call.1']
    #allocation16 [shape = 'u8[2048]{0}', space=vmem, size = 0x800, scoped, tag = 'input window, operand 13, single buffered']
    #allocation17 [shape = 'u8[8192]{0}', space=vmem, size = 0x2000, scoped, tag = 'output window, operand 0']
    %24 = vsyncpa [#allocation3], 0
    %25 = vsyncpa [#allocation6], 0
    %s26 = scalar_lea.sflag [#allocation6], 1
    %27 = vsyncpa %s26, 0
    %28 = vsyncpa [#allocation9], 0
    %29 = vsyncpa [#allocation12], 0
    %30 = vsyncpa [#allocation15], 0
    %31 = vsyncpa [#allocation4], 0
    %s32 = scalar_lea.sflag [#allocation4], 1
    %33 = vsyncpa %s32, 0
    loop: start=0, step=1, limit=4
    $region2: #{tpu_custom_call.1} parent=1 // loop_pre_header
      _
    $region3: #{tpu_custom_call.1} parent=1 // loop_header
      %s35 = sphi 0, %s39
      %p36 = scmp.ge.s32.totalorder %s35, 4
      %s45 = sphi 0, %s47
      %s48 = sphi 0, %s45
      %s49 = sphi 0, %s48
      %s65 = sphi 0, %s49
      %s71 = sphi 0, %s73
      %s74 = sphi 0, %s71
      %s75 = sphi 0, %s74
      %s91 = sphi 0, %s75
      %s95 = sphi 0, %s95
      %s97 = sphi 0, %s95
      %s98 = sphi 0, %s97
      %s112 = sphi 0, %s98
      %s118 = sphi 0, %s120
      %s121 = sphi 0, %s118
      %s122 = sphi 0, %s121
      %s138 = sphi 0, %s122
      %s144 = sphi 0, %s146
      %s147 = sphi 0, %s144
      %s148 = sphi 0, %s147
      %s164 = sphi 0, %s148
      %s168 = sphi 0, %s168
      %s170 = sphi 0, %s168
      %s171 = sphi 0, %s170
      %s185 = sphi 0, %s171
      %s189 = sphi 0, %s189
      %s191 = sphi 0, %s189
      %s192 = sphi 0, %s191
      %s206 = sphi 0, %s192
      %s210 = sphi 0, %s210
      %s212 = sphi 0, %s210
      %s213 = sphi 0, %s212
      %s227 = sphi 0, %s213
      %s231 = sphi 0, %s231
      %s233 = sphi 0, %s231
      %s234 = sphi 0, %s233
      %s248 = sphi 0, %s234
      %s252 = sphi 0, %s252
      %s254 = sphi 0, %s252
      %s255 = sphi 0, %s254
      %s269 = sphi 0, %s255
      %s273 = sphi 0, %s273
      %s275 = sphi 0, %s273
      %s276 = sphi 0, %s275
      %s290 = sphi 0, %s276
      %s294 = sphi 0, %s294
      %s296 = sphi 0, %s294
      %s297 = sphi 0, %s296
      %s311 = sphi 0, %s297
      %s315 = sphi 0, %s315
      %s317 = sphi 0, %s315
      %s318 = sphi 0, %s317
      %s332 = sphi 0, %s318
      %s336 = sphi 0, %s336
      %s338 = sphi 0, %s336
      %s339 = sphi 0, %s338
      %s353 = sphi 0, %s339
      %s357 = sphi 0, %s357
      %s359 = sphi 0, %s357
      %s360 = sphi 0, %s359
      %s374 = sphi 0, %s360
      %s378 = sphi 0, %s378
      %s380 = sphi 0, %s378
      %s381 = sphi 0, %s380
      %s395 = sphi 0, %s381
      %s399 = sphi 0, %s399
      %s401 = sphi 0, %s399
      %s402 = sphi 0, %s401
      %s416 = sphi 0, %s402
      %s420 = sphi 0, %s420
      %s422 = sphi 0, %s420
      %s423 = sphi 0, %s422
      %s437 = sphi 0, %s423
      %s441 = sphi 0, %s441
      %s443 = sphi 0, %s441
      %s444 = sphi 0, %s443
      %s458 = sphi 0, %s444
      %s464 = sphi 0, %s466
      %s467 = sphi 0, %s464
      %s468 = sphi 0, %s467
      %s484 = sphi 0, %s468
    $region4: #{tpu_custom_call.1} parent=1 // loop_header_branch
      %38 = sbr.rel (%p36) target = $region8
    $region5: #{tpu_custom_call.1} parent=1 // loop_body
      %s40 = ssub.s32 %s35, 1
      %s41 = ssub.s32 %s35, 2
      %s42 = sadd.s32 %s35, 1
      %s43 = ssub.s32 %s35, %s42
      %p44 = scmp.eq.s32.totalorder %s43, 0
      %s46 = sadd.s32 %s45, 1
      %s47 = scalar_select %p44, %s45, %s46
      %p50 = pneg %p44
      %p51 = scmp.eq.s32.totalorder %s35, 1
      %p52 = por %p50, %p51
      %p53 = scmp.ne.s32.totalorder %s45, %s48
      %p54 = scmp.eq.s32.totalorder %s35, 0
      %p55 = por %p53, %p54
      %p56 = scmp.ne.s32.totalorder %s45, %s48
      %p57 = scmp.eq.s32.totalorder %s40, 1
      %p58 = por %p56, %p57
      %p59 = scmp.ne.s32.totalorder %s48, %s49
      %p60 = scmp.eq.s32.totalorder %s40, 0
      %p61 = por %p59, %p60
      %p62 = scmp.ne.s32.totalorder %s48, %s49
      %p63 = scmp.eq.s32.totalorder %s41, 1
      %p64 = por %p62, %p63
      %p66 = scmp.ne.s32.totalorder %s49, %s65
      %p67 = scmp.eq.s32.totalorder %s41, 0
      %p68 = por %p66, %p67
      %s69 = ssub.s32 %s35, %s42
      %p70 = scmp.eq.s32.totalorder %s69, 0
      %s72 = sadd.s32 %s71, 1
      %s73 = scalar_select %p70, %s71, %s72
      %p76 = pneg %p70
      %p77 = scmp.eq.s32.totalorder %s35, 1
      %p78 = por %p76, %p77
      %p79 = scmp.ne.s32.totalorder %s71, %s74
      %p80 = scmp.eq.s32.totalorder %s35, 0
      %p81 = por %p79, %p80
      %p82 = scmp.ne.s32.totalorder %s71, %s74
      %p83 = scmp.eq.s32.totalorder %s40, 1
      %p84 = por %p82, %p83
      %p85 = scmp.ne.s32.totalorder %s74, %s75
      %p86 = scmp.eq.s32.totalorder %s40, 0
      %p87 = por %p85, %p86
      %p88 = scmp.ne.s32.totalorder %s74, %s75
      %p89 = scmp.eq.s32.totalorder %s41, 1
      %p90 = por %p88, %p89
      %p92 = scmp.ne.s32.totalorder %s75, %s91
      %p93 = scmp.eq.s32.totalorder %s41, 0
      %p94 = por %p92, %p93
      %s96 = sadd.s32 %s95, 1
      %p99 = scmp.eq.s32.totalorder %s35, 1
      %p100 = scmp.ne.s32.totalorder %s95, %s97
      %p101 = scmp.eq.s32.totalorder %s35, 0
      %p102 = por %p100, %p101
      %p103 = scmp.ne.s32.totalorder %s95, %s97
      %p104 = scmp.eq.s32.totalorder %s40, 1
      %p105 = por %p103, %p104
      %p106 = scmp.ne.s32.totalorder %s97, %s98
      %p107 = scmp.eq.s32.totalorder %s40, 0
      %p108 = por %p106, %p107
      %p109 = scmp.ne.s32.totalorder %s97, %s98
      %p110 = scmp.eq.s32.totalorder %s41, 1
      %p111 = por %p109, %p110
      %p113 = scmp.ne.s32.totalorder %s98, %s112
      %p114 = scmp.eq.s32.totalorder %s41, 0
      %p115 = por %p113, %p114
      %s116 = ssub.s32 %s35, %s42
      %p117 = scmp.eq.s32.totalorder %s116, 0
      %s119 = sadd.s32 %s118, 1
      %s120 = scalar_select %p117, %s118, %s119
      %p123 = pneg %p117
      %p124 = scmp.eq.s32.totalorder %s35, 1
      %p125 = por %p123, %p124
      %p126 = scmp.ne.s32.totalorder %s118, %s121
      %p127 = scmp.eq.s32.totalorder %s35, 0
      %p128 = por %p126, %p127
      %p129 = scmp.ne.s32.totalorder %s118, %s121
      %p130 = scmp.eq.s32.totalorder %s40, 1
      %p131 = por %p129, %p130
      %p132 = scmp.ne.s32.totalorder %s121, %s122
      %p133 = scmp.eq.s32.totalorder %s40, 0
      %p134 = por %p132, %p133
      %p135 = scmp.ne.s32.totalorder %s121, %s122
      %p136 = scmp.eq.s32.totalorder %s41, 1
      %p137 = por %p135, %p136
      %p139 = scmp.ne.s32.totalorder %s122, %s138
      %p140 = scmp.eq.s32.totalorder %s41, 0
      %p141 = por %p139, %p140
      %s142 = ssub.s32 %s35, %s42
      %p143 = scmp.eq.s32.totalorder %s142, 0
      %s145 = sadd.s32 %s144, 1
      %s146 = scalar_select %p143, %s144, %s145
      %p149 = pneg %p143
      %p150 = scmp.eq.s32.totalorder %s35, 1
      %p151 = por %p149, %p150
      %p152 = scmp.ne.s32.totalorder %s144, %s147
      %p153 = scmp.eq.s32.totalorder %s35, 0
      %p154 = por %p152, %p153
      %p155 = scmp.ne.s32.totalorder %s144, %s147
      %p156 = scmp.eq.s32.totalorder %s40, 1
      %p157 = por %p155, %p156
      %p158 = scmp.ne.s32.totalorder %s147, %s148
      %p159 = scmp.eq.s32.totalorder %s40, 0
      %p160 = por %p158, %p159
      %p161 = scmp.ne.s32.totalorder %s147, %s148
      %p162 = scmp.eq.s32.totalorder %s41, 1
      %p163 = por %p161, %p162
      %p165 = scmp.ne.s32.totalorder %s148, %s164
      %p166 = scmp.eq.s32.totalorder %s41, 0
      %p167 = por %p165, %p166
      %s169 = sadd.s32 %s168, 1
      %p172 = scmp.eq.s32.totalorder %s35, 1
      %p173 = scmp.ne.s32.totalorder %s168, %s170
      %p174 = scmp.eq.s32.totalorder %s35, 0
      %p175 = por %p173, %p174
      %p176 = scmp.ne.s32.totalorder %s168, %s170
      %p177 = scmp.eq.s32.totalorder %s40, 1
      %p178 = por %p176, %p177
      %p179 = scmp.ne.s32.totalorder %s170, %s171
      %p180 = scmp.eq.s32.totalorder %s40, 0
      %p181 = por %p179, %p180
      %p182 = scmp.ne.s32.totalorder %s170, %s171
      %p183 = scmp.eq.s32.totalorder %s41, 1
      %p184 = por %p182, %p183
      %p186 = scmp.ne.s32.totalorder %s171, %s185
      %p187 = scmp.eq.s32.totalorder %s41, 0
      %p188 = por %p186, %p187
      %s190 = sadd.s32 %s189, 1
      %p193 = scmp.eq.s32.totalorder %s35, 1
      %p194 = scmp.ne.s32.totalorder %s189, %s191
      %p195 = scmp.eq.s32.totalorder %s35, 0
      %p196 = por %p194, %p195
      %p197 = scmp.ne.s32.totalorder %s189, %s191
      %p198 = scmp.eq.s32.totalorder %s40, 1
      %p199 = por %p197, %p198
      %p200 = scmp.ne.s32.totalorder %s191, %s192
      %p201 = scmp.eq.s32.totalorder %s40, 0
      %p202 = por %p200, %p201
      %p203 = scmp.ne.s32.totalorder %s191, %s192
      %p204 = scmp.eq.s32.totalorder %s41, 1
      %p205 = por %p203, %p204
      %p207 = scmp.ne.s32.totalorder %s192, %s206
      %p208 = scmp.eq.s32.totalorder %s41, 0
      %p209 = por %p207, %p208
      %s211 = sadd.s32 %s210, 1
      %p214 = scmp.eq.s32.totalorder %s35, 1
      %p215 = scmp.ne.s32.totalorder %s210, %s212
      %p216 = scmp.eq.s32.totalorder %s35, 0
      %p217 = por %p215, %p216
      %p218 = scmp.ne.s32.totalorder %s210, %s212
      %p219 = scmp.eq.s32.totalorder %s40, 1
      %p220 = por %p218, %p219
      %p221 = scmp.ne.s32.totalorder %s212, %s213
      %p222 = scmp.eq.s32.totalorder %s40, 0
      %p223 = por %p221, %p222
      %p224 = scmp.ne.s32.totalorder %s212, %s213
      %p225 = scmp.eq.s32.totalorder %s41, 1
      %p226 = por %p224, %p225
      %p228 = scmp.ne.s32.totalorder %s213, %s227
      %p229 = scmp.eq.s32.totalorder %s41, 0
      %p230 = por %p228, %p229
      %s232 = sadd.s32 %s231, 1
      %p235 = scmp.eq.s32.totalorder %s35, 1
      %p236 = scmp.ne.s32.totalorder %s231, %s233
      %p237 = scmp.eq.s32.totalorder %s35, 0
      %p238 = por %p236, %p237
      %p239 = scmp.ne.s32.totalorder %s231, %s233
      %p240 = scmp.eq.s32.totalorder %s40, 1
      %p241 = por %p239, %p240
      %p242 = scmp.ne.s32.totalorder %s233, %s234
      %p243 = scmp.eq.s32.totalorder %s40, 0
      %p244 = por %p242, %p243
      %p245 = scmp.ne.s32.totalorder %s233, %s234
      %p246 = scmp.eq.s32.totalorder %s41, 1
      %p247 = por %p245, %p246
      %p249 = scmp.ne.s32.totalorder %s234, %s248
      %p250 = scmp.eq.s32.totalorder %s41, 0
      %p251 = por %p249, %p250
      %s253 = sadd.s32 %s252, 1
      %p256 = scmp.eq.s32.totalorder %s35, 1
      %p257 = scmp.ne.s32.totalorder %s252, %s254
      %p258 = scmp.eq.s32.totalorder %s35, 0
      %p259 = por %p257, %p258
      %p260 = scmp.ne.s32.totalorder %s252, %s254
      %p261 = scmp.eq.s32.totalorder %s40, 1
      %p262 = por %p260, %p261
      %p263 = scmp.ne.s32.totalorder %s254, %s255
      %p264 = scmp.eq.s32.totalorder %s40, 0
      %p265 = por %p263, %p264
      %p266 = scmp.ne.s32.totalorder %s254, %s255
      %p267 = scmp.eq.s32.totalorder %s41, 1
      %p268 = por %p266, %p267
      %p270 = scmp.ne.s32.totalorder %s255, %s269
      %p271 = scmp.eq.s32.totalorder %s41, 0
      %p272 = por %p270, %p271
      %s274 = sadd.s32 %s273, 1
      %p277 = scmp.eq.s32.totalorder %s35, 1
      %p278 = scmp.ne.s32.totalorder %s273, %s275
      %p279 = scmp.eq.s32.totalorder %s35, 0
      %p280 = por %p278, %p279
      %p281 = scmp.ne.s32.totalorder %s273, %s275
      %p282 = scmp.eq.s32.totalorder %s40, 1
      %p283 = por %p281, %p282
      %p284 = scmp.ne.s32.totalorder %s275, %s276
      %p285 = scmp.eq.s32.totalorder %s40, 0
      %p286 = por %p284, %p285
      %p287 = scmp.ne.s32.totalorder %s275, %s276
      %p288 = scmp.eq.s32.totalorder %s41, 1
      %p289 = por %p287, %p288
      %p291 = scmp.ne.s32.totalorder %s276, %s290
      %p292 = scmp.eq.s32.totalorder %s41, 0
      %p293 = por %p291, %p292
      %s295 = sadd.s32 %s294, 1
      %p298 = scmp.eq.s32.totalorder %s35, 1
      %p299 = scmp.ne.s32.totalorder %s294, %s296
      %p300 = scmp.eq.s32.totalorder %s35, 0
      %p301 = por %p299, %p300
      %p302 = scmp.ne.s32.totalorder %s294, %s296
      %p303 = scmp.eq.s32.totalorder %s40, 1
      %p304 = por %p302, %p303
      %p305 = scmp.ne.s32.totalorder %s296, %s297
      %p306 = scmp.eq.s32.totalorder %s40, 0
      %p307 = por %p305, %p306
      %p308 = scmp.ne.s32.totalorder %s296, %s297
      %p309 = scmp.eq.s32.totalorder %s41, 1
      %p310 = por %p308, %p309
      %p312 = scmp.ne.s32.totalorder %s297, %s311
      %p313 = scmp.eq.s32.totalorder %s41, 0
      %p314 = por %p312, %p313
      %s316 = sadd.s32 %s315, 1
      %p319 = scmp.eq.s32.totalorder %s35, 1
      %p320 = scmp.ne.s32.totalorder %s315, %s317
      %p321 = scmp.eq.s32.totalorder %s35, 0
      %p322 = por %p320, %p321
      %p323 = scmp.ne.s32.totalorder %s315, %s317
      %p324 = scmp.eq.s32.totalorder %s40, 1
      %p325 = por %p323, %p324
      %p326 = scmp.ne.s32.totalorder %s317, %s318
      %p327 = scmp.eq.s32.totalorder %s40, 0
      %p328 = por %p326, %p327
      %p329 = scmp.ne.s32.totalorder %s317, %s318
      %p330 = scmp.eq.s32.totalorder %s41, 1
      %p331 = por %p329, %p330
      %p333 = scmp.ne.s32.totalorder %s318, %s332
      %p334 = scmp.eq.s32.totalorder %s41, 0
      %p335 = por %p333, %p334
      %s337 = sadd.s32 %s336, 1
      %p340 = scmp.eq.s32.totalorder %s35, 1
      %p341 = scmp.ne.s32.totalorder %s336, %s338
      %p342 = scmp.eq.s32.totalorder %s35, 0
      %p343 = por %p341, %p342
      %p344 = scmp.ne.s32.totalorder %s336, %s338
      %p345 = scmp.eq.s32.totalorder %s40, 1
      %p346 = por %p344, %p345
      %p347 = scmp.ne.s32.totalorder %s338, %s339
      %p348 = scmp.eq.s32.totalorder %s40, 0
      %p349 = por %p347, %p348
      %p350 = scmp.ne.s32.totalorder %s338, %s339
      %p351 = scmp.eq.s32.totalorder %s41, 1
      %p352 = por %p350, %p351
      %p354 = scmp.ne.s32.totalorder %s339, %s353
      %p355 = scmp.eq.s32.totalorder %s41, 0
      %p356 = por %p354, %p355
      %s358 = sadd.s32 %s357, 1
      %p361 = scmp.eq.s32.totalorder %s35, 1
      %p362 = scmp.ne.s32.totalorder %s357, %s359
      %p363 = scmp.eq.s32.totalorder %s35, 0
      %p364 = por %p362, %p363
      %p365 = scmp.ne.s32.totalorder %s357, %s359
      %p366 = scmp.eq.s32.totalorder %s40, 1
      %p367 = por %p365, %p366
      %p368 = scmp.ne.s32.totalorder %s359, %s360
      %p369 = scmp.eq.s32.totalorder %s40, 0
      %p370 = por %p368, %p369
      %p371 = scmp.ne.s32.totalorder %s359, %s360
      %p372 = scmp.eq.s32.totalorder %s41, 1
      %p373 = por %p371, %p372
      %p375 = scmp.ne.s32.totalorder %s360, %s374
      %p376 = scmp.eq.s32.totalorder %s41, 0
      %p377 = por %p375, %p376
      %s379 = sadd.s32 %s378, 1
      %p382 = scmp.eq.s32.totalorder %s35, 1
      %p383 = scmp.ne.s32.totalorder %s378, %s380
      %p384 = scmp.eq.s32.totalorder %s35, 0
      %p385 = por %p383, %p384
      %p386 = scmp.ne.s32.totalorder %s378, %s380
      %p387 = scmp.eq.s32.totalorder %s40, 1
      %p388 = por %p386, %p387
      %p389 = scmp.ne.s32.totalorder %s380, %s381
      %p390 = scmp.eq.s32.totalorder %s40, 0
      %p391 = por %p389, %p390
      %p392 = scmp.ne.s32.totalorder %s380, %s381
      %p393 = scmp.eq.s32.totalorder %s41, 1
      %p394 = por %p392, %p393
      %p396 = scmp.ne.s32.totalorder %s381, %s395
      %p397 = scmp.eq.s32.totalorder %s41, 0
      %p398 = por %p396, %p397
      %s400 = sadd.s32 %s399, 1
      %p403 = scmp.eq.s32.totalorder %s35, 1
      %p404 = scmp.ne.s32.totalorder %s399, %s401
      %p405 = scmp.eq.s32.totalorder %s35, 0
      %p406 = por %p404, %p405
      %p407 = scmp.ne.s32.totalorder %s399, %s401
      %p408 = scmp.eq.s32.totalorder %s40, 1
      %p409 = por %p407, %p408
      %p410 = scmp.ne.s32.totalorder %s401, %s402
      %p411 = scmp.eq.s32.totalorder %s40, 0
      %p412 = por %p410, %p411
      %p413 = scmp.ne.s32.totalorder %s401, %s402
      %p414 = scmp.eq.s32.totalorder %s41, 1
      %p415 = por %p413, %p414
      %p417 = scmp.ne.s32.totalorder %s402, %s416
      %p418 = scmp.eq.s32.totalorder %s41, 0
      %p419 = por %p417, %p418
      %s421 = sadd.s32 %s420, 1
      %p424 = scmp.eq.s32.totalorder %s35, 1
      %p425 = scmp.ne.s32.totalorder %s420, %s422
      %p426 = scmp.eq.s32.totalorder %s35, 0
      %p427 = por %p425, %p426
      %p428 = scmp.ne.s32.totalorder %s420, %s422
      %p429 = scmp.eq.s32.totalorder %s40, 1
      %p430 = por %p428, %p429
      %p431 = scmp.ne.s32.totalorder %s422, %s423
      %p432 = scmp.eq.s32.totalorder %s40, 0
      %p433 = por %p431, %p432
      %p434 = scmp.ne.s32.totalorder %s422, %s423
      %p435 = scmp.eq.s32.totalorder %s41, 1
      %p436 = por %p434, %p435
      %p438 = scmp.ne.s32.totalorder %s423, %s437
      %p439 = scmp.eq.s32.totalorder %s41, 0
      %p440 = por %p438, %p439
      %s442 = sadd.s32 %s441, 1
      %p445 = scmp.eq.s32.totalorder %s35, 1
      %p446 = scmp.ne.s32.totalorder %s441, %s443
      %p447 = scmp.eq.s32.totalorder %s35, 0
      %p448 = por %p446, %p447
      %p449 = scmp.ne.s32.totalorder %s441, %s443
      %p450 = scmp.eq.s32.totalorder %s40, 1
      %p451 = por %p449, %p450
      %p452 = scmp.ne.s32.totalorder %s443, %s444
      %p453 = scmp.eq.s32.totalorder %s40, 0
      %p454 = por %p452, %p453
      %p455 = scmp.ne.s32.totalorder %s443, %s444
      %p456 = scmp.eq.s32.totalorder %s41, 1
      %p457 = por %p455, %p456
      %p459 = scmp.ne.s32.totalorder %s444, %s458
      %p460 = scmp.eq.s32.totalorder %s41, 0
      %p461 = por %p459, %p460
      %s462 = ssub.s32 %s35, %s42
      %p463 = scmp.eq.s32.totalorder %s462, 0
      %s465 = sadd.s32 %s464, 1
      %s466 = scalar_select %p463, %s464, %s465
      %p469 = pneg %p463
      %p470 = scmp.eq.s32.totalorder %s35, 1
      %p471 = por %p469, %p470
      %p472 = scmp.ne.s32.totalorder %s464, %s467
      %p473 = scmp.eq.s32.totalorder %s35, 0
      %p474 = por %p472, %p473
      %p475 = scmp.ne.s32.totalorder %s464, %s467
      %p476 = scmp.eq.s32.totalorder %s40, 1
      %p477 = por %p475, %p476
      %p478 = scmp.ne.s32.totalorder %s467, %s468
      %p479 = scmp.eq.s32.totalorder %s40, 0
      %p480 = por %p478, %p479
      %p481 = scmp.ne.s32.totalorder %s467, %s468
      %p482 = scmp.eq.s32.totalorder %s41, 1
      %p483 = por %p481, %p482
      %p485 = scmp.ne.s32.totalorder %s468, %s484
      %p486 = scmp.eq.s32.totalorder %s41, 0
      %p487 = por %p485, %p486
      %p488 = scmp.le.s32.totalorder 1, %s35
      %p489 = scmp.lt.s32.totalorder %s35, 3
      %p490 = pnand %p488, %p489
      %p491 = pneg %p490
      // Predicated region
      $region9: #{tpu_custom_call.1} parent=5 // pred_check
        _
      $region10: #{tpu_custom_call.1} parent=5 // pred_check_branch
        %493 = sbr.rel (%p490) target = $region12
      $region11: #{tpu_custom_call.1} parent=5 // pred_region
        %s494 = ssub.s32 %s35, 1
        // Predicated region
        $region13: #{tpu_custom_call.1} parent=11 // pred_check
          %p495 = pneg %p108
        $region14: #{tpu_custom_call.1} parent=11 // pred_check_branch
          %497 = sbr.rel (%p495) target = $region16
        $region15: #{tpu_custom_call.1} parent=11 // pred_region
          %s499 = ssub.s32 128, 128
          %500 = vsyncadd [#allocation3], %s499
          %s502 = sshll.u32 [#allocation2], 4
          %s503 = int_to_ptr.vmem [resolvable:$true] %s502
          %505 = dma.hbm_to_vmem [thread:$0]  %s2, 128, %s503, [#allocation3]
        $region16: #{tpu_custom_call.1} parent=11 // pred_fallthru
          _
        // Predicated region
        $region17: #{tpu_custom_call.1} parent=11 // pred_check
          %p506 = pneg %p181
        $region18: #{tpu_custom_call.1} parent=11 // pred_check_branch
          %508 = sbr.rel (%p506) target = $region20
        $region19: #{tpu_custom_call.1} parent=11 // pred_region
          _
        $region20: #{tpu_custom_call.1} parent=11 // pred_fallthru
          _
        // Predicated region
        $region21: #{tpu_custom_call.1} parent=11 // pred_check
          %p509 = pneg %p202
        $region22: #{tpu_custom_call.1} parent=11 // pred_check_branch
          %511 = sbr.rel (%p509) target = $region24
        $region23: #{tpu_custom_call.1} parent=11 // pred_region
          _
        $region24: #{tpu_custom_call.1} parent=11 // pred_fallthru
          _
        // Predicated region
        $region25: #{tpu_custom_call.1} parent=11 // pred_check
          %p512 = pneg %p223
        $region26: #{tpu_custom_call.1} parent=11 // pred_check_branch
          %514 = sbr.rel (%p512) target = $region28
        $region27: #{tpu_custom_call.1} parent=11 // pred_region
          %s516 = ssub.s32 256, 256
          %517 = vsyncadd [#allocation9], %s516
          %s518 = sshll.u32 [#allocation8], 4
          %s519 = int_to_ptr.vmem [resolvable:$true] %s518
          %524 = dma.hbm_to_vmem [thread:$0]  %s7, 256, %s519, [#allocation9], 64, 64, 4
        $region28: #{tpu_custom_call.1} parent=11 // pred_fallthru
          _
        // Predicated region
        $region29: #{tpu_custom_call.1} parent=11 // pred_check
          %p525 = pneg %p244
        $region30: #{tpu_custom_call.1} parent=11 // pred_check_branch
          %527 = sbr.rel (%p525) target = $region32
        $region31: #{tpu_custom_call.1} parent=11 // pred_region
          %s529 = ssub.s32 16, 16
          %530 = vsyncadd [#allocation9], %s529
          %s532 = sshll.u32 [#allocation10], 4
          %s533 = int_to_ptr.vmem [resolvable:$true] %s532
          %535 = dma.hbm_to_vmem [thread:$0]  %s8, 16, %s533, [#allocation9]
        $region32: #{tpu_custom_call.1} parent=11 // pred_fallthru
          _
        // Predicated region
        $region33: #{tpu_custom_call.1} parent=11 // pred_check
          %p536 = pneg %p265
        $region34: #{tpu_custom_call.1} parent=11 // pred_check_branch
          %538 = sbr.rel (%p536) target = $region36
        $region35: #{tpu_custom_call.1} parent=11 // pred_region
          _
        $region36: #{tpu_custom_call.1} parent=11 // pred_fallthru
          _
        // Predicated region
        $region37: #{tpu_custom_call.1} parent=11 // pred_check
          %p539 = pneg %p286
        $region38: #{tpu_custom_call.1} parent=11 // pred_check_branch
          %541 = sbr.rel (%p539) target = $region40
        $region39: #{tpu_custom_call.1} parent=11 // pred_region
          %s543 = ssub.s32 16, 16
          %544 = vsyncadd [#allocation12], %s543
          %s546 = sshll.u32 [#allocation11], 4
          %s547 = int_to_ptr.vmem [resolvable:$true] %s546
          %549 = dma.hbm_to_vmem [thread:$0]  %s10, 16, %s547, [#allocation12]
        $region40: #{tpu_custom_call.1} parent=11 // pred_fallthru
          _
        // Predicated region
        $region41: #{tpu_custom_call.1} parent=11 // pred_check
          %p550 = pneg %p307
        $region42: #{tpu_custom_call.1} parent=11 // pred_check_branch
          %552 = sbr.rel (%p550) target = $region44
        $region43: #{tpu_custom_call.1} parent=11 // pred_region
          %s554 = ssub.s32 256, 256
          %555 = vsyncadd [#allocation12], %s554
          %s556 = sshll.u32 [#allocation13], 4
          %s557 = int_to_ptr.vmem [resolvable:$true] %s556
          %562 = dma.hbm_to_vmem [thread:$0]  %s11, 256, %s557, [#allocation12], 64, 64, 4
        $region44: #{tpu_custom_call.1} parent=11 // pred_fallthru
          _
        // Predicated region
        $region45: #{tpu_custom_call.1} parent=11 // pred_check
          %p563 = pneg %p328
        $region46: #{tpu_custom_call.1} parent=11 // pred_check_branch
          %565 = sbr.rel (%p563) target = $region48
        $region47: #{tpu_custom_call.1} parent=11 // pred_region
          %s567 = ssub.s32 16, 16
          %568 = vsyncadd [#allocation15], %s567
          %s570 = sshll.u32 [#allocation14], 4
          %s571 = int_to_ptr.vmem [resolvable:$true] %s570
          %573 = dma.hbm_to_vmem [thread:$0]  %s12, 16, %s571, [#allocation15]
        $region48: #{tpu_custom_call.1} parent=11 // pred_fallthru
          _
        // Predicated region
        $region49: #{tpu_custom_call.1} parent=11 // pred_check
          %p574 = pneg %p349
        $region50: #{tpu_custom_call.1} parent=11 // pred_check_branch
          %576 = sbr.rel (%p574) target = $region52
        $region51: #{tpu_custom_call.1} parent=11 // pred_region
          %s578 = ssub.s32 64, 64
          %579 = vsyncadd [#allocation15], %s578
          %s581 = sshll.u32 [#allocation16], 4
          %s582 = int_to_ptr.vmem [resolvable:$true] %s581
          %584 = dma.hbm_to_vmem [thread:$0]  %s13, 64, %s582, [#allocation15]
        $region52: #{tpu_custom_call.1} parent=11 // pred_fallthru
          _
        // Predicated region
        $region53: #{tpu_custom_call.1} parent=11 // pred_check
          %p585 = pneg %p370
        $region54: #{tpu_custom_call.1} parent=11 // pred_check_branch
          %587 = sbr.rel (%p585) target = $region56
        $region55: #{tpu_custom_call.1} parent=11 // pred_region
          _
        $region56: #{tpu_custom_call.1} parent=11 // pred_fallthru
          _
        // Predicated region
        $region57: #{tpu_custom_call.1} parent=11 // pred_check
          %p588 = pneg %p391
        $region58: #{tpu_custom_call.1} parent=11 // pred_check_branch
          %590 = sbr.rel (%p588) target = $region60
        $region59: #{tpu_custom_call.1} parent=11 // pred_region
          _
        $region60: #{tpu_custom_call.1} parent=11 // pred_fallthru
          _
        // Predicated region
        $region61: #{tpu_custom_call.1} parent=11 // pred_check
          %p591 = pneg %p412
        $region62: #{tpu_custom_call.1} parent=11 // pred_check_branch
          %593 = sbr.rel (%p591) target = $region64
        $region63: #{tpu_custom_call.1} parent=11 // pred_region
          _
        $region64: #{tpu_custom_call.1} parent=11 // pred_fallthru
          _
        // Predicated region
        $region65: #{tpu_custom_call.1} parent=11 // pred_check
          %p594 = pneg %p433
        $region66: #{tpu_custom_call.1} parent=11 // pred_check_branch
          %596 = sbr.rel (%p594) target = $region68
        $region67: #{tpu_custom_call.1} parent=11 // pred_region
          _
        $region68: #{tpu_custom_call.1} parent=11 // pred_fallthru
          _
        // Predicated region
        $region69: #{tpu_custom_call.1} parent=11 // pred_check
          %p597 = pneg %p454
        $region70: #{tpu_custom_call.1} parent=11 // pred_check_branch
          %599 = sbr.rel (%p597) target = $region72
        $region71: #{tpu_custom_call.1} parent=11 // pred_region
          _
        $region72: #{tpu_custom_call.1} parent=11 // pred_fallthru
          _
      $region12: #{tpu_custom_call.1} parent=5 // pred_fallthru
        _
      %p600 = scmp.lt.s32.totalorder %s35, 2
      // Predicated region
      $region73: #{tpu_custom_call.1} parent=5 // pred_check
        %p601 = pneg %p600
      $region74: #{tpu_custom_call.1} parent=5 // pred_check_branch
        %603 = sbr.rel (%p601) target = $region76
      $region75: #{tpu_custom_call.1} parent=5 // pred_region
        // Predicated region
        $region77: #{tpu_custom_call.1} parent=75 // pred_check
          %p604 = pneg %p55
        $region78: #{tpu_custom_call.1} parent=75 // pred_check_branch
          %606 = sbr.rel (%p604) target = $region80
        $region79: #{tpu_custom_call.1} parent=75 // pred_region
          %p607 = scmp.lt.s32.totalorder %s35, 1
          %s608 = scalar_select %p607, %s35, 1
          %s609 = smul.addr %s608, 8
          %s610 = scalar_lea.vmem %s0, %s609
        $region80: #{tpu_custom_call.1} parent=75 // pred_fallthru
          _
        // Predicated region
        $region81: #{tpu_custom_call.1} parent=75 // pred_check
          %p611 = pneg %p81
        $region82: #{tpu_custom_call.1} parent=75 // pred_check_branch
          %613 = sbr.rel (%p611) target = $region84
        $region83: #{tpu_custom_call.1} parent=75 // pred_region
          %p614 = scmp.lt.s32.totalorder %s35, 1
          %s615 = scalar_select %p614, %s35, 1
          %s616 = smul.addr %s615, 8
          %s617 = scalar_lea.vmem %s1, %s616
        $region84: #{tpu_custom_call.1} parent=75 // pred_fallthru
          _
        // Predicated region
        $region85: #{tpu_custom_call.1} parent=75 // pred_check
          %p618 = pneg %p128
        $region86: #{tpu_custom_call.1} parent=75 // pred_check_branch
          %620 = sbr.rel (%p618) target = $region88
        $region87: #{tpu_custom_call.1} parent=75 // pred_region
          %s621 = sand.u32 %s35, 1
          %s622 = scalar_lea.sflag [#allocation6], %s621
          %s623 = sand.u32 %s118, 1
          %s624 = scalar_lea.vmem [#allocation5], %s623
          %s626 = ssub.s32 16, 16
          %627 = vsyncadd %s622, %s626
          %s628 = smul.addr %s35, 16
          %s629 = scalar_lea.hbm %s3, %s628
          %s631 = sshll.u32 %s624, 4
          %s632 = int_to_ptr.vmem [resolvable:$true] %s631
          %634 = dma.hbm_to_vmem [thread:$0]  %s629, 16, %s632, %s622
        $region88: #{tpu_custom_call.1} parent=75 // pred_fallthru
          _
        // Predicated region
        $region89: #{tpu_custom_call.1} parent=75 // pred_check
          %p635 = pneg %p154
        $region90: #{tpu_custom_call.1} parent=75 // pred_check_branch
          %637 = sbr.rel (%p635) target = $region92
        $region91: #{tpu_custom_call.1} parent=75 // pred_region
          %s638 = sand.u32 %s35, 1
          %s639 = scalar_lea.sflag [#allocation6], %s638
          %s640 = sand.u32 %s144, 1
          %s641 = scalar_lea.vmem [#allocation7], %s640
          %s643 = ssub.s32 16, 16
          %644 = vsyncadd %s639, %s643
          %s645 = smul.addr %s35, 16
          %s646 = scalar_lea.hbm %s4, %s645
          %s648 = sshll.u32 %s641, 4
          %s649 = int_to_ptr.vmem [resolvable:$true] %s648
          %651 = dma.hbm_to_vmem [thread:$0]  %s646, 16, %s649, %s639
        $region92: #{tpu_custom_call.1} parent=75 // pred_fallthru
          _
      $region76: #{tpu_custom_call.1} parent=5 // pred_fallthru
        _
      %p652 = scmp.le.s32.totalorder 1, %s35
      %p653 = scmp.lt.s32.totalorder %s35, 3
      %p654 = pnand %p652, %p653
      %p655 = pneg %p654
      // Predicated region
      $region93: #{tpu_custom_call.1} parent=5 // pred_check
        _
      $region94: #{tpu_custom_call.1} parent=5 // pred_check_branch
        %657 = sbr.rel (%p654) target = $region96
      $region95: #{tpu_custom_call.1} parent=5 // pred_region
        %s658 = ssub.s32 %s35, 1
        // Predicated region
        $region97: #{tpu_custom_call.1} parent=95 // pred_check
          %p659 = pneg %p108
        $region98: #{tpu_custom_call.1} parent=95 // pred_check_branch
          %661 = sbr.rel (%p659) target = $region100
        $region99: #{tpu_custom_call.1} parent=95 // pred_region
          %662 = dma.done [#allocation3], 128
        $region100: #{tpu_custom_call.1} parent=95 // pred_fallthru
          _
        %s663 = sand.u32 %s40, 1
        %s664 = scalar_lea.sflag [#allocation6], %s663
        %s665 = sand.u32 %s121, 1
        %s666 = scalar_lea.vmem [#allocation5], %s665
        // Predicated region
        $region101: #{tpu_custom_call.1} parent=95 // pred_check
          %p667 = pneg %p134
        $region102: #{tpu_custom_call.1} parent=95 // pred_check_branch
          %669 = sbr.rel (%p667) target = $region104
        $region103: #{tpu_custom_call.1} parent=95 // pred_region
          %670 = dma.done %s664, 16
        $region104: #{tpu_custom_call.1} parent=95 // pred_fallthru
          _
        %s671 = sand.u32 %s40, 1
        %s672 = scalar_lea.sflag [#allocation6], %s671
        %s673 = sand.u32 %s147, 1
        %s674 = scalar_lea.vmem [#allocation7], %s673
        // Predicated region
        $region105: #{tpu_custom_call.1} parent=95 // pred_check
          %p675 = pneg %p160
        $region106: #{tpu_custom_call.1} parent=95 // pred_check_branch
          %677 = sbr.rel (%p675) target = $region108
        $region107: #{tpu_custom_call.1} parent=95 // pred_region
          %678 = dma.done %s672, 16
        $region108: #{tpu_custom_call.1} parent=95 // pred_fallthru
          _
        // Predicated region
        $region109: #{tpu_custom_call.1} parent=95 // pred_check
          %p679 = pneg %p223
        $region110: #{tpu_custom_call.1} parent=95 // pred_check_branch
          %681 = sbr.rel (%p679) target = $region112
        $region111: #{tpu_custom_call.1} parent=95 // pred_region
          %682 = dma.done [#allocation9], 256
        $region112: #{tpu_custom_call.1} parent=95 // pred_fallthru
          _
        // Predicated region
        $region113: #{tpu_custom_call.1} parent=95 // pred_check
          %p683 = pneg %p244
        $region114: #{tpu_custom_call.1} parent=95 // pred_check_branch
          %685 = sbr.rel (%p683) target = $region116
        $region115: #{tpu_custom_call.1} parent=95 // pred_region
          %686 = dma.done [#allocation9], 16
        $region116: #{tpu_custom_call.1} parent=95 // pred_fallthru
          _
        // Predicated region
        $region117: #{tpu_custom_call.1} parent=95 // pred_check
          %p687 = pneg %p286
        $region118: #{tpu_custom_call.1} parent=95 // pred_check_branch
          %689 = sbr.rel (%p687) target = $region120
        $region119: #{tpu_custom_call.1} parent=95 // pred_region
          %690 = dma.done [#allocation12], 16
        $region120: #{tpu_custom_call.1} parent=95 // pred_fallthru
          _
        // Predicated region
        $region121: #{tpu_custom_call.1} parent=95 // pred_check
          %p691 = pneg %p307
        $region122: #{tpu_custom_call.1} parent=95 // pred_check_branch
          %693 = sbr.rel (%p691) target = $region124
        $region123: #{tpu_custom_call.1} parent=95 // pred_region
          %694 = dma.done [#allocation12], 256
        $region124: #{tpu_custom_call.1} parent=95 // pred_fallthru
          _
        // Predicated region
        $region125: #{tpu_custom_call.1} parent=95 // pred_check
          %p695 = pneg %p328
        $region126: #{tpu_custom_call.1} parent=95 // pred_check_branch
          %697 = sbr.rel (%p695) target = $region128
        $region127: #{tpu_custom_call.1} parent=95 // pred_region
          %698 = dma.done [#allocation15], 16
        $region128: #{tpu_custom_call.1} parent=95 // pred_fallthru
          _
        // Predicated region
        $region129: #{tpu_custom_call.1} parent=95 // pred_check
          %p699 = pneg %p349
        $region130: #{tpu_custom_call.1} parent=95 // pred_check_branch
          %701 = sbr.rel (%p699) target = $region132
        $region131: #{tpu_custom_call.1} parent=95 // pred_region
          %702 = dma.done [#allocation15], 64
        $region132: #{tpu_custom_call.1} parent=95 // pred_fallthru
          _
        %p703 = scmp.lt.s32.totalorder %s40, 1
        %s704 = scalar_select %p703, %s40, 1
        %s705 = smul.addr %s704, 8
        %s706 = scalar_lea.vmem %s0, %s705
        %p707 = pneg %p61
        %p708 = pneg %p58
        %p709 = scmp.lt.s32.totalorder %s40, 1
        %s710 = scalar_select %p709, %s40, 1
        %s711 = smul.addr %s710, 8
        %s712 = scalar_lea.vmem %s1, %s711
        %p713 = pneg %p87
        %p714 = pneg %p84
        %p715 = pneg %p108
        %p716 = pneg %p105
        %s717 = sand.u32 %s40, 1
        %s718 = scalar_lea.sflag [#allocation6], %s717
        %s719 = sand.u32 %s121, 1
        %s720 = scalar_lea.vmem [#allocation5], %s719
        %p721 = pneg %p134
        %p722 = pneg %p131
        %s723 = sand.u32 %s40, 1
        %s724 = scalar_lea.sflag [#allocation6], %s723
        %s725 = sand.u32 %s147, 1
        %s726 = scalar_lea.vmem [#allocation7], %s725
        %p727 = pneg %p160
        %p728 = pneg %p157
        %p729 = pneg %p181
        %p730 = pneg %p178
        %p731 = pneg %p202
        %p732 = pneg %p199
        %p733 = pneg %p223
        %p734 = pneg %p220
        %p735 = pneg %p244
        %p736 = pneg %p241
        %p737 = pneg %p265
        %p738 = pneg %p262
        %p739 = pneg %p286
        %p740 = pneg %p283
        %p741 = pneg %p307
        %p742 = pneg %p304
        %p743 = pneg %p328
        %p744 = pneg %p325
        %p745 = pneg %p349
        %p746 = pneg %p346
        %p747 = pneg %p370
        %p748 = pneg %p367
        %p749 = pneg %p391
        %p750 = pneg %p388
        %p751 = pneg %p412
        %p752 = pneg %p409
        %p753 = pneg %p433
        %p754 = pneg %p430
        %p755 = pneg %p454
        %p756 = pneg %p451
        %p757 = pneg %p480
        %p758 = pneg %p477
        %s759 = sand.u32 %s467, 1
        %s760 = scalar_lea.sflag [#allocation4], %s759
        %s761 = sand.u32 %s467, 1
        %s762 = smul.addr %s761, 8
        %s763 = scalar_lea.vmem [#allocation17], %s762
        %p764 = scmp.lt.s32.totalorder %s40, 1
        %s765 = scalar_select %p764, %s40, 1
        %s766 = smul.addr %s765, 8
        %s767 = scalar_lea.vmem %s0, %s766
        %p768 = scmp.lt.s32.totalorder %s40, 1
        %s769 = scalar_select %p768, %s40, 1
        %s770 = smul.addr %s769, 8
        %s771 = scalar_lea.vmem %s1, %s770
        %v773 = vld [vmem:[%s767] sm:$0xff]
        %v774 = vld [vmem:[%s771] sm:$0xff]
        %v775 = vld [vmem:[#allocation2] sm:$0xff]
        %v776 = vld [vmem:[%s666] sm:$0x1]
        %v777 = vmul.f32 %v776, -1e+09
        %v778 = vld [vmem:[%s674] sm:$0x1]
        %v779 = vmul.f32 %v778, -1e+09
        %v780 = vpack.c.bf16 %v773, %v773
        %v781 = vld [vmem:[%s5] sm:$0xf]
        %v782 = vld [vmem:[%s5 + $0x4] sm:$0xf]
        %v783 = vld [vmem:[%s5 + $0x8] sm:$0xf]
        %v784 = vld [vmem:[%s5 + $0xc] sm:$0xf]
        %v785 = vld [vmem:[%s6] sm:$0x1]
        %v787 = vlaneseq
        %v788 = vshrl.u32 %v787, 7
        %v789 = vsub.s32 0, %v788
        %v790 = vrot.slane %v785, %v789
        %v796 = vunpack.c.l.b16 %v781
        %v797 = vunpack.c.l.b16 %v782
        %v798 = vunpack.c.l.b16 %v783
        %v799 = vunpack.c.l.b16 %v784
        %v800 = vpack.c.b16 %v797, %v796
        %v801 = vpack.c.b16 %v799, %v798
        %vm804 = vcmask 261120
        %v806 = vsel %vm804, %v780, 0
        %808 = vmatprep.subr.bf16.mxu0 0
        %809 = vmatpush1.bf16.msra.mxu0 %v800
        %810 = vmatprep.subr.bf16.mxu0 0
        %811 = vmatpush1.bf16.msra.mxu0 %v801
        %812 = vmatprep.subr.bf16.mxu0 0
        %813 = vmatpush1.bf16.msra.mxu0 0
        %814 = vmatprep.subr.bf16.mxu0 0
        %815 = vmatpush1.bf16.msra.mxu0 0
        %816 = vmatprep.subr.bf16.mxu0 0
        %817 = vmatpush1.bf16.msra.mxu0 0
        %818 = vmatprep.subr.bf16.mxu0 0
        %819 = vmatpush1.bf16.msra.mxu0 0
        %820 = vmatprep.subr.bf16.mxu0 0
        %821 = vmatpush1.bf16.msra.mxu0 0
        %822 = vmatprep.subr.bf16.mxu0 0
        %823 = vmatpush1.bf16.msra.mxu0 0
        %824 = vmatprep.subr.bf16.mxu0 0
        %825 = vmatpush1.bf16.msra.mxu0 0
        %826 = vmatprep.subr.bf16.mxu0 0
        %827 = vmatpush1.bf16.msra.mxu0 0
        %828 = vmatprep.subr.bf16.mxu0 0
        %829 = vmatpush1.bf16.msra.mxu0 0
        %830 = vmatprep.subr.bf16.mxu0 0
        %831 = vmatpush1.bf16.msra.mxu0 0
        %832 = vmatprep.subr.bf16.mxu0 0
        %833 = vmatpush1.bf16.msra.mxu0 0
        %834 = vmatprep.subr.bf16.mxu0 0
        %835 = vmatpush1.bf16.msra.mxu0 0
        %836 = vmatprep.subr.bf16.mxu0 0
        %837 = vmatpush1.bf16.msra.mxu0 0
        %838 = vmatprep.subr.bf16.mxu0 0
        %839 = vmatpush1.bf16.msra.mxu0 0
        %840 = vmatprep.mubr.bf16.mxu0 0
        %841 = vmatmul.mubr.bf16.gmra.mrb[0].mxu0 %v806
        %v842 = vpop.f32.mrb[0].mxu0
        %v843 = vadd.f32 %v790, %v842
        %v844 = vpop.f32.mrb[0].mxu0
        %v845 = vpop.f32.mrb[0].mxu0
        %v846 = vpop.f32.mrb[0].mxu0
        %847 = vdwg.mxu0
        %v848 = vmul.f32 %v843, 0.35355338
        %849 = vrot.lane.b32.xlu0 %v800, 96
        %v850 = vpop.permute.xlu0 %849
        %851 = vrot.lane.b32.xlu0 %v801, 96
        %v852 = vpop.permute.xlu0 %851
        %855 = vrot.lane.b32.xlu0 %v790, 96
        %v856 = vpop.permute.xlu0 %855
        %858 = vmatprep.subr.bf16.mxu0 0
        %859 = vmatpush1.bf16.msra.mxu0 %v850
        %860 = vmatprep.subr.bf16.mxu0 0
        %861 = vmatpush1.bf16.msra.mxu0 %v852
        %862 = vmatprep.subr.bf16.mxu0 0
        %863 = vmatpush1.bf16.msra.mxu0 0
        %864 = vmatprep.subr.bf16.mxu0 0
        %865 = vmatpush1.bf16.msra.mxu0 0
        %866 = vmatprep.subr.bf16.mxu0 0
        %867 = vmatpush1.bf16.msra.mxu0 0
        %868 = vmatprep.subr.bf16.mxu0 0
        %869 = vmatpush1.bf16.msra.mxu0 0
        %870 = vmatprep.subr.bf16.mxu0 0
        %871 = vmatpush1.bf16.msra.mxu0 0
        %872 = vmatprep.subr.bf16.mxu0 0
        %873 = vmatpush1.bf16.msra.mxu0 0
        %874 = vmatprep.subr.bf16.mxu0 0
        %875 = vmatpush1.bf16.msra.mxu0 0
        %876 = vmatprep.subr.bf16.mxu0 0
        %877 = vmatpush1.bf16.msra.mxu0 0
        %878 = vmatprep.subr.bf16.mxu0 0
        %879 = vmatpush1.bf16.msra.mxu0 0
        %880 = vmatprep.subr.bf16.mxu0 0
        %881 = vmatpush1.bf16.msra.mxu0 0
        %882 = vmatprep.subr.bf16.mxu0 0
        %883 = vmatpush1.bf16.msra.mxu0 0
        %884 = vmatprep.subr.bf16.mxu0 0
        %885 = vmatpush1.bf16.msra.mxu0 0
        %886 = vmatprep.subr.bf16.mxu0 0
        %887 = vmatpush1.bf16.msra.mxu0 0
        %888 = vmatprep.subr.bf16.mxu0 0
        %889 = vmatpush1.bf16.msra.mxu0 0
        %890 = vmatprep.mubr.bf16.mxu0 0
        %891 = vmatmul.mubr.bf16.gmra.mrb[0].mxu0 %v806
        %v892 = vpop.f32.mrb[0].mxu0
        %v893 = vadd.f32 %v856, %v892
        %v894 = vpop.f32.mrb[0].mxu0
        %v895 = vpop.f32.mrb[0].mxu0
        %v896 = vpop.f32.mrb[0].mxu0
        %897 = vdwg.mxu0
        %898 = vrot.lane.b32.xlu0 %v800, 64
        %v899 = vpop.permute.xlu0 %898
        %900 = vrot.lane.b32.xlu0 %v801, 64
        %v901 = vpop.permute.xlu0 %900
        %904 = vrot.lane.b32.xlu0 %v790, 64
        %v905 = vpop.permute.xlu0 %904
        %907 = vmatprep.subr.bf16.mxu0 0
        %908 = vmatpush1.bf16.msra.mxu0 %v899
        %909 = vmatprep.subr.bf16.mxu0 0
        %910 = vmatpush1.bf16.msra.mxu0 %v901
        %911 = vmatprep.subr.bf16.mxu0 0
        %912 = vmatpush1.bf16.msra.mxu0 0
        %913 = vmatprep.subr.bf16.mxu0 0
        %914 = vmatpush1.bf16.msra.mxu0 0
        %915 = vmatprep.subr.bf16.mxu0 0
        %916 = vmatpush1.bf16.msra.mxu0 0
        %917 = vmatprep.subr.bf16.mxu0 0
        %918 = vmatpush1.bf16.msra.mxu0 0
        %919 = vmatprep.subr.bf16.mxu0 0
        %920 = vmatpush1.bf16.msra.mxu0 0
        %921 = vmatprep.subr.bf16.mxu0 0
        %922 = vmatpush1.bf16.msra.mxu0 0
        %923 = vmatprep.subr.bf16.mxu0 0
        %924 = vmatpush1.bf16.msra.mxu0 0
        %925 = vmatprep.subr.bf16.mxu0 0
        %926 = vmatpush1.bf16.msra.mxu0 0
        %927 = vmatprep.subr.bf16.mxu0 0
        %928 = vmatpush1.bf16.msra.mxu0 0
        %929 = vmatprep.subr.bf16.mxu0 0
        %930 = vmatpush1.bf16.msra.mxu0 0
        %931 = vmatprep.subr.bf16.mxu0 0
        %932 = vmatpush1.bf16.msra.mxu0 0
        %933 = vmatprep.subr.bf16.mxu0 0
        %934 = vmatpush1.bf16.msra.mxu0 0
        %935 = vmatprep.subr.bf16.mxu0 0
        %936 = vmatpush1.bf16.msra.mxu0 0
        %937 = vmatprep.subr.bf16.mxu0 0
        %938 = vmatpush1.bf16.msra.mxu0 0
        %939 = vmatprep.mubr.bf16.mxu0 0
        %940 = vmatmul.mubr.bf16.gmra.mrb[0].mxu0 %v806
        %v941 = vpop.f32.mrb[0].mxu0
        %v942 = vadd.f32 %v905, %v941
        %v943 = vpop.f32.mrb[0].mxu0
        %v944 = vpop.f32.mrb[0].mxu0
        %v945 = vpop.f32.mrb[0].mxu0
        %946 = vdwg.mxu0
        %vm947 = vcmask 64512
        %v949 = vsel %vm947, %v848, 0
        %v952 = vsel %vm947, %v893, 0
        %954 = vmatprep.subr.mxu0 0.0
        %955 = vmatpush1.xpose.msra.mxu0 %v952
        %956 = vmatprep.subr.mxu0 0.0
        %957 = vmatpush1.xpose.msra.mxu0 0.0
        %958 = vmatprep.subr.mxu0 0.0
        %959 = vmatpush1.xpose.msra.mxu0 0.0
        %960 = vmatprep.subr.mxu0 0.0
        %961 = vmatpush1.xpose.msra.mxu0 0.0
        %962 = vmatprep.subr.mxu0 0.0
        %963 = vmatpush1.xpose.msra.mxu0 0.0
        %964 = vmatprep.subr.mxu0 0.0
        %965 = vmatpush1.xpose.msra.mxu0 0.0
        %966 = vmatprep.subr.mxu0 0.0
        %967 = vmatpush1.xpose.msra.mxu0 0.0
        %968 = vmatprep.subr.mxu0 0.0
        %969 = vmatpush1.xpose.msra.mxu0 0.0
        %970 = vmatprep.subr.mxu0 0.0
        %971 = vmatpush1.xpose.msra.mxu0 0.0
        %972 = vmatprep.subr.mxu0 0.0
        %973 = vmatpush1.xpose.msra.mxu0 0.0
        %974 = vmatprep.subr.mxu0 0.0
        %975 = vmatpush1.xpose.msra.mxu0 0.0
        %976 = vmatprep.subr.mxu0 0.0
        %977 = vmatpush1.xpose.msra.mxu0 0.0
        %978 = vmatprep.subr.mxu0 0.0
        %979 = vmatpush1.xpose.msra.mxu0 0.0
        %980 = vmatprep.subr.mxu0 0.0
        %981 = vmatpush1.xpose.msra.mxu0 0.0
        %982 = vmatprep.subr.mxu0 0.0
        %983 = vmatpush1.xpose.msra.mxu0 0.0
        %984 = vmatprep.subr.mxu0 0.0
        %985 = vmatpush1.xpose.msra.mxu0 0.0
        %986 = vmatprep.subr.mxu0 0.0
        %987 = vmatpush1.xpose.msra.mxu0 0.0
        %988 = vmatprep.subr.mxu0 0.0
        %989 = vmatpush1.xpose.msra.mxu0 0.0
        %990 = vmatprep.subr.mxu0 0.0
        %991 = vmatpush1.xpose.msra.mxu0 0.0
        %992 = vmatprep.subr.mxu0 0.0
        %993 = vmatpush1.xpose.msra.mxu0 0.0
        %994 = vmatprep.subr.mxu0 0.0
        %995 = vmatpush1.xpose.msra.mxu0 0.0
        %996 = vmatprep.subr.mxu0 0.0
        %997 = vmatpush1.xpose.msra.mxu0 0.0
        %998 = vmatprep.subr.mxu0 0.0
        %999 = vmatpush1.xpose.msra.mxu0 0.0
        %1000 = vmatprep.subr.mxu0 0.0
        %1001 = vmatpush1.xpose.msra.mxu0 0.0
        %1002 = vmatprep.subr.mxu0 0.0
        %1003 = vmatpush1.xpose.msra.mxu0 0.0
        %1004 = vmatprep.subr.mxu0 0.0
        %1005 = vmatpush1.xpose.msra.mxu0 0.0
        %1006 = vmatprep.subr.mxu0 0.0
        %1007 = vmatpush1.xpose.msra.mxu0 0.0
        %1008 = vmatprep.subr.mxu0 0.0
        %1009 = vmatpush1.xpose.msra.mxu0 0.0
        %1010 = vmatprep.subr.mxu0 0.0
        %1011 = vmatpush1.xpose.msra.mxu0 0.0
        %1012 = vmatprep.subr.mxu0 0.0
        %1013 = vmatpush1.xpose.msra.mxu0 0.0
        %1014 = vmatprep.subr.mxu0 0.0
        %1015 = vmatpush1.xpose.msra.mxu0 0.0
        %1016 = vmatprep.subr.mxu0 0.0
        %1017 = vmatpush1.xpose.msra.mxu0 0.0
        %1018 = vmatprep.mubr.f32.mxu0 0.0
        %1019 = vmatmul.mubr.f32.gmra.mrb[0].mxu0 %v949
        %v1020 = vpop.f32.mrb[0].mxu0
        %v1021 = vadd.f32 %v775, %v1020
        %v1022 = vpop.f32.mrb[0].mxu0
        %1023 = vdwg.mxu0
        %v1025 = vlaneseq
        %v1026 = vshrl.u32 %v1025, 7
        %v1027 = vsub.s32 0, %v1026
        %v1028 = vrot.slane %v777, %v1027
        %v1030 = vadd.f32 %v1021, %v1028
        %v1031 = vsel %vm947, %v1030, -inf
        %1032 = vmax.xlane.f32.xlu0 %v1031
        %v1033 = vpop.xlane.xlu0 %1032
        %v1034 = vsub.f32 %v1030, %v1033
        %v1035 = vmul.f32 %v1034, 1.442695
        %v1036 = vpow.pop %v1035
        %v1037 = vsel %vm947, %v1036, 0.0
        %1038 = vadd.xlane.f32.xlu0 %v1037
        %v1039 = vpop.xlane.xlu0 %1038
        %v1040 = vrcp.pop %v1039
        %v1041 = vmul.f32 %v1036, %v1040
        %v1043 = vsel %vm947, %v1041, 0
        %1045 = vmatprep.subr.mxu0 0.0
        %1046 = vmatpush1.msra.mxu0 %v942
        %1047 = vmatprep.subr.mxu0 0.0
        %1048 = vmatpush1.msra.mxu0 0.0
        %1049 = vmatprep.subr.mxu0 0.0
        %1050 = vmatpush1.msra.mxu0 0.0
        %1051 = vmatprep.subr.mxu0 0.0
        %1052 = vmatpush1.msra.mxu0 0.0
        %1053 = vmatprep.subr.mxu0 0.0
        %1054 = vmatpush1.msra.mxu0 0.0
        %1055 = vmatprep.subr.mxu0 0.0
        %1056 = vmatpush1.msra.mxu0 0.0
        %1057 = vmatprep.subr.mxu0 0.0
        %1058 = vmatpush1.msra.mxu0 0.0
        %1059 = vmatprep.subr.mxu0 0.0
        %1060 = vmatpush1.msra.mxu0 0.0
        %1061 = vmatprep.subr.mxu0 0.0
        %1062 = vmatpush1.msra.mxu0 0.0
        %1063 = vmatprep.subr.mxu0 0.0
        %1064 = vmatpush1.msra.mxu0 0.0
        %1065 = vmatprep.subr.mxu0 0.0
        %1066 = vmatpush1.msra.mxu0 0.0
        %1067 = vmatprep.subr.mxu0 0.0
        %1068 = vmatpush1.msra.mxu0 0.0
        %1069 = vmatprep.subr.mxu0 0.0
        %1070 = vmatpush1.msra.mxu0 0.0
        %1071 = vmatprep.subr.mxu0 0.0
        %1072 = vmatpush1.msra.mxu0 0.0
        %1073 = vmatprep.subr.mxu0 0.0
        %1074 = vmatpush1.msra.mxu0 0.0
        %1075 = vmatprep.subr.mxu0 0.0
        %1076 = vmatpush1.msra.mxu0 0.0
        %1077 = vmatprep.subr.mxu0 0.0
        %1078 = vmatpush1.msra.mxu0 0.0
        %1079 = vmatprep.subr.mxu0 0.0
        %1080 = vmatpush1.msra.mxu0 0.0
        %1081 = vmatprep.subr.mxu0 0.0
        %1082 = vmatpush1.msra.mxu0 0.0
        %1083 = vmatprep.subr.mxu0 0.0
        %1084 = vmatpush1.msra.mxu0 0.0
        %1085 = vmatprep.subr.mxu0 0.0
        %1086 = vmatpush1.msra.mxu0 0.0
        %1087 = vmatprep.subr.mxu0 0.0
        %1088 = vmatpush1.msra.mxu0 0.0
        %1089 = vmatprep.subr.mxu0 0.0
        %1090 = vmatpush1.msra.mxu0 0.0
        %1091 = vmatprep.subr.mxu0 0.0
        %1092 = vmatpush1.msra.mxu0 0.0
        %1093 = vmatprep.subr.mxu0 0.0
        %1094 = vmatpush1.msra.mxu0 0.0
        %1095 = vmatprep.subr.mxu0 0.0
        %1096 = vmatpush1.msra.mxu0 0.0
        %1097 = vmatprep.subr.mxu0 0.0
        %1098 = vmatpush1.msra.mxu0 0.0
        %1099 = vmatprep.subr.mxu0 0.0
        %1100 = vmatpush1.msra.mxu0 0.0
        %1101 = vmatprep.subr.mxu0 0.0
        %1102 = vmatpush1.msra.mxu0 0.0
        %1103 = vmatprep.subr.mxu0 0.0
        %1104 = vmatpush1.msra.mxu0 0.0
        %1105 = vmatprep.subr.mxu0 0.0
        %1106 = vmatpush1.msra.mxu0 0.0
        %1107 = vmatprep.subr.mxu0 0.0
        %1108 = vmatpush1.msra.mxu0 0.0
        %1109 = vmatprep.mubr.f32.mxu0 0.0
        %1110 = vmatmul.mubr.f32.gmra.mrb[0].mxu0 %v1043
        %v1111 = vpop.f32.mrb[0].mxu0
        %v1112 = vadd.f32 0.0, %v1111
        %v1113 = vpop.f32.mrb[0].mxu0
        %1114 = vdwg.mxu0
        %1115 = vrot.lane.b32.xlu0 %v848, 120
        %v1116 = vpop.permute.xlu0 %1115
        %1117 = vrot.lane.b32.xlu0 %v893, 120
        %v1118 = vpop.permute.xlu0 %1117
        %v1119 = vsel %vm947, %v1116, 0
        %v1121 = vsel %vm947, %v1118, 0
        %1123 = vmatprep.subr.mxu0 0.0
        %1124 = vmatpush1.xpose.msra.mxu0 %v1121
        %1125 = vmatprep.subr.mxu0 0.0
        %1126 = vmatpush1.xpose.msra.mxu0 0.0
        %1127 = vmatprep.subr.mxu0 0.0
        %1128 = vmatpush1.xpose.msra.mxu0 0.0
        %1129 = vmatprep.subr.mxu0 0.0
        %1130 = vmatpush1.xpose.msra.mxu0 0.0
        %1131 = vmatprep.subr.mxu0 0.0
        %1132 = vmatpush1.xpose.msra.mxu0 0.0
        %1133 = vmatprep.subr.mxu0 0.0
        %1134 = vmatpush1.xpose.msra.mxu0 0.0
        %1135 = vmatprep.subr.mxu0 0.0
        %1136 = vmatpush1.xpose.msra.mxu0 0.0
        %1137 = vmatprep.subr.mxu0 0.0
        %1138 = vmatpush1.xpose.msra.mxu0 0.0
        %1139 = vmatprep.subr.mxu0 0.0
        %1140 = vmatpush1.xpose.msra.mxu0 0.0
        %1141 = vmatprep.subr.mxu0 0.0
        %1142 = vmatpush1.xpose.msra.mxu0 0.0
        %1143 = vmatprep.subr.mxu0 0.0
        %1144 = vmatpush1.xpose.msra.mxu0 0.0
        %1145 = vmatprep.subr.mxu0 0.0
        %1146 = vmatpush1.xpose.msra.mxu0 0.0
        %1147 = vmatprep.subr.mxu0 0.0
        %1148 = vmatpush1.xpose.msra.mxu0 0.0
        %1149 = vmatprep.subr.mxu0 0.0
        %1150 = vmatpush1.xpose.msra.mxu0 0.0
        %1151 = vmatprep.subr.mxu0 0.0
        %1152 = vmatpush1.xpose.msra.mxu0 0.0
        %1153 = vmatprep.subr.mxu0 0.0
        %1154 = vmatpush1.xpose.msra.mxu0 0.0
        %1155 = vmatprep.subr.mxu0 0.0
        %1156 = vmatpush1.xpose.msra.mxu0 0.0
        %1157 = vmatprep.subr.mxu0 0.0
        %1158 = vmatpush1.xpose.msra.mxu0 0.0
        %1159 = vmatprep.subr.mxu0 0.0
        %1160 = vmatpush1.xpose.msra.mxu0 0.0
        %1161 = vmatprep.subr.mxu0 0.0
        %1162 = vmatpush1.xpose.msra.mxu0 0.0
        %1163 = vmatprep.subr.mxu0 0.0
        %1164 = vmatpush1.xpose.msra.mxu0 0.0
        %1165 = vmatprep.subr.mxu0 0.0
        %1166 = vmatpush1.xpose.msra.mxu0 0.0
        %1167 = vmatprep.subr.mxu0 0.0
        %1168 = vmatpush1.xpose.msra.mxu0 0.0
        %1169 = vmatprep.subr.mxu0 0.0
        %1170 = vmatpush1.xpose.msra.mxu0 0.0
        %1171 = vmatprep.subr.mxu0 0.0
        %1172 = vmatpush1.xpose.msra.mxu0 0.0
        %1173 = vmatprep.subr.mxu0 0.0
        %1174 = vmatpush1.xpose.msra.mxu0 0.0
        %1175 = vmatprep.subr.mxu0 0.0
        %1176 = vmatpush1.xpose.msra.mxu0 0.0
        %1177 = vmatprep.subr.mxu0 0.0
        %1178 = vmatpush1.xpose.msra.mxu0 0.0
        %1179 = vmatprep.subr.mxu0 0.0
        %1180 = vmatpush1.xpose.msra.mxu0 0.0
        %1181 = vmatprep.subr.mxu0 0.0
        %1182 = vmatpush1.xpose.msra.mxu0 0.0
        %1183 = vmatprep.subr.mxu0 0.0
        %1184 = vmatpush1.xpose.msra.mxu0 0.0
        %1185 = vmatprep.subr.mxu0 0.0
        %1186 = vmatpush1.xpose.msra.mxu0 0.0
        %1187 = vmatprep.mubr.f32.mxu0 0.0
        %1188 = vmatmul.mubr.f32.gmra.mrb[0].mxu0 %v1119
        %v1189 = vpop.f32.mrb[0].mxu0
        %v1190 = vadd.f32 %v775, %v1189
        %v1191 = vpop.f32.mrb[0].mxu0
        %1192 = vdwg.mxu0
        %v1193 = vadd.f32 %v1190, %v1028
        %v1194 = vsel %vm947, %v1193, -inf
        %1195 = vmax.xlane.f32.xlu0 %v1194
        %v1196 = vpop.xlane.xlu0 %1195
        %v1197 = vsub.f32 %v1193, %v1196
        %v1198 = vmul.f32 %v1197, 1.442695
        %v1199 = vpow.pop %v1198
        %v1200 = vsel %vm947, %v1199, 0.0
        %1201 = vadd.xlane.f32.xlu0 %v1200
        %v1202 = vpop.xlane.xlu0 %1201
        %v1203 = vrcp.pop %v1202
        %v1204 = vmul.f32 %v1199, %v1203
        %1206 = vrot.lane.b32.xlu0 %v942, 120
        %v1207 = vpop.permute.xlu0 %1206
        %v1210 = vsel %vm947, %v1204, 0
        %1212 = vmatprep.subr.mxu0 0.0
        %1213 = vmatpush1.msra.mxu0 %v1207
        %1214 = vmatprep.subr.mxu0 0.0
        %1215 = vmatpush1.msra.mxu0 0.0
        %1216 = vmatprep.subr.mxu0 0.0
        %1217 = vmatpush1.msra.mxu0 0.0
        %1218 = vmatprep.subr.mxu0 0.0
        %1219 = vmatpush1.msra.mxu0 0.0
        %1220 = vmatprep.subr.mxu0 0.0
        %1221 = vmatpush1.msra.mxu0 0.0
        %1222 = vmatprep.subr.mxu0 0.0
        %1223 = vmatpush1.msra.mxu0 0.0
        %1224 = vmatprep.subr.mxu0 0.0
        %1225 = vmatpush1.msra.mxu0 0.0
        %1226 = vmatprep.subr.mxu0 0.0
        %1227 = vmatpush1.msra.mxu0 0.0
        %1228 = vmatprep.subr.mxu0 0.0
        %1229 = vmatpush1.msra.mxu0 0.0
        %1230 = vmatprep.subr.mxu0 0.0
        %1231 = vmatpush1.msra.mxu0 0.0
        %1232 = vmatprep.subr.mxu0 0.0
        %1233 = vmatpush1.msra.mxu0 0.0
        %1234 = vmatprep.subr.mxu0 0.0
        %1235 = vmatpush1.msra.mxu0 0.0
        %1236 = vmatprep.subr.mxu0 0.0
        %1237 = vmatpush1.msra.mxu0 0.0
        %1238 = vmatprep.subr.mxu0 0.0
        %1239 = vmatpush1.msra.mxu0 0.0
        %1240 = vmatprep.subr.mxu0 0.0
        %1241 = vmatpush1.msra.mxu0 0.0
        %1242 = vmatprep.subr.mxu0 0.0
        %1243 = vmatpush1.msra.mxu0 0.0
        %1244 = vmatprep.subr.mxu0 0.0
        %1245 = vmatpush1.msra.mxu0 0.0
        %1246 = vmatprep.subr.mxu0 0.0
        %1247 = vmatpush1.msra.mxu0 0.0
        %1248 = vmatprep.subr.mxu0 0.0
        %1249 = vmatpush1.msra.mxu0 0.0
        %1250 = vmatprep.subr.mxu0 0.0
        %1251 = vmatpush1.msra.mxu0 0.0
        %1252 = vmatprep.subr.mxu0 0.0
        %1253 = vmatpush1.msra.mxu0 0.0
        %1254 = vmatprep.subr.mxu0 0.0
        %1255 = vmatpush1.msra.mxu0 0.0
        %1256 = vmatprep.subr.mxu0 0.0
        %1257 = vmatpush1.msra.mxu0 0.0
        %1258 = vmatprep.subr.mxu0 0.0
        %1259 = vmatpush1.msra.mxu0 0.0
        %1260 = vmatprep.subr.mxu0 0.0
        %1261 = vmatpush1.msra.mxu0 0.0
        %1262 = vmatprep.subr.mxu0 0.0
        %1263 = vmatpush1.msra.mxu0 0.0
        %1264 = vmatprep.subr.mxu0 0.0
        %1265 = vmatpush1.msra.mxu0 0.0
        %1266 = vmatprep.subr.mxu0 0.0
        %1267 = vmatpush1.msra.mxu0 0.0
        %1268 = vmatprep.subr.mxu0 0.0
        %1269 = vmatpush1.msra.mxu0 0.0
        %1270 = vmatprep.subr.mxu0 0.0
        %1271 = vmatpush1.msra.mxu0 0.0
        %1272 = vmatprep.subr.mxu0 0.0
        %1273 = vmatpush1.msra.mxu0 0.0
        %1274 = vmatprep.subr.mxu0 0.0
        %1275 = vmatpush1.msra.mxu0 0.0
        %1276 = vmatprep.mubr.f32.mxu0 0.0
        %1277 = vmatmul.mubr.f32.gmra.mrb[0].mxu0 %v1210
        %v1278 = vpop.f32.mrb[0].mxu0
        %v1279 = vadd.f32 0.0, %v1278
        %v1280 = vpop.f32.mrb[0].mxu0
        %1281 = vdwg.mxu0
        %1282 = vrot.lane.b32.xlu0 %v848, 112
        %v1283 = vpop.permute.xlu0 %1282
        %1284 = vrot.lane.b32.xlu0 %v893, 112
        %v1285 = vpop.permute.xlu0 %1284
        %v1286 = vsel %vm947, %v1283, 0
        %v1288 = vsel %vm947, %v1285, 0
        %1290 = vmatprep.subr.mxu0 0.0
        %1291 = vmatpush1.xpose.msra.mxu0 %v1288
        %1292 = vmatprep.subr.mxu0 0.0
        %1293 = vmatpush1.xpose.msra.mxu0 0.0
        %1294 = vmatprep.subr.mxu0 0.0
        %1295 = vmatpush1.xpose.msra.mxu0 0.0
        %1296 = vmatprep.subr.mxu0 0.0
        %1297 = vmatpush1.xpose.msra.mxu0 0.0
        %1298 = vmatprep.subr.mxu0 0.0
        %1299 = vmatpush1.xpose.msra.mxu0 0.0
        %1300 = vmatprep.subr.mxu0 0.0
        %1301 = vmatpush1.xpose.msra.mxu0 0.0
        %1302 = vmatprep.subr.mxu0 0.0
        %1303 = vmatpush1.xpose.msra.mxu0 0.0
        %1304 = vmatprep.subr.mxu0 0.0
        %1305 = vmatpush1.xpose.msra.mxu0 0.0
        %1306 = vmatprep.subr.mxu0 0.0
        %1307 = vmatpush1.xpose.msra.mxu0 0.0
        %1308 = vmatprep.subr.mxu0 0.0
        %1309 = vmatpush1.xpose.msra.mxu0 0.0
        %1310 = vmatprep.subr.mxu0 0.0
        %1311 = vmatpush1.xpose.msra.mxu0 0.0
        %1312 = vmatprep.subr.mxu0 0.0
        %1313 = vmatpush1.xpose.msra.mxu0 0.0
        %1314 = vmatprep.subr.mxu0 0.0
        %1315 = vmatpush1.xpose.msra.mxu0 0.0
        %1316 = vmatprep.subr.mxu0 0.0
        %1317 = vmatpush1.xpose.msra.mxu0 0.0
        %1318 = vmatprep.subr.mxu0 0.0
        %1319 = vmatpush1.xpose.msra.mxu0 0.0
        %1320 = vmatprep.subr.mxu0 0.0
        %1321 = vmatpush1.xpose.msra.mxu0 0.0
        %1322 = vmatprep.subr.mxu0 0.0
        %1323 = vmatpush1.xpose.msra.mxu0 0.0
        %1324 = vmatprep.subr.mxu0 0.0
        %1325 = vmatpush1.xpose.msra.mxu0 0.0
        %1326 = vmatprep.subr.mxu0 0.0
        %1327 = vmatpush1.xpose.msra.mxu0 0.0
        %1328 = vmatprep.subr.mxu0 0.0
        %1329 = vmatpush1.xpose.msra.mxu0 0.0
        %1330 = vmatprep.subr.mxu0 0.0
        %1331 = vmatpush1.xpose.msra.mxu0 0.0
        %1332 = vmatprep.subr.mxu0 0.0
        %1333 = vmatpush1.xpose.msra.mxu0 0.0
        %1334 = vmatprep.subr.mxu0 0.0
        %1335 = vmatpush1.xpose.msra.mxu0 0.0
        %1336 = vmatprep.subr.mxu0 0.0
        %1337 = vmatpush1.xpose.msra.mxu0 0.0
        %1338 = vmatprep.subr.mxu0 0.0
        %1339 = vmatpush1.xpose.msra.mxu0 0.0
        %1340 = vmatprep.subr.mxu0 0.0
        %1341 = vmatpush1.xpose.msra.mxu0 0.0
        %1342 = vmatprep.subr.mxu0 0.0
        %1343 = vmatpush1.xpose.msra.mxu0 0.0
        %1344 = vmatprep.subr.mxu0 0.0
        %1345 = vmatpush1.xpose.msra.mxu0 0.0
        %1346 = vmatprep.subr.mxu0 0.0
        %1347 = vmatpush1.xpose.msra.mxu0 0.0
        %1348 = vmatprep.subr.mxu0 0.0
        %1349 = vmatpush1.xpose.msra.mxu0 0.0
        %1350 = vmatprep.subr.mxu0 0.0
        %1351 = vmatpush1.xpose.msra.mxu0 0.0
        %1352 = vmatprep.subr.mxu0 0.0
        %1353 = vmatpush1.xpose.msra.mxu0 0.0
        %1354 = vmatprep.mubr.f32.mxu0 0.0
        %1355 = vmatmul.mubr.f32.gmra.mrb[0].mxu0 %v1286
        %v1356 = vpop.f32.mrb[0].mxu0
        %v1357 = vadd.f32 %v775, %v1356
        %v1358 = vpop.f32.mrb[0].mxu0
        %1359 = vdwg.mxu0
        %v1360 = vadd.f32 %v1357, %v1028
        %v1361 = vsel %vm947, %v1360, -inf
        %1362 = vmax.xlane.f32.xlu0 %v1361
        %v1363 = vpop.xlane.xlu0 %1362
        %v1364 = vsub.f32 %v1360, %v1363
        %v1365 = vmul.f32 %v1364, 1.442695
        %v1366 = vpow.pop %v1365
        %v1367 = vsel %vm947, %v1366, 0.0
        %1368 = vadd.xlane.f32.xlu0 %v1367
        %v1369 = vpop.xlane.xlu0 %1368
        %v1370 = vrcp.pop %v1369
        %v1371 = vmul.f32 %v1366, %v1370
        %1372 = vrot.lane.b32.xlu0 %v942, 112
        %v1373 = vpop.permute.xlu0 %1372
        %v1376 = vsel %vm947, %v1371, 0
        %1378 = vmatprep.subr.mxu0 0.0
        %1379 = vmatpush1.msra.mxu0 %v1373
        %1380 = vmatprep.subr.mxu0 0.0
        %1381 = vmatpush1.msra.mxu0 0.0
        %1382 = vmatprep.subr.mxu0 0.0
        %1383 = vmatpush1.msra.mxu0 0.0
        %1384 = vmatprep.subr.mxu0 0.0
        %1385 = vmatpush1.msra.mxu0 0.0
        %1386 = vmatprep.subr.mxu0 0.0
        %1387 = vmatpush1.msra.mxu0 0.0
        %1388 = vmatprep.subr.mxu0 0.0
        %1389 = vmatpush1.msra.mxu0 0.0
        %1390 = vmatprep.subr.mxu0 0.0
        %1391 = vmatpush1.msra.mxu0 0.0
        %1392 = vmatprep.subr.mxu0 0.0
        %1393 = vmatpush1.msra.mxu0 0.0
        %1394 = vmatprep.subr.mxu0 0.0
        %1395 = vmatpush1.msra.mxu0 0.0
        %1396 = vmatprep.subr.mxu0 0.0
        %1397 = vmatpush1.msra.mxu0 0.0
        %1398 = vmatprep.subr.mxu0 0.0
        %1399 = vmatpush1.msra.mxu0 0.0
        %1400 = vmatprep.subr.mxu0 0.0
        %1401 = vmatpush1.msra.mxu0 0.0
        %1402 = vmatprep.subr.mxu0 0.0
        %1403 = vmatpush1.msra.mxu0 0.0
        %1404 = vmatprep.subr.mxu0 0.0
        %1405 = vmatpush1.msra.mxu0 0.0
        %1406 = vmatprep.subr.mxu0 0.0
        %1407 = vmatpush1.msra.mxu0 0.0
        %1408 = vmatprep.subr.mxu0 0.0
        %1409 = vmatpush1.msra.mxu0 0.0
        %1410 = vmatprep.subr.mxu0 0.0
        %1411 = vmatpush1.msra.mxu0 0.0
        %1412 = vmatprep.subr.mxu0 0.0
        %1413 = vmatpush1.msra.mxu0 0.0
        %1414 = vmatprep.subr.mxu0 0.0
        %1415 = vmatpush1.msra.mxu0 0.0
        %1416 = vmatprep.subr.mxu0 0.0
        %1417 = vmatpush1.msra.mxu0 0.0
        %1418 = vmatprep.subr.mxu0 0.0
        %1419 = vmatpush1.msra.mxu0 0.0
        %1420 = vmatprep.subr.mxu0 0.0
        %1421 = vmatpush1.msra.mxu0 0.0
        %1422 = vmatprep.subr.mxu0 0.0
        %1423 = vmatpush1.msra.mxu0 0.0
        %1424 = vmatprep.subr.mxu0 0.0
        %1425 = vmatpush1.msra.mxu0 0.0
        %1426 = vmatprep.subr.mxu0 0.0
        %1427 = vmatpush1.msra.mxu0 0.0
        %1428 = vmatprep.subr.mxu0 0.0
        %1429 = vmatpush1.msra.mxu0 0.0
        %1430 = vmatprep.subr.mxu0 0.0
        %1431 = vmatpush1.msra.mxu0 0.0
        %1432 = vmatprep.subr.mxu0 0.0
        %1433 = vmatpush1.msra.mxu0 0.0
        %1434 = vmatprep.subr.mxu0 0.0
        %1435 = vmatpush1.msra.mxu0 0.0
        %1436 = vmatprep.subr.mxu0 0.0
        %1437 = vmatpush1.msra.mxu0 0.0
        %1438 = vmatprep.subr.mxu0 0.0
        %1439 = vmatpush1.msra.mxu0 0.0
        %1440 = vmatprep.subr.mxu0 0.0
        %1441 = vmatpush1.msra.mxu0 0.0
        %1442 = vmatprep.mubr.f32.mxu0 0.0
        %1443 = vmatmul.mubr.f32.gmra.mrb[0].mxu0 %v1376
        %v1444 = vpop.f32.mrb[0].mxu0
        %v1445 = vadd.f32 0.0, %v1444
        %v1446 = vpop.f32.mrb[0].mxu0
        %1447 = vdwg.mxu0
        %1448 = vrot.lane.b32.xlu0 %v848, 104
        %v1449 = vpop.permute.xlu0 %1448
        %1450 = vrot.lane.b32.xlu0 %v893, 104
        %v1451 = vpop.permute.xlu0 %1450
        %v1452 = vsel %vm947, %v1449, 0
        %v1454 = vsel %vm947, %v1451, 0
        %1456 = vmatprep.subr.mxu0 0.0
        %1457 = vmatpush1.xpose.msra.mxu0 %v1454
        %1458 = vmatprep.subr.mxu0 0.0
        %1459 = vmatpush1.xpose.msra.mxu0 0.0
        %1460 = vmatprep.subr.mxu0 0.0
        %1461 = vmatpush1.xpose.msra.mxu0 0.0
        %1462 = vmatprep.subr.mxu0 0.0
        %1463 = vmatpush1.xpose.msra.mxu0 0.0
        %1464 = vmatprep.subr.mxu0 0.0
        %1465 = vmatpush1.xpose.msra.mxu0 0.0
        %1466 = vmatprep.subr.mxu0 0.0
        %1467 = vmatpush1.xpose.msra.mxu0 0.0
        %1468 = vmatprep.subr.mxu0 0.0
        %1469 = vmatpush1.xpose.msra.mxu0 0.0
        %1470 = vmatprep.subr.mxu0 0.0
        %1471 = vmatpush1.xpose.msra.mxu0 0.0
        %1472 = vmatprep.subr.mxu0 0.0
        %1473 = vmatpush1.xpose.msra.mxu0 0.0
        %1474 = vmatprep.subr.mxu0 0.0
        %1475 = vmatpush1.xpose.msra.mxu0 0.0
        %1476 = vmatprep.subr.mxu0 0.0
        %1477 = vmatpush1.xpose.msra.mxu0 0.0
        %1478 = vmatprep.subr.mxu0 0.0
        %1479 = vmatpush1.xpose.msra.mxu0 0.0
        %1480 = vmatprep.subr.mxu0 0.0
        %1481 = vmatpush1.xpose.msra.mxu0 0.0
        %1482 = vmatprep.subr.mxu0 0.0
        %1483 = vmatpush1.xpose.msra.mxu0 0.0
        %1484 = vmatprep.subr.mxu0 0.0
        %1485 = vmatpush1.xpose.msra.mxu0 0.0
        %1486 = vmatprep.subr.mxu0 0.0
        %1487 = vmatpush1.xpose.msra.mxu0 0.0
        %1488 = vmatprep.subr.mxu0 0.0
        %1489 = vmatpush1.xpose.msra.mxu0 0.0
        %1490 = vmatprep.subr.mxu0 0.0
        %1491 = vmatpush1.xpose.msra.mxu0 0.0
        %1492 = vmatprep.subr.mxu0 0.0
        %1493 = vmatpush1.xpose.msra.mxu0 0.0
        %1494 = vmatprep.subr.mxu0 0.0
        %1495 = vmatpush1.xpose.msra.mxu0 0.0
        %1496 = vmatprep.subr.mxu0 0.0
        %1497 = vmatpush1.xpose.msra.mxu0 0.0
        %1498 = vmatprep.subr.mxu0 0.0
        %1499 = vmatpush1.xpose.msra.mxu0 0.0
        %1500 = vmatprep.subr.mxu0 0.0
        %1501 = vmatpush1.xpose.msra.mxu0 0.0
        %1502 = vmatprep.subr.mxu0 0.0
        %1503 = vmatpush1.xpose.msra.mxu0 0.0
        %1504 = vmatprep.subr.mxu0 0.0
        %1505 = vmatpush1.xpose.msra.mxu0 0.0
        %1506 = vmatprep.subr.mxu0 0.0
        %1507 = vmatpush1.xpose.msra.mxu0 0.0
        %1508 = vmatprep.subr.mxu0 0.0
        %1509 = vmatpush1.xpose.msra.mxu0 0.0
        %1510 = vmatprep.subr.mxu0 0.0
        %1511 = vmatpush1.xpose.msra.mxu0 0.0
        %1512 = vmatprep.subr.mxu0 0.0
        %1513 = vmatpush1.xpose.msra.mxu0 0.0
        %1514 = vmatprep.subr.mxu0 0.0
        %1515 = vmatpush1.xpose.msra.mxu0 0.0
        %1516 = vmatprep.subr.mxu0 0.0
        %1517 = vmatpush1.xpose.msra.mxu0 0.0
        %1518 = vmatprep.subr.mxu0 0.0
        %1519 = vmatpush1.xpose.msra.mxu0 0.0
        %1520 = vmatprep.mubr.f32.mxu0 0.0
        %1521 = vmatmul.mubr.f32.gmra.mrb[0].mxu0 %v1452
        %v1522 = vpop.f32.mrb[0].mxu0
        %v1523 = vadd.f32 %v775, %v1522
        %v1524 = vpop.f32.mrb[0].mxu0
        %1525 = vdwg.mxu0
        %v1526 = vadd.f32 %v1523, %v1028
        %v1527 = vsel %vm947, %v1526, -inf
        %1528 = vmax.xlane.f32.xlu0 %v1527
        %v1529 = vpop.xlane.xlu0 %1528
        %v1530 = vsub.f32 %v1526, %v1529
        %v1531 = vmul.f32 %v1530, 1.442695
        %v1532 = vpow.pop %v1531
        %v1533 = vsel %vm947, %v1532, 0.0
        %1534 = vadd.xlane.f32.xlu0 %v1533
        %v1535 = vpop.xlane.xlu0 %1534
        %v1536 = vrcp.pop %v1535
        %v1537 = vmul.f32 %v1532, %v1536
        %1538 = vrot.lane.b32.xlu0 %v942, 104
        %v1539 = vpop.permute.xlu0 %1538
        %v1542 = vsel %vm947, %v1537, 0
        %1544 = vmatprep.subr.mxu0 0.0
        %1545 = vmatpush1.msra.mxu0 %v1539
        %1546 = vmatprep.subr.mxu0 0.0
        %1547 = vmatpush1.msra.mxu0 0.0
        %1548 = vmatprep.subr.mxu0 0.0
        %1549 = vmatpush1.msra.mxu0 0.0
        %1550 = vmatprep.subr.mxu0 0.0
        %1551 = vmatpush1.msra.mxu0 0.0
        %1552 = vmatprep.subr.mxu0 0.0
        %1553 = vmatpush1.msra.mxu0 0.0
        %1554 = vmatprep.subr.mxu0 0.0
        %1555 = vmatpush1.msra.mxu0 0.0
        %1556 = vmatprep.subr.mxu0 0.0
        %1557 = vmatpush1.msra.mxu0 0.0
        %1558 = vmatprep.subr.mxu0 0.0
        %1559 = vmatpush1.msra.mxu0 0.0
        %1560 = vmatprep.subr.mxu0 0.0
        %1561 = vmatpush1.msra.mxu0 0.0
        %1562 = vmatprep.subr.mxu0 0.0
        %1563 = vmatpush1.msra.mxu0 0.0
        %1564 = vmatprep.subr.mxu0 0.0
        %1565 = vmatpush1.msra.mxu0 0.0
        %1566 = vmatprep.subr.mxu0 0.0
        %1567 = vmatpush1.msra.mxu0 0.0
        %1568 = vmatprep.subr.mxu0 0.0
        %1569 = vmatpush1.msra.mxu0 0.0
        %1570 = vmatprep.subr.mxu0 0.0
        %1571 = vmatpush1.msra.mxu0 0.0
        %1572 = vmatprep.subr.mxu0 0.0
        %1573 = vmatpush1.msra.mxu0 0.0
        %1574 = vmatprep.subr.mxu0 0.0
        %1575 = vmatpush1.msra.mxu0 0.0
        %1576 = vmatprep.subr.mxu0 0.0
        %1577 = vmatpush1.msra.mxu0 0.0
        %1578 = vmatprep.subr.mxu0 0.0
        %1579 = vmatpush1.msra.mxu0 0.0
        %1580 = vmatprep.subr.mxu0 0.0
        %1581 = vmatpush1.msra.mxu0 0.0
        %1582 = vmatprep.subr.mxu0 0.0
        %1583 = vmatpush1.msra.mxu0 0.0
        %1584 = vmatprep.subr.mxu0 0.0
        %1585 = vmatpush1.msra.mxu0 0.0
        %1586 = vmatprep.subr.mxu0 0.0
        %1587 = vmatpush1.msra.mxu0 0.0
        %1588 = vmatprep.subr.mxu0 0.0
        %1589 = vmatpush1.msra.mxu0 0.0
        %1590 = vmatprep.subr.mxu0 0.0
        %1591 = vmatpush1.msra.mxu0 0.0
        %1592 = vmatprep.subr.mxu0 0.0
        %1593 = vmatpush1.msra.mxu0 0.0
        %1594 = vmatprep.subr.mxu0 0.0
        %1595 = vmatpush1.msra.mxu0 0.0
        %1596 = vmatprep.subr.mxu0 0.0
        %1597 = vmatpush1.msra.mxu0 0.0
        %1598 = vmatprep.subr.mxu0 0.0
        %1599 = vmatpush1.msra.mxu0 0.0
        %1600 = vmatprep.subr.mxu0 0.0
        %1601 = vmatpush1.msra.mxu0 0.0
        %1602 = vmatprep.subr.mxu0 0.0
        %1603 = vmatpush1.msra.mxu0 0.0
        %1604 = vmatprep.subr.mxu0 0.0
        %1605 = vmatpush1.msra.mxu0 0.0
        %1606 = vmatprep.subr.mxu0 0.0
        %1607 = vmatpush1.msra.mxu0 0.0
        %1608 = vmatprep.mubr.f32.mxu0 0.0
        %1609 = vmatmul.mubr.f32.gmra.mrb[0].mxu0 %v1542
        %v1610 = vpop.f32.mrb[0].mxu0
        %v1611 = vadd.f32 0.0, %v1610
        %v1612 = vpop.f32.mrb[0].mxu0
        %1613 = vdwg.mxu0
        %1615 = vrot.lane.b32.xlu0 %v1279, 8
        %v1616 = vpop.permute.xlu0 %1615
        %1619 = vrot.lane.b32.xlu0 %v1445, 16
        %v1620 = vpop.permute.xlu0 %1619
        %1623 = vrot.lane.b32.xlu0 %v1611, 24
        %v1624 = vpop.permute.xlu0 %1623
        %v1626 = vsel %vm947, %v1112, %v1616
        %vm1627 = vcmask 130048
        %v1628 = vsel %vm1627, %v1626, %v1620
        %vm1629 = vcmask 195584
        %v1630 = vsel %vm1629, %v1628, %v1624
        %v1631 = vpack.c.bf16 %v1630, %v1630
        %v1632 = vld [vmem:[#allocation8] sm:$0xf]
        %v1633 = vld [vmem:[#allocation8 + $0x4] sm:$0xf]
        %v1634 = vld [vmem:[#allocation8 + $0x8] sm:$0xf]
        %v1635 = vld [vmem:[#allocation8 + $0xc] sm:$0xf]
        %v1636 = vld [vmem:[#allocation10] sm:$0x1]
        %v1638 = vlaneseq
        %v1639 = vshrl.u32 %v1638, 7
        %v1640 = vsub.s32 0, %v1639
        %v1641 = vrot.slane %v1636, %v1640
        %v1647 = vunpack.c.l.b16 %v1632
        %v1648 = vunpack.c.l.b16 %v1633
        %v1649 = vunpack.c.l.b16 %v1634
        %v1650 = vunpack.c.l.b16 %v1635
        %v1651 = vpack.c.b16 %v1648, %v1647
        %v1652 = vpack.c.b16 %v1650, %v1649
        %v1656 = vsel %vm804, %v1631, 0
        %1658 = vmatprep.subr.bf16.mxu0 0
        %1659 = vmatpush1.bf16.msra.mxu0 %v1651
        %1660 = vmatprep.subr.bf16.mxu0 0
        %1661 = vmatpush1.bf16.msra.mxu0 %v1652
        %1662 = vmatprep.subr.bf16.mxu0 0
        %1663 = vmatpush1.bf16.msra.mxu0 0
        %1664 = vmatprep.subr.bf16.mxu0 0
        %1665 = vmatpush1.bf16.msra.mxu0 0
        %1666 = vmatprep.subr.bf16.mxu0 0
        %1667 = vmatpush1.bf16.msra.mxu0 0
        %1668 = vmatprep.subr.bf16.mxu0 0
        %1669 = vmatpush1.bf16.msra.mxu0 0
        %1670 = vmatprep.subr.bf16.mxu0 0
        %1671 = vmatpush1.bf16.msra.mxu0 0
        %1672 = vmatprep.subr.bf16.mxu0 0
        %1673 = vmatpush1.bf16.msra.mxu0 0
        %1674 = vmatprep.subr.bf16.mxu0 0
        %1675 = vmatpush1.bf16.msra.mxu0 0
        %1676 = vmatprep.subr.bf16.mxu0 0
        %1677 = vmatpush1.bf16.msra.mxu0 0
        %1678 = vmatprep.subr.bf16.mxu0 0
        %1679 = vmatpush1.bf16.msra.mxu0 0
        %1680 = vmatprep.subr.bf16.mxu0 0
        %1681 = vmatpush1.bf16.msra.mxu0 0
        %1682 = vmatprep.subr.bf16.mxu0 0
        %1683 = vmatpush1.bf16.msra.mxu0 0
        %1684 = vmatprep.subr.bf16.mxu0 0
        %1685 = vmatpush1.bf16.msra.mxu0 0
        %1686 = vmatprep.subr.bf16.mxu0 0
        %1687 = vmatpush1.bf16.msra.mxu0 0
        %1688 = vmatprep.subr.bf16.mxu0 0
        %1689 = vmatpush1.bf16.msra.mxu0 0
        %1690 = vmatprep.mubr.bf16.mxu0 0
        %1691 = vmatmul.mubr.bf16.gmra.mrb[0].mxu0 %v1656
        %v1692 = vpop.f32.mrb[0].mxu0
        %v1693 = vadd.f32 %v1641, %v1692
        %v1694 = vpop.f32.mrb[0].mxu0
        %v1695 = vpop.f32.mrb[0].mxu0
        %v1696 = vpop.f32.mrb[0].mxu0
        %1697 = vdwg.mxu0
        %v1698 = vadd.f32 %v773, %v1693
        %v1699 = vld [vmem:[#allocation16] sm:$0x1]
        %v1700 = vld [vmem:[%s14] sm:$0x1]
        %v1701 = vsel %vm804, %v1698, 0.0
        %1702 = vadd.xlane.f32.xlu0 %v1701
        %v1703 = vpop.xlane.xlu0 %1702
        %v1704 = vrcp.pop 32.0
        %v1705 = vmul.f32 %v1703, %v1704
        %v1706 = vsub.f32 %v1698, %v1705
        %v1707 = vmul.f32 %v1706, %v1706
        %v1708 = vsel %vm804, %v1707, 0.0
        %1709 = vadd.xlane.f32.xlu0 %v1708
        %v1710 = vpop.xlane.xlu0 %1709
        %v1711 = vmul.f32 %v1710, %v1704
        %v1712 = vadd.f32 %v1711, 1e-05
        %v1713 = vrsqrt.pop %v1712
        %v1714 = vmul.f32 %v1706, %v1713
        %v1715 = vlaneseq
        %v1716 = vshrl.u32 %v1715, 7
        %v1717 = vsub.s32 0, %v1716
        %v1718 = vrot.slane %v1699, %v1717
        %v1719 = vmul.f32 %v1714, %v1718
        %v1720 = vlaneseq
        %v1721 = vshrl.u32 %v1720, 7
        %v1722 = vsub.s32 0, %v1721
        %v1723 = vrot.slane %v1700, %v1722
        %v1724 = vadd.f32 %v1719, %v1723
        %v1725 = vpack.c.bf16 %v1724, %v1724
        %v1726 = vpack.c.bf16 %v774, %v774
        %v1727 = vld [vmem:[%s9] sm:$0xf]
        %v1728 = vld [vmem:[%s9 + $0x4] sm:$0xf]
        %v1729 = vld [vmem:[%s9 + $0x8] sm:$0xf]
        %v1730 = vld [vmem:[%s9 + $0xc] sm:$0xf]
        %v1731 = vld [vmem:[#allocation11] sm:$0x1]
        %v1733 = vlaneseq
        %v1734 = vshrl.u32 %v1733, 7
        %v1735 = vsub.s32 0, %v1734
        %v1736 = vrot.slane %v1731, %v1735
        %v1742 = vunpack.c.l.b16 %v1727
        %v1743 = vunpack.c.l.b16 %v1728
        %v1744 = vunpack.c.l.b16 %v1729
        %v1745 = vunpack.c.l.b16 %v1730
        %v1746 = vpack.c.b16 %v1743, %v1742
        %v1747 = vpack.c.b16 %v1745, %v1744
        %v1751 = vsel %vm804, %v1725, 0
        %1753 = vmatprep.subr.bf16.mxu0 0
        %1754 = vmatpush1.bf16.msra.mxu0 %v1746
        %1755 = vmatprep.subr.bf16.mxu0 0
        %1756 = vmatpush1.bf16.msra.mxu0 %v1747
        %1757 = vmatprep.subr.bf16.mxu0 0
        %1758 = vmatpush1.bf16.msra.mxu0 0
        %1759 = vmatprep.subr.bf16.mxu0 0
        %1760 = vmatpush1.bf16.msra.mxu0 0
        %1761 = vmatprep.subr.bf16.mxu0 0
        %1762 = vmatpush1.bf16.msra.mxu0 0
        %1763 = vmatprep.subr.bf16.mxu0 0
        %1764 = vmatpush1.bf16.msra.mxu0 0
        %1765 = vmatprep.subr.bf16.mxu0 0
        %1766 = vmatpush1.bf16.msra.mxu0 0
        %1767 = vmatprep.subr.bf16.mxu0 0
        %1768 = vmatpush1.bf16.msra.mxu0 0
        %1769 = vmatprep.subr.bf16.mxu0 0
        %1770 = vmatpush1.bf16.msra.mxu0 0
        %1771 = vmatprep.subr.bf16.mxu0 0
        %1772 = vmatpush1.bf16.msra.mxu0 0
        %1773 = vmatprep.subr.bf16.mxu0 0
        %1774 = vmatpush1.bf16.msra.mxu0 0
        %1775 = vmatprep.subr.bf16.mxu0 0
        %1776 = vmatpush1.bf16.msra.mxu0 0
        %1777 = vmatprep.subr.bf16.mxu0 0
        %1778 = vmatpush1.bf16.msra.mxu0 0
        %1779 = vmatprep.subr.bf16.mxu0 0
        %1780 = vmatpush1.bf16.msra.mxu0 0
        %1781 = vmatprep.subr.bf16.mxu0 0
        %1782 = vmatpush1.bf16.msra.mxu0 0
        %1783 = vmatprep.subr.bf16.mxu0 0
        %1784 = vmatpush1.bf16.msra.mxu0 0
        %1785 = vmatprep.mubr.bf16.mxu0 0
        %1786 = vmatmul.mubr.bf16.gmra.mrb[0].mxu0 %v1751
        %v1787 = vpop.f32.mrb[0].mxu0
        %v1788 = vadd.f32 %v1736, %v1787
        %v1789 = vpop.f32.mrb[0].mxu0
        %v1790 = vpop.f32.mrb[0].mxu0
        %v1791 = vpop.f32.mrb[0].mxu0
        %1792 = vdwg.mxu0
        %v1793 = vmul.f32 %v1788, 0.35355338
        %1794 = vrot.lane.b32.xlu0 %v1746, 96
        %v1795 = vpop.permute.xlu0 %1794
        %1796 = vrot.lane.b32.xlu0 %v1747, 96
        %v1797 = vpop.permute.xlu0 %1796
        %1800 = vrot.lane.b32.xlu0 %v1736, 96
        %v1801 = vpop.permute.xlu0 %1800
        %v1804 = vsel %vm804, %v1726, 0
        %1806 = vmatprep.subr.bf16.mxu0 0
        %1807 = vmatpush1.bf16.msra.mxu0 %v1795
        %1808 = vmatprep.subr.bf16.mxu0 0
        %1809 = vmatpush1.bf16.msra.mxu0 %v1797
        %1810 = vmatprep.subr.bf16.mxu0 0
        %1811 = vmatpush1.bf16.msra.mxu0 0
        %1812 = vmatprep.subr.bf16.mxu0 0
        %1813 = vmatpush1.bf16.msra.mxu0 0
        %1814 = vmatprep.subr.bf16.mxu0 0
        %1815 = vmatpush1.bf16.msra.mxu0 0
        %1816 = vmatprep.subr.bf16.mxu0 0
        %1817 = vmatpush1.bf16.msra.mxu0 0
        %1818 = vmatprep.subr.bf16.mxu0 0
        %1819 = vmatpush1.bf16.msra.mxu0 0
        %1820 = vmatprep.subr.bf16.mxu0 0
        %1821 = vmatpush1.bf16.msra.mxu0 0
        %1822 = vmatprep.subr.bf16.mxu0 0
        %1823 = vmatpush1.bf16.msra.mxu0 0
        %1824 = vmatprep.subr.bf16.mxu0 0
        %1825 = vmatpush1.bf16.msra.mxu0 0
        %1826 = vmatprep.subr.bf16.mxu0 0
        %1827 = vmatpush1.bf16.msra.mxu0 0
        %1828 = vmatprep.subr.bf16.mxu0 0
        %1829 = vmatpush1.bf16.msra.mxu0 0
        %1830 = vmatprep.subr.bf16.mxu0 0
        %1831 = vmatpush1.bf16.msra.mxu0 0
        %1832 = vmatprep.subr.bf16.mxu0 0
        %1833 = vmatpush1.bf16.msra.mxu0 0
        %1834 = vmatprep.subr.bf16.mxu0 0
        %1835 = vmatpush1.bf16.msra.mxu0 0
        %1836 = vmatprep.subr.bf16.mxu0 0
        %1837 = vmatpush1.bf16.msra.mxu0 0
        %1838 = vmatprep.mubr.bf16.mxu0 0
        %1839 = vmatmul.mubr.bf16.gmra.mrb[0].mxu0 %v1804
        %v1840 = vpop.f32.mrb[0].mxu0
        %v1841 = vadd.f32 %v1801, %v1840
        %v1842 = vpop.f32.mrb[0].mxu0
        %v1843 = vpop.f32.mrb[0].mxu0
        %v1844 = vpop.f32.mrb[0].mxu0
        %1845 = vdwg.mxu0
        %1846 = vrot.lane.b32.xlu0 %v1746, 64
        %v1847 = vpop.permute.xlu0 %1846
        %1848 = vrot.lane.b32.xlu0 %v1747, 64
        %v1849 = vpop.permute.xlu0 %1848
        %1852 = vrot.lane.b32.xlu0 %v1736, 64
        %v1853 = vpop.permute.xlu0 %1852
        %1855 = vmatprep.subr.bf16.mxu0 0
        %1856 = vmatpush1.bf16.msra.mxu0 %v1847
        %1857 = vmatprep.subr.bf16.mxu0 0
        %1858 = vmatpush1.bf16.msra.mxu0 %v1849
        %1859 = vmatprep.subr.bf16.mxu0 0
        %1860 = vmatpush1.bf16.msra.mxu0 0
        %1861 = vmatprep.subr.bf16.mxu0 0
        %1862 = vmatpush1.bf16.msra.mxu0 0
        %1863 = vmatprep.subr.bf16.mxu0 0
        %1864 = vmatpush1.bf16.msra.mxu0 0
        %1865 = vmatprep.subr.bf16.mxu0 0
        %1866 = vmatpush1.bf16.msra.mxu0 0
        %1867 = vmatprep.subr.bf16.mxu0 0
        %1868 = vmatpush1.bf16.msra.mxu0 0
        %1869 = vmatprep.subr.bf16.mxu0 0
        %1870 = vmatpush1.bf16.msra.mxu0 0
        %1871 = vmatprep.subr.bf16.mxu0 0
        %1872 = vmatpush1.bf16.msra.mxu0 0
        %1873 = vmatprep.subr.bf16.mxu0 0
        %1874 = vmatpush1.bf16.msra.mxu0 0
        %1875 = vmatprep.subr.bf16.mxu0 0
        %1876 = vmatpush1.bf16.msra.mxu0 0
        %1877 = vmatprep.subr.bf16.mxu0 0
        %1878 = vmatpush1.bf16.msra.mxu0 0
        %1879 = vmatprep.subr.bf16.mxu0 0
        %1880 = vmatpush1.bf16.msra.mxu0 0
        %1881 = vmatprep.subr.bf16.mxu0 0
        %1882 = vmatpush1.bf16.msra.mxu0 0
        %1883 = vmatprep.subr.bf16.mxu0 0
        %1884 = vmatpush1.bf16.msra.mxu0 0
        %1885 = vmatprep.subr.bf16.mxu0 0
        %1886 = vmatpush1.bf16.msra.mxu0 0
        %1887 = vmatprep.mubr.bf16.mxu0 0
        %1888 = vmatmul.mubr.bf16.gmra.mrb[0].mxu0 %v1804
        %v1889 = vpop.f32.mrb[0].mxu0
        %v1890 = vadd.f32 %v1853, %v1889
        %v1891 = vpop.f32.mrb[0].mxu0
        %v1892 = vpop.f32.mrb[0].mxu0
        %v1893 = vpop.f32.mrb[0].mxu0
        %1894 = vdwg.mxu0
        %v1896 = vsel %vm947, %v1793, 0
        %v1899 = vsel %vm947, %v1841, 0
        %1901 = vmatprep.subr.mxu0 0.0
        %1902 = vmatpush1.xpose.msra.mxu0 %v1899
        %1903 = vmatprep.subr.mxu0 0.0
        %1904 = vmatpush1.xpose.msra.mxu0 0.0
        %1905 = vmatprep.subr.mxu0 0.0
        %1906 = vmatpush1.xpose.msra.mxu0 0.0
        %1907 = vmatprep.subr.mxu0 0.0
        %1908 = vmatpush1.xpose.msra.mxu0 0.0
        %1909 = vmatprep.subr.mxu0 0.0
        %1910 = vmatpush1.xpose.msra.mxu0 0.0
        %1911 = vmatprep.subr.mxu0 0.0
        %1912 = vmatpush1.xpose.msra.mxu0 0.0
        %1913 = vmatprep.subr.mxu0 0.0
        %1914 = vmatpush1.xpose.msra.mxu0 0.0
        %1915 = vmatprep.subr.mxu0 0.0
        %1916 = vmatpush1.xpose.msra.mxu0 0.0
        %1917 = vmatprep.subr.mxu0 0.0
        %1918 = vmatpush1.xpose.msra.mxu0 0.0
        %1919 = vmatprep.subr.mxu0 0.0
        %1920 = vmatpush1.xpose.msra.mxu0 0.0
        %1921 = vmatprep.subr.mxu0 0.0
        %1922 = vmatpush1.xpose.msra.mxu0 0.0
        %1923 = vmatprep.subr.mxu0 0.0
        %1924 = vmatpush1.xpose.msra.mxu0 0.0
        %1925 = vmatprep.subr.mxu0 0.0
        %1926 = vmatpush1.xpose.msra.mxu0 0.0
        %1927 = vmatprep.subr.mxu0 0.0
        %1928 = vmatpush1.xpose.msra.mxu0 0.0
        %1929 = vmatprep.subr.mxu0 0.0
        %1930 = vmatpush1.xpose.msra.mxu0 0.0
        %1931 = vmatprep.subr.mxu0 0.0
        %1932 = vmatpush1.xpose.msra.mxu0 0.0
        %1933 = vmatprep.subr.mxu0 0.0
        %1934 = vmatpush1.xpose.msra.mxu0 0.0
        %1935 = vmatprep.subr.mxu0 0.0
        %1936 = vmatpush1.xpose.msra.mxu0 0.0
        %1937 = vmatprep.subr.mxu0 0.0
        %1938 = vmatpush1.xpose.msra.mxu0 0.0
        %1939 = vmatprep.subr.mxu0 0.0
        %1940 = vmatpush1.xpose.msra.mxu0 0.0
        %1941 = vmatprep.subr.mxu0 0.0
        %1942 = vmatpush1.xpose.msra.mxu0 0.0
        %1943 = vmatprep.subr.mxu0 0.0
        %1944 = vmatpush1.xpose.msra.mxu0 0.0
        %1945 = vmatprep.subr.mxu0 0.0
        %1946 = vmatpush1.xpose.msra.mxu0 0.0
        %1947 = vmatprep.subr.mxu0 0.0
        %1948 = vmatpush1.xpose.msra.mxu0 0.0
        %1949 = vmatprep.subr.mxu0 0.0
        %1950 = vmatpush1.xpose.msra.mxu0 0.0
        %1951 = vmatprep.subr.mxu0 0.0
        %1952 = vmatpush1.xpose.msra.mxu0 0.0
        %1953 = vmatprep.subr.mxu0 0.0
        %1954 = vmatpush1.xpose.msra.mxu0 0.0
        %1955 = vmatprep.subr.mxu0 0.0
        %1956 = vmatpush1.xpose.msra.mxu0 0.0
        %1957 = vmatprep.subr.mxu0 0.0
        %1958 = vmatpush1.xpose.msra.mxu0 0.0
        %1959 = vmatprep.subr.mxu0 0.0
        %1960 = vmatpush1.xpose.msra.mxu0 0.0
        %1961 = vmatprep.subr.mxu0 0.0
        %1962 = vmatpush1.xpose.msra.mxu0 0.0
        %1963 = vmatprep.subr.mxu0 0.0
        %1964 = vmatpush1.xpose.msra.mxu0 0.0
        %1965 = vmatprep.mubr.f32.mxu0 0.0
        %1966 = vmatmul.mubr.f32.gmra.mrb[0].mxu0 %v1896
        %v1967 = vpop.f32.mrb[0].mxu0
        %v1968 = vadd.f32 %v775, %v1967
        %v1969 = vpop.f32.mrb[0].mxu0
        %1970 = vdwg.mxu0
        %v1972 = vlaneseq
        %v1973 = vshrl.u32 %v1972, 7
        %v1974 = vsub.s32 0, %v1973
        %v1975 = vrot.slane %v779, %v1974
        %v1977 = vadd.f32 %v1968, %v1975
        %v1978 = vsel %vm947, %v1977, -inf
        %1979 = vmax.xlane.f32.xlu0 %v1978
        %v1980 = vpop.xlane.xlu0 %1979
        %v1981 = vsub.f32 %v1977, %v1980
        %v1982 = vmul.f32 %v1981, 1.442695
        %v1983 = vpow.pop %v1982
        %v1984 = vsel %vm947, %v1983, 0.0
        %1985 = vadd.xlane.f32.xlu0 %v1984
        %v1986 = vpop.xlane.xlu0 %1985
        %v1987 = vrcp.pop %v1986
        %v1988 = vmul.f32 %v1983, %v1987
        %v1990 = vsel %vm947, %v1988, 0
        %1992 = vmatprep.subr.mxu0 0.0
        %1993 = vmatpush1.msra.mxu0 %v1890
        %1994 = vmatprep.subr.mxu0 0.0
        %1995 = vmatpush1.msra.mxu0 0.0
        %1996 = vmatprep.subr.mxu0 0.0
        %1997 = vmatpush1.msra.mxu0 0.0
        %1998 = vmatprep.subr.mxu0 0.0
        %1999 = vmatpush1.msra.mxu0 0.0
        %2000 = vmatprep.subr.mxu0 0.0
        %2001 = vmatpush1.msra.mxu0 0.0
        %2002 = vmatprep.subr.mxu0 0.0
        %2003 = vmatpush1.msra.mxu0 0.0
        %2004 = vmatprep.subr.mxu0 0.0
        %2005 = vmatpush1.msra.mxu0 0.0
        %2006 = vmatprep.subr.mxu0 0.0
        %2007 = vmatpush1.msra.mxu0 0.0
        %2008 = vmatprep.subr.mxu0 0.0
        %2009 = vmatpush1.msra.mxu0 0.0
        %2010 = vmatprep.subr.mxu0 0.0
        %2011 = vmatpush1.msra.mxu0 0.0
        %2012 = vmatprep.subr.mxu0 0.0
        %2013 = vmatpush1.msra.mxu0 0.0
        %2014 = vmatprep.subr.mxu0 0.0
        %2015 = vmatpush1.msra.mxu0 0.0
        %2016 = vmatprep.subr.mxu0 0.0
        %2017 = vmatpush1.msra.mxu0 0.0
        %2018 = vmatprep.subr.mxu0 0.0
        %2019 = vmatpush1.msra.mxu0 0.0
        %2020 = vmatprep.subr.mxu0 0.0
        %2021 = vmatpush1.msra.mxu0 0.0
        %2022 = vmatprep.subr.mxu0 0.0
        %2023 = vmatpush1.msra.mxu0 0.0
        %2024 = vmatprep.subr.mxu0 0.0
        %2025 = vmatpush1.msra.mxu0 0.0
        %2026 = vmatprep.subr.mxu0 0.0
        %2027 = vmatpush1.msra.mxu0 0.0
        %2028 = vmatprep.subr.mxu0 0.0
        %2029 = vmatpush1.msra.mxu0 0.0
        %2030 = vmatprep.subr.mxu0 0.0
        %2031 = vmatpush1.msra.mxu0 0.0
        %2032 = vmatprep.subr.mxu0 0.0
        %2033 = vmatpush1.msra.mxu0 0.0
        %2034 = vmatprep.subr.mxu0 0.0
        %2035 = vmatpush1.msra.mxu0 0.0
        %2036 = vmatprep.subr.mxu0 0.0
        %2037 = vmatpush1.msra.mxu0 0.0
        %2038 = vmatprep.subr.mxu0 0.0
        %2039 = vmatpush1.msra.mxu0 0.0
        %2040 = vmatprep.subr.mxu0 0.0
        %2041 = vmatpush1.msra.mxu0 0.0
        %2042 = vmatprep.subr.mxu0 0.0
        %2043 = vmatpush1.msra.mxu0 0.0
        %2044 = vmatprep.subr.mxu0 0.0
        %2045 = vmatpush1.msra.mxu0 0.0
        %2046 = vmatprep.subr.mxu0 0.0
        %2047 = vmatpush1.msra.mxu0 0.0
        %2048 = vmatprep.subr.mxu0 0.0
        %2049 = vmatpush1.msra.mxu0 0.0
        %2050 = vmatprep.subr.mxu0 0.0
        %2051 = vmatpush1.msra.mxu0 0.0
        %2052 = vmatprep.subr.mxu0 0.0
        %2053 = vmatpush1.msra.mxu0 0.0
        %2054 = vmatprep.subr.mxu0 0.0
        %2055 = vmatpush1.msra.mxu0 0.0
        %2056 = vmatprep.mubr.f32.mxu0 0.0
        %2057 = vmatmul.mubr.f32.gmra.mrb[0].mxu0 %v1990
        %v2058 = vpop.f32.mrb[0].mxu0
        %v2059 = vadd.f32 0.0, %v2058
        %v2060 = vpop.f32.mrb[0].mxu0
        %2061 = vdwg.mxu0
        %2062 = vrot.lane.b32.xlu0 %v1793, 120
        %v2063 = vpop.permute.xlu0 %2062
        %2064 = vrot.lane.b32.xlu0 %v1841, 120
        %v2065 = vpop.permute.xlu0 %2064
        %v2066 = vsel %vm947, %v2063, 0
        %v2068 = vsel %vm947, %v2065, 0
        %2070 = vmatprep.subr.mxu0 0.0
        %2071 = vmatpush1.xpose.msra.mxu0 %v2068
        %2072 = vmatprep.subr.mxu0 0.0
        %2073 = vmatpush1.xpose.msra.mxu0 0.0
        %2074 = vmatprep.subr.mxu0 0.0
        %2075 = vmatpush1.xpose.msra.mxu0 0.0
        %2076 = vmatprep.subr.mxu0 0.0
        %2077 = vmatpush1.xpose.msra.mxu0 0.0
        %2078 = vmatprep.subr.mxu0 0.0
        %2079 = vmatpush1.xpose.msra.mxu0 0.0
        %2080 = vmatprep.subr.mxu0 0.0
        %2081 = vmatpush1.xpose.msra.mxu0 0.0
        %2082 = vmatprep.subr.mxu0 0.0
        %2083 = vmatpush1.xpose.msra.mxu0 0.0
        %2084 = vmatprep.subr.mxu0 0.0
        %2085 = vmatpush1.xpose.msra.mxu0 0.0
        %2086 = vmatprep.subr.mxu0 0.0
        %2087 = vmatpush1.xpose.msra.mxu0 0.0
        %2088 = vmatprep.subr.mxu0 0.0
        %2089 = vmatpush1.xpose.msra.mxu0 0.0
        %2090 = vmatprep.subr.mxu0 0.0
        %2091 = vmatpush1.xpose.msra.mxu0 0.0
        %2092 = vmatprep.subr.mxu0 0.0
        %2093 = vmatpush1.xpose.msra.mxu0 0.0
        %2094 = vmatprep.subr.mxu0 0.0
        %2095 = vmatpush1.xpose.msra.mxu0 0.0
        %2096 = vmatprep.subr.mxu0 0.0
        %2097 = vmatpush1.xpose.msra.mxu0 0.0
        %2098 = vmatprep.subr.mxu0 0.0
        %2099 = vmatpush1.xpose.msra.mxu0 0.0
        %2100 = vmatprep.subr.mxu0 0.0
        %2101 = vmatpush1.xpose.msra.mxu0 0.0
        %2102 = vmatprep.subr.mxu0 0.0
        %2103 = vmatpush1.xpose.msra.mxu0 0.0
        %2104 = vmatprep.subr.mxu0 0.0
        %2105 = vmatpush1.xpose.msra.mxu0 0.0
        %2106 = vmatprep.subr.mxu0 0.0
        %2107 = vmatpush1.xpose.msra.mxu0 0.0
        %2108 = vmatprep.subr.mxu0 0.0
        %2109 = vmatpush1.xpose.msra.mxu0 0.0
        %2110 = vmatprep.subr.mxu0 0.0
        %2111 = vmatpush1.xpose.msra.mxu0 0.0
        %2112 = vmatprep.subr.mxu0 0.0
        %2113 = vmatpush1.xpose.msra.mxu0 0.0
        %2114 = vmatprep.subr.mxu0 0.0
        %2115 = vmatpush1.xpose.msra.mxu0 0.0
        %2116 = vmatprep.subr.mxu0 0.0
        %2117 = vmatpush1.xpose.msra.mxu0 0.0
        %2118 = vmatprep.subr.mxu0 0.0
        %2119 = vmatpush1.xpose.msra.mxu0 0.0
        %2120 = vmatprep.subr.mxu0 0.0
        %2121 = vmatpush1.xpose.msra.mxu0 0.0
        %2122 = vmatprep.subr.mxu0 0.0
        %2123 = vmatpush1.xpose.msra.mxu0 0.0
        %2124 = vmatprep.subr.mxu0 0.0
        %2125 = vmatpush1.xpose.msra.mxu0 0.0
        %2126 = vmatprep.subr.mxu0 0.0
        %2127 = vmatpush1.xpose.msra.mxu0 0.0
        %2128 = vmatprep.subr.mxu0 0.0
        %2129 = vmatpush1.xpose.msra.mxu0 0.0
        %2130 = vmatprep.subr.mxu0 0.0
        %2131 = vmatpush1.xpose.msra.mxu0 0.0
        %2132 = vmatprep.subr.mxu0 0.0
        %2133 = vmatpush1.xpose.msra.mxu0 0.0
        %2134 = vmatprep.mubr.f32.mxu0 0.0
        %2135 = vmatmul.mubr.f32.gmra.mrb[0].mxu0 %v2066
        %v2136 = vpop.f32.mrb[0].mxu0
        %v2137 = vadd.f32 %v775, %v2136
        %v2138 = vpop.f32.mrb[0].mxu0
        %2139 = vdwg.mxu0
        %v2140 = vadd.f32 %v2137, %v1975
        %v2141 = vsel %vm947, %v2140, -inf
        %2142 = vmax.xlane.f32.xlu0 %v2141
        %v2143 = vpop.xlane.xlu0 %2142
        %v2144 = vsub.f32 %v2140, %v2143
        %v2145 = vmul.f32 %v2144, 1.442695
        %v2146 = vpow.pop %v2145
        %v2147 = vsel %vm947, %v2146, 0.0
        %2148 = vadd.xlane.f32.xlu0 %v2147
        %v2149 = vpop.xlane.xlu0 %2148
        %v2150 = vrcp.pop %v2149
        %v2151 = vmul.f32 %v2146, %v2150
        %2153 = vrot.lane.b32.xlu0 %v1890, 120
        %v2154 = vpop.permute.xlu0 %2153
        %v2157 = vsel %vm947, %v2151, 0
        %2159 = vmatprep.subr.mxu0 0.0
        %2160 = vmatpush1.msra.mxu0 %v2154
        %2161 = vmatprep.subr.mxu0 0.0
        %2162 = vmatpush1.msra.mxu0 0.0
        %2163 = vmatprep.subr.mxu0 0.0
        %2164 = vmatpush1.msra.mxu0 0.0
        %2165 = vmatprep.subr.mxu0 0.0
        %2166 = vmatpush1.msra.mxu0 0.0
        %2167 = vmatprep.subr.mxu0 0.0
        %2168 = vmatpush1.msra.mxu0 0.0
        %2169 = vmatprep.subr.mxu0 0.0
        %2170 = vmatpush1.msra.mxu0 0.0
        %2171 = vmatprep.subr.mxu0 0.0
        %2172 = vmatpush1.msra.mxu0 0.0
        %2173 = vmatprep.subr.mxu0 0.0
        %2174 = vmatpush1.msra.mxu0 0.0
        %2175 = vmatprep.subr.mxu0 0.0
        %2176 = vmatpush1.msra.mxu0 0.0
        %2177 = vmatprep.subr.mxu0 0.0
        %2178 = vmatpush1.msra.mxu0 0.0
        %2179 = vmatprep.subr.mxu0 0.0
        %2180 = vmatpush1.msra.mxu0 0.0
        %2181 = vmatprep.subr.mxu0 0.0
        %2182 = vmatpush1.msra.mxu0 0.0
        %2183 = vmatprep.subr.mxu0 0.0
        %2184 = vmatpush1.msra.mxu0 0.0
        %2185 = vmatprep.subr.mxu0 0.0
        %2186 = vmatpush1.msra.mxu0 0.0
        %2187 = vmatprep.subr.mxu0 0.0
        %2188 = vmatpush1.msra.mxu0 0.0
        %2189 = vmatprep.subr.mxu0 0.0
        %2190 = vmatpush1.msra.mxu0 0.0
        %2191 = vmatprep.subr.mxu0 0.0
        %2192 = vmatpush1.msra.mxu0 0.0
        %2193 = vmatprep.subr.mxu0 0.0
        %2194 = vmatpush1.msra.mxu0 0.0
        %2195 = vmatprep.subr.mxu0 0.0
        %2196 = vmatpush1.msra.mxu0 0.0
        %2197 = vmatprep.subr.mxu0 0.0
        %2198 = vmatpush1.msra.mxu0 0.0
        %2199 = vmatprep.subr.mxu0 0.0
        %2200 = vmatpush1.msra.mxu0 0.0
        %2201 = vmatprep.subr.mxu0 0.0
        %2202 = vmatpush1.msra.mxu0 0.0
        %2203 = vmatprep.subr.mxu0 0.0
        %2204 = vmatpush1.msra.mxu0 0.0
        %2205 = vmatprep.subr.mxu0 0.0
        %2206 = vmatpush1.msra.mxu0 0.0
        %2207 = vmatprep.subr.mxu0 0.0
        %2208 = vmatpush1.msra.mxu0 0.0
        %2209 = vmatprep.subr.mxu0 0.0
        %2210 = vmatpush1.msra.mxu0 0.0
        %2211 = vmatprep.subr.mxu0 0.0
        %2212 = vmatpush1.msra.mxu0 0.0
        %2213 = vmatprep.subr.mxu0 0.0
        %2214 = vmatpush1.msra.mxu0 0.0
        %2215 = vmatprep.subr.mxu0 0.0
        %2216 = vmatpush1.msra.mxu0 0.0
        %2217 = vmatprep.subr.mxu0 0.0
        %2218 = vmatpush1.msra.mxu0 0.0
        %2219 = vmatprep.subr.mxu0 0.0
        %2220 = vmatpush1.msra.mxu0 0.0
        %2221 = vmatprep.subr.mxu0 0.0
        %2222 = vmatpush1.msra.mxu0 0.0
        %2223 = vmatprep.mubr.f32.mxu0 0.0
        %2224 = vmatmul.mubr.f32.gmra.mrb[0].mxu0 %v2157
        %v2225 = vpop.f32.mrb[0].mxu0
        %v2226 = vadd.f32 0.0, %v2225
        %v2227 = vpop.f32.mrb[0].mxu0
        %2228 = vdwg.mxu0
        %2229 = vrot.lane.b32.xlu0 %v1793, 112
        %v2230 = vpop.permute.xlu0 %2229
        %2231 = vrot.lane.b32.xlu0 %v1841, 112
        %v2232 = vpop.permute.xlu0 %2231
        %v2233 = vsel %vm947, %v2230, 0
        %v2235 = vsel %vm947, %v2232, 0
        %2237 = vmatprep.subr.mxu0 0.0
        %2238 = vmatpush1.xpose.msra.mxu0 %v2235
        %2239 = vmatprep.subr.mxu0 0.0
        %2240 = vmatpush1.xpose.msra.mxu0 0.0
        %2241 = vmatprep.subr.mxu0 0.0
        %2242 = vmatpush1.xpose.msra.mxu0 0.0
        %2243 = vmatprep.subr.mxu0 0.0
        %2244 = vmatpush1.xpose.msra.mxu0 0.0
        %2245 = vmatprep.subr.mxu0 0.0
        %2246 = vmatpush1.xpose.msra.mxu0 0.0
        %2247 = vmatprep.subr.mxu0 0.0
        %2248 = vmatpush1.xpose.msra.mxu0 0.0
        %2249 = vmatprep.subr.mxu0 0.0
        %2250 = vmatpush1.xpose.msra.mxu0 0.0
        %2251 = vmatprep.subr.mxu0 0.0
        %2252 = vmatpush1.xpose.msra.mxu0 0.0
        %2253 = vmatprep.subr.mxu0 0.0
        %2254 = vmatpush1.xpose.msra.mxu0 0.0
        %2255 = vmatprep.subr.mxu0 0.0
        %2256 = vmatpush1.xpose.msra.mxu0 0.0
        %2257 = vmatprep.subr.mxu0 0.0
        %2258 = vmatpush1.xpose.msra.mxu0 0.0
        %2259 = vmatprep.subr.mxu0 0.0
        %2260 = vmatpush1.xpose.msra.mxu0 0.0
        %2261 = vmatprep.subr.mxu0 0.0
        %2262 = vmatpush1.xpose.msra.mxu0 0.0
        %2263 = vmatprep.subr.mxu0 0.0
        %2264 = vmatpush1.xpose.msra.mxu0 0.0
        %2265 = vmatprep.subr.mxu0 0.0
        %2266 = vmatpush1.xpose.msra.mxu0 0.0
        %2267 = vmatprep.subr.mxu0 0.0
        %2268 = vmatpush1.xpose.msra.mxu0 0.0
        %2269 = vmatprep.subr.mxu0 0.0
        %2270 = vmatpush1.xpose.msra.mxu0 0.0
        %2271 = vmatprep.subr.mxu0 0.0
        %2272 = vmatpush1.xpose.msra.mxu0 0.0
        %2273 = vmatprep.subr.mxu0 0.0
        %2274 = vmatpush1.xpose.msra.mxu0 0.0
        %2275 = vmatprep.subr.mxu0 0.0
        %2276 = vmatpush1.xpose.msra.mxu0 0.0
        %2277 = vmatprep.subr.mxu0 0.0
        %2278 = vmatpush1.xpose.msra.mxu0 0.0
        %2279 = vmatprep.subr.mxu0 0.0
        %2280 = vmatpush1.xpose.msra.mxu0 0.0
        %2281 = vmatprep.subr.mxu0 0.0
        %2282 = vmatpush1.xpose.msra.mxu0 0.0
        %2283 = vmatprep.subr.mxu0 0.0
        %2284 = vmatpush1.xpose.msra.mxu0 0.0
        %2285 = vmatprep.subr.mxu0 0.0
        %2286 = vmatpush1.xpose.msra.mxu0 0.0
        %2287 = vmatprep.subr.mxu0 0.0
        %2288 = vmatpush1.xpose.msra.mxu0 0.0
        %2289 = vmatprep.subr.mxu0 0.0
        %2290 = vmatpush1.xpose.msra.mxu0 0.0
        %2291 = vmatprep.subr.mxu0 0.0
        %2292 = vmatpush1.xpose.msra.mxu0 0.0
        %2293 = vmatprep.subr.mxu0 0.0
        %2294 = vmatpush1.xpose.msra.mxu0 0.0
        %2295 = vmatprep.subr.mxu0 0.0
        %2296 = vmatpush1.xpose.msra.mxu0 0.0
        %2297 = vmatprep.subr.mxu0 0.0
        %2298 = vmatpush1.xpose.msra.mxu0 0.0
        %2299 = vmatprep.subr.mxu0 0.0
        %2300 = vmatpush1.xpose.msra.mxu0 0.0
        %2301 = vmatprep.mubr.f32.mxu0 0.0
        %2302 = vmatmul.mubr.f32.gmra.mrb[0].mxu0 %v2233
        %v2303 = vpop.f32.mrb[0].mxu0
        %v2304 = vadd.f32 %v775, %v2303
        %v2305 = vpop.f32.mrb[0].mxu0
        %2306 = vdwg.mxu0
        %v2307 = vadd.f32 %v2304, %v1975
        %v2308 = vsel %vm947, %v2307, -inf
        %2309 = vmax.xlane.f32.xlu0 %v2308
        %v2310 = vpop.xlane.xlu0 %2309
        %v2311 = vsub.f32 %v2307, %v2310
        %v2312 = vmul.f32 %v2311, 1.442695
        %v2313 = vpow.pop %v2312
        %v2314 = vsel %vm947, %v2313, 0.0
        %2315 = vadd.xlane.f32.xlu0 %v2314
        %v2316 = vpop.xlane.xlu0 %2315
        %v2317 = vrcp.pop %v2316
        %v2318 = vmul.f32 %v2313, %v2317
        %2319 = vrot.lane.b32.xlu0 %v1890, 112
        %v2320 = vpop.permute.xlu0 %2319
        %v2323 = vsel %vm947, %v2318, 0
        %2325 = vmatprep.subr.mxu0 0.0
        %2326 = vmatpush1.msra.mxu0 %v2320
        %2327 = vmatprep.subr.mxu0 0.0
        %2328 = vmatpush1.msra.mxu0 0.0
        %2329 = vmatprep.subr.mxu0 0.0
        %2330 = vmatpush1.msra.mxu0 0.0
        %2331 = vmatprep.subr.mxu0 0.0
        %2332 = vmatpush1.msra.mxu0 0.0
        %2333 = vmatprep.subr.mxu0 0.0
        %2334 = vmatpush1.msra.mxu0 0.0
        %2335 = vmatprep.subr.mxu0 0.0
        %2336 = vmatpush1.msra.mxu0 0.0
        %2337 = vmatprep.subr.mxu0 0.0
        %2338 = vmatpush1.msra.mxu0 0.0
        %2339 = vmatprep.subr.mxu0 0.0
        %2340 = vmatpush1.msra.mxu0 0.0
        %2341 = vmatprep.subr.mxu0 0.0
        %2342 = vmatpush1.msra.mxu0 0.0
        %2343 = vmatprep.subr.mxu0 0.0
        %2344 = vmatpush1.msra.mxu0 0.0
        %2345 = vmatprep.subr.mxu0 0.0
        %2346 = vmatpush1.msra.mxu0 0.0
        %2347 = vmatprep.subr.mxu0 0.0
        %2348 = vmatpush1.msra.mxu0 0.0
        %2349 = vmatprep.subr.mxu0 0.0
        %2350 = vmatpush1.msra.mxu0 0.0
        %2351 = vmatprep.subr.mxu0 0.0
        %2352 = vmatpush1.msra.mxu0 0.0
        %2353 = vmatprep.subr.mxu0 0.0
        %2354 = vmatpush1.msra.mxu0 0.0
        %2355 = vmatprep.subr.mxu0 0.0
        %2356 = vmatpush1.msra.mxu0 0.0
        %2357 = vmatprep.subr.mxu0 0.0
        %2358 = vmatpush1.msra.mxu0 0.0
        %2359 = vmatprep.subr.mxu0 0.0
        %2360 = vmatpush1.msra.mxu0 0.0
        %2361 = vmatprep.subr.mxu0 0.0
        %2362 = vmatpush1.msra.mxu0 0.0
        %2363 = vmatprep.subr.mxu0 0.0
        %2364 = vmatpush1.msra.mxu0 0.0
        %2365 = vmatprep.subr.mxu0 0.0
        %2366 = vmatpush1.msra.mxu0 0.0
        %2367 = vmatprep.subr.mxu0 0.0
        %2368 = vmatpush1.msra.mxu0 0.0
        %2369 = vmatprep.subr.mxu0 0.0
        %2370 = vmatpush1.msra.mxu0 0.0
        %2371 = vmatprep.subr.mxu0 0.0
        %2372 = vmatpush1.msra.mxu0 0.0
        %2373 = vmatprep.subr.mxu0 0.0
        %2374 = vmatpush1.msra.mxu0 0.0
        %2375 = vmatprep.subr.mxu0 0.0
        %2376 = vmatpush1.msra.mxu0 0.0
        %2377 = vmatprep.subr.mxu0 0.0
        %2378 = vmatpush1.msra.mxu0 0.0
        %2379 = vmatprep.subr.mxu0 0.0
        %2380 = vmatpush1.msra.mxu0 0.0
        %2381 = vmatprep.subr.mxu0 0.0
        %2382 = vmatpush1.msra.mxu0 0.0
        %2383 = vmatprep.subr.mxu0 0.0
        %2384 = vmatpush1.msra.mxu0 0.0
        %2385 = vmatprep.subr.mxu0 0.0
        %2386 = vmatpush1.msra.mxu0 0.0
        %2387 = vmatprep.subr.mxu0 0.0
        %2388 = vmatpush1.msra.mxu0 0.0
        %2389 = vmatprep.mubr.f32.mxu0 0.0
        %2390 = vmatmul.mubr.f32.gmra.mrb[0].mxu0 %v2323
        %v2391 = vpop.f32.mrb[0].mxu0
        %v2392 = vadd.f32 0.0, %v2391
        %v2393 = vpop.f32.mrb[0].mxu0
        %2394 = vdwg.mxu0
        %2395 = vrot.lane.b32.xlu0 %v1793, 104
        %v2396 = vpop.permute.xlu0 %2395
        %2397 = vrot.lane.b32.xlu0 %v1841, 104
        %v2398 = vpop.permute.xlu0 %2397
        %v2399 = vsel %vm947, %v2396, 0
        %v2401 = vsel %vm947, %v2398, 0
        %2403 = vmatprep.subr.mxu0 0.0
        %2404 = vmatpush1.xpose.msra.mxu0 %v2401
        %2405 = vmatprep.subr.mxu0 0.0
        %2406 = vmatpush1.xpose.msra.mxu0 0.0
        %2407 = vmatprep.subr.mxu0 0.0
        %2408 = vmatpush1.xpose.msra.mxu0 0.0
        %2409 = vmatprep.subr.mxu0 0.0
        %2410 = vmatpush1.xpose.msra.mxu0 0.0
        %2411 = vmatprep.subr.mxu0 0.0
        %2412 = vmatpush1.xpose.msra.mxu0 0.0
        %2413 = vmatprep.subr.mxu0 0.0
        %2414 = vmatpush1.xpose.msra.mxu0 0.0
        %2415 = vmatprep.subr.mxu0 0.0
        %2416 = vmatpush1.xpose.msra.mxu0 0.0
        %2417 = vmatprep.subr.mxu0 0.0
        %2418 = vmatpush1.xpose.msra.mxu0 0.0
        %2419 = vmatprep.subr.mxu0 0.0
        %2420 = vmatpush1.xpose.msra.mxu0 0.0
        %2421 = vmatprep.subr.mxu0 0.0
        %2422 = vmatpush1.xpose.msra.mxu0 0.0
        %2423 = vmatprep.subr.mxu0 0.0
        %2424 = vmatpush1.xpose.msra.mxu0 0.0
        %2425 = vmatprep.subr.mxu0 0.0
        %2426 = vmatpush1.xpose.msra.mxu0 0.0
        %2427 = vmatprep.subr.mxu0 0.0
        %2428 = vmatpush1.xpose.msra.mxu0 0.0
        %2429 = vmatprep.subr.mxu0 0.0
        %2430 = vmatpush1.xpose.msra.mxu0 0.0
        %2431 = vmatprep.subr.mxu0 0.0
        %2432 = vmatpush1.xpose.msra.mxu0 0.0
        %2433 = vmatprep.subr.mxu0 0.0
        %2434 = vmatpush1.xpose.msra.mxu0 0.0
        %2435 = vmatprep.subr.mxu0 0.0
        %2436 = vmatpush1.xpose.msra.mxu0 0.0
        %2437 = vmatprep.subr.mxu0 0.0
        %2438 = vmatpush1.xpose.msra.mxu0 0.0
        %2439 = vmatprep.subr.mxu0 0.0
        %2440 = vmatpush1.xpose.msra.mxu0 0.0
        %2441 = vmatprep.subr.mxu0 0.0
        %2442 = vmatpush1.xpose.msra.mxu0 0.0
        %2443 = vmatprep.subr.mxu0 0.0
        %2444 = vmatpush1.xpose.msra.mxu0 0.0
        %2445 = vmatprep.subr.mxu0 0.0
        %2446 = vmatpush1.xpose.msra.mxu0 0.0
        %2447 = vmatprep.subr.mxu0 0.0
        %2448 = vmatpush1.xpose.msra.mxu0 0.0
        %2449 = vmatprep.subr.mxu0 0.0
        %2450 = vmatpush1.xpose.msra.mxu0 0.0
        %2451 = vmatprep.subr.mxu0 0.0
        %2452 = vmatpush1.xpose.msra.mxu0 0.0
        %2453 = vmatprep.subr.mxu0 0.0
        %2454 = vmatpush1.xpose.msra.mxu0 0.0
        %2455 = vmatprep.subr.mxu0 0.0
        %2456 = vmatpush1.xpose.msra.mxu0 0.0
        %2457 = vmatprep.subr.mxu0 0.0
        %2458 = vmatpush1.xpose.msra.mxu0 0.0
        %2459 = vmatprep.subr.mxu0 0.0
        %2460 = vmatpush1.xpose.msra.mxu0 0.0
        %2461 = vmatprep.subr.mxu0 0.0
        %2462 = vmatpush1.xpose.msra.mxu0 0.0
        %2463 = vmatprep.subr.mxu0 0.0
        %2464 = vmatpush1.xpose.msra.mxu0 0.0
        %2465 = vmatprep.subr.mxu0 0.0
        %2466 = vmatpush1.xpose.msra.mxu0 0.0
        %2467 = vmatprep.mubr.f32.mxu0 0.0
        %2468 = vmatmul.mubr.f32.gmra.mrb[0].mxu0 %v2399
        %v2469 = vpop.f32.mrb[0].mxu0
        %v2470 = vadd.f32 %v775, %v2469
        %v2471 = vpop.f32.mrb[0].mxu0
        %2472 = vdwg.mxu0
        %v2473 = vadd.f32 %v2470, %v1975
        %v2474 = vsel %vm947, %v2473, -inf
        %2475 = vmax.xlane.f32.xlu0 %v2474
        %v2476 = vpop.xlane.xlu0 %2475
        %v2477 = vsub.f32 %v2473, %v2476
        %v2478 = vmul.f32 %v2477, 1.442695
        %v2479 = vpow.pop %v2478
        %v2480 = vsel %vm947, %v2479, 0.0
        %2481 = vadd.xlane.f32.xlu0 %v2480
        %v2482 = vpop.xlane.xlu0 %2481
        %v2483 = vrcp.pop %v2482
        %v2484 = vmul.f32 %v2479, %v2483
        %2485 = vrot.lane.b32.xlu0 %v1890, 104
        %v2486 = vpop.permute.xlu0 %2485
        %v2489 = vsel %vm947, %v2484, 0
        %2491 = vmatprep.subr.mxu0 0.0
        %2492 = vmatpush1.msra.mxu0 %v2486
        %2493 = vmatprep.subr.mxu0 0.0
        %2494 = vmatpush1.msra.mxu0 0.0
        %2495 = vmatprep.subr.mxu0 0.0
        %2496 = vmatpush1.msra.mxu0 0.0
        %2497 = vmatprep.subr.mxu0 0.0
        %2498 = vmatpush1.msra.mxu0 0.0
        %2499 = vmatprep.subr.mxu0 0.0
        %2500 = vmatpush1.msra.mxu0 0.0
        %2501 = vmatprep.subr.mxu0 0.0
        %2502 = vmatpush1.msra.mxu0 0.0
        %2503 = vmatprep.subr.mxu0 0.0
        %2504 = vmatpush1.msra.mxu0 0.0
        %2505 = vmatprep.subr.mxu0 0.0
        %2506 = vmatpush1.msra.mxu0 0.0
        %2507 = vmatprep.subr.mxu0 0.0
        %2508 = vmatpush1.msra.mxu0 0.0
        %2509 = vmatprep.subr.mxu0 0.0
        %2510 = vmatpush1.msra.mxu0 0.0
        %2511 = vmatprep.subr.mxu0 0.0
        %2512 = vmatpush1.msra.mxu0 0.0
        %2513 = vmatprep.subr.mxu0 0.0
        %2514 = vmatpush1.msra.mxu0 0.0
        %2515 = vmatprep.subr.mxu0 0.0
        %2516 = vmatpush1.msra.mxu0 0.0
        %2517 = vmatprep.subr.mxu0 0.0
        %2518 = vmatpush1.msra.mxu0 0.0
        %2519 = vmatprep.subr.mxu0 0.0
        %2520 = vmatpush1.msra.mxu0 0.0
        %2521 = vmatprep.subr.mxu0 0.0
        %2522 = vmatpush1.msra.mxu0 0.0
        %2523 = vmatprep.subr.mxu0 0.0
        %2524 = vmatpush1.msra.mxu0 0.0
        %2525 = vmatprep.subr.mxu0 0.0
        %2526 = vmatpush1.msra.mxu0 0.0
        %2527 = vmatprep.subr.mxu0 0.0
        %2528 = vmatpush1.msra.mxu0 0.0
        %2529 = vmatprep.subr.mxu0 0.0
        %2530 = vmatpush1.msra.mxu0 0.0
        %2531 = vmatprep.subr.mxu0 0.0
        %2532 = vmatpush1.msra.mxu0 0.0
        %2533 = vmatprep.subr.mxu0 0.0
        %2534 = vmatpush1.msra.mxu0 0.0
        %2535 = vmatprep.subr.mxu0 0.0
        %2536 = vmatpush1.msra.mxu0 0.0
        %2537 = vmatprep.subr.mxu0 0.0
        %2538 = vmatpush1.msra.mxu0 0.0
        %2539 = vmatprep.subr.mxu0 0.0
        %2540 = vmatpush1.msra.mxu0 0.0
        %2541 = vmatprep.subr.mxu0 0.0
        %2542 = vmatpush1.msra.mxu0 0.0
        %2543 = vmatprep.subr.mxu0 0.0
        %2544 = vmatpush1.msra.mxu0 0.0
        %2545 = vmatprep.subr.mxu0 0.0
        %2546 = vmatpush1.msra.mxu0 0.0
        %2547 = vmatprep.subr.mxu0 0.0
        %2548 = vmatpush1.msra.mxu0 0.0
        %2549 = vmatprep.subr.mxu0 0.0
        %2550 = vmatpush1.msra.mxu0 0.0
        %2551 = vmatprep.subr.mxu0 0.0
        %2552 = vmatpush1.msra.mxu0 0.0
        %2553 = vmatprep.subr.mxu0 0.0
        %2554 = vmatpush1.msra.mxu0 0.0
        %2555 = vmatprep.mubr.f32.mxu0 0.0
        %2556 = vmatmul.mubr.f32.gmra.mrb[0].mxu0 %v2489
        %v2557 = vpop.f32.mrb[0].mxu0
        %v2558 = vadd.f32 0.0, %v2557
        %v2559 = vpop.f32.mrb[0].mxu0
        %2560 = vdwg.mxu0
        %2562 = vrot.lane.b32.xlu0 %v2226, 8
        %v2563 = vpop.permute.xlu0 %2562
        %2566 = vrot.lane.b32.xlu0 %v2392, 16
        %v2567 = vpop.permute.xlu0 %2566
        %2570 = vrot.lane.b32.xlu0 %v2558, 24
        %v2571 = vpop.permute.xlu0 %2570
        %v2573 = vsel %vm947, %v2059, %v2563
        %v2574 = vsel %vm1627, %v2573, %v2567
        %v2575 = vsel %vm1629, %v2574, %v2571
        %v2576 = vpack.c.bf16 %v2575, %v2575
        %v2577 = vld [vmem:[#allocation13] sm:$0xf]
        %v2578 = vld [vmem:[#allocation13 + $0x4] sm:$0xf]
        %v2579 = vld [vmem:[#allocation13 + $0x8] sm:$0xf]
        %v2580 = vld [vmem:[#allocation13 + $0xc] sm:$0xf]
        %v2581 = vld [vmem:[#allocation14] sm:$0x1]
        %v2583 = vlaneseq
        %v2584 = vshrl.u32 %v2583, 7
        %v2585 = vsub.s32 0, %v2584
        %v2586 = vrot.slane %v2581, %v2585
        %v2592 = vunpack.c.l.b16 %v2577
        %v2593 = vunpack.c.l.b16 %v2578
        %v2594 = vunpack.c.l.b16 %v2579
        %v2595 = vunpack.c.l.b16 %v2580
        %v2596 = vpack.c.b16 %v2593, %v2592
        %v2597 = vpack.c.b16 %v2595, %v2594
        %v2601 = vsel %vm804, %v2576, 0
        %2603 = vmatprep.subr.bf16.mxu0 0
        %2604 = vmatpush1.bf16.msra.mxu0 %v2596
        %2605 = vmatprep.subr.bf16.mxu0 0
        %2606 = vmatpush1.bf16.msra.mxu0 %v2597
        %2607 = vmatprep.subr.bf16.mxu0 0
        %2608 = vmatpush1.bf16.msra.mxu0 0
        %2609 = vmatprep.subr.bf16.mxu0 0
        %2610 = vmatpush1.bf16.msra.mxu0 0
        %2611 = vmatprep.subr.bf16.mxu0 0
        %2612 = vmatpush1.bf16.msra.mxu0 0
        %2613 = vmatprep.subr.bf16.mxu0 0
        %2614 = vmatpush1.bf16.msra.mxu0 0
        %2615 = vmatprep.subr.bf16.mxu0 0
        %2616 = vmatpush1.bf16.msra.mxu0 0
        %2617 = vmatprep.subr.bf16.mxu0 0
        %2618 = vmatpush1.bf16.msra.mxu0 0
        %2619 = vmatprep.subr.bf16.mxu0 0
        %2620 = vmatpush1.bf16.msra.mxu0 0
        %2621 = vmatprep.subr.bf16.mxu0 0
        %2622 = vmatpush1.bf16.msra.mxu0 0
        %2623 = vmatprep.subr.bf16.mxu0 0
        %2624 = vmatpush1.bf16.msra.mxu0 0
        %2625 = vmatprep.subr.bf16.mxu0 0
        %2626 = vmatpush1.bf16.msra.mxu0 0
        %2627 = vmatprep.subr.bf16.mxu0 0
        %2628 = vmatpush1.bf16.msra.mxu0 0
        %2629 = vmatprep.subr.bf16.mxu0 0
        %2630 = vmatpush1.bf16.msra.mxu0 0
        %2631 = vmatprep.subr.bf16.mxu0 0
        %2632 = vmatpush1.bf16.msra.mxu0 0
        %2633 = vmatprep.subr.bf16.mxu0 0
        %2634 = vmatpush1.bf16.msra.mxu0 0
        %2635 = vmatprep.mubr.bf16.mxu0 0
        %2636 = vmatmul.mubr.bf16.gmra.mrb[0].mxu0 %v2601
        %v2637 = vpop.f32.mrb[0].mxu0
        %v2638 = vadd.f32 %v2586, %v2637
        %v2639 = vpop.f32.mrb[0].mxu0
        %v2640 = vpop.f32.mrb[0].mxu0
        %v2641 = vpop.f32.mrb[0].mxu0
        %2642 = vdwg.mxu0
        %v2643 = vadd.f32 %v1724, %v2638
        %v2644 = vld [vmem:[#allocation16 + $0x1] sm:$0x1]
        %v2645 = vld [vmem:[%s14 + $0x1] sm:$0x1]
        %v2646 = vsel %vm804, %v2643, 0.0
        %2647 = vadd.xlane.f32.xlu0 %v2646
        %v2648 = vpop.xlane.xlu0 %2647
        %v2649 = vmul.f32 %v2648, %v1704
        %v2650 = vsub.f32 %v2643, %v2649
        %v2651 = vmul.f32 %v2650, %v2650
        %v2652 = vsel %vm804, %v2651, 0.0
        %2653 = vadd.xlane.f32.xlu0 %v2652
        %v2654 = vpop.xlane.xlu0 %2653
        %v2655 = vmul.f32 %v2654, %v1704
        %v2656 = vadd.f32 %v2655, 1e-05
        %v2657 = vrsqrt.pop %v2656
        %v2658 = vmul.f32 %v2650, %v2657
        %v2659 = vlaneseq
        %v2660 = vshrl.u32 %v2659, 7
        %v2661 = vsub.s32 0, %v2660
        %v2662 = vrot.slane %v2644, %v2661
        %v2663 = vmul.f32 %v2658, %v2662
        %v2664 = vlaneseq
        %v2665 = vshrl.u32 %v2664, 7
        %v2666 = vsub.s32 0, %v2665
        %v2667 = vrot.slane %v2645, %v2666
        %v2668 = vadd.f32 %v2663, %v2667
        %v2669 = vpack.c.bf16 %v2668, %v2668
        %v2670 = vld [vmem:[%s15] sm:$0xf]
        %v2671 = vld [vmem:[%s15 + $0x4] sm:$0xf]
        %v2672 = vld [vmem:[%s15 + $0x8] sm:$0xf]
        %v2673 = vld [vmem:[%s15 + $0xc] sm:$0xf]
        %v2674 = vld [vmem:[%s16] sm:$0x1]
        %v2676 = vlaneseq
        %v2677 = vshrl.u32 %v2676, 7
        %v2678 = vsub.s32 0, %v2677
        %v2679 = vrot.slane %v2674, %v2678
        %v2685 = vunpack.c.l.b16 %v2670
        %v2686 = vunpack.c.l.b16 %v2671
        %v2687 = vunpack.c.l.b16 %v2672
        %v2688 = vunpack.c.l.b16 %v2673
        %v2689 = vpack.c.b16 %v2686, %v2685
        %v2690 = vpack.c.b16 %v2688, %v2687
        %v2694 = vsel %vm804, %v2669, 0
        %2696 = vmatprep.subr.bf16.mxu0 0
        %2697 = vmatpush1.bf16.msra.mxu0 %v2689
        %2698 = vmatprep.subr.bf16.mxu0 0
        %2699 = vmatpush1.bf16.msra.mxu0 %v2690
        %2700 = vmatprep.subr.bf16.mxu0 0
        %2701 = vmatpush1.bf16.msra.mxu0 0
        %2702 = vmatprep.subr.bf16.mxu0 0
        %2703 = vmatpush1.bf16.msra.mxu0 0
        %2704 = vmatprep.subr.bf16.mxu0 0
        %2705 = vmatpush1.bf16.msra.mxu0 0
        %2706 = vmatprep.subr.bf16.mxu0 0
        %2707 = vmatpush1.bf16.msra.mxu0 0
        %2708 = vmatprep.subr.bf16.mxu0 0
        %2709 = vmatpush1.bf16.msra.mxu0 0
        %2710 = vmatprep.subr.bf16.mxu0 0
        %2711 = vmatpush1.bf16.msra.mxu0 0
        %2712 = vmatprep.subr.bf16.mxu0 0
        %2713 = vmatpush1.bf16.msra.mxu0 0
        %2714 = vmatprep.subr.bf16.mxu0 0
        %2715 = vmatpush1.bf16.msra.mxu0 0
        %2716 = vmatprep.subr.bf16.mxu0 0
        %2717 = vmatpush1.bf16.msra.mxu0 0
        %2718 = vmatprep.subr.bf16.mxu0 0
        %2719 = vmatpush1.bf16.msra.mxu0 0
        %2720 = vmatprep.subr.bf16.mxu0 0
        %2721 = vmatpush1.bf16.msra.mxu0 0
        %2722 = vmatprep.subr.bf16.mxu0 0
        %2723 = vmatpush1.bf16.msra.mxu0 0
        %2724 = vmatprep.subr.bf16.mxu0 0
        %2725 = vmatpush1.bf16.msra.mxu0 0
        %2726 = vmatprep.subr.bf16.mxu0 0
        %2727 = vmatpush1.bf16.msra.mxu0 0
        %2728 = vmatprep.mubr.bf16.mxu0 0
        %2729 = vmatmul.mubr.bf16.gmra.mrb[0].mxu0 %v2694
        %v2730 = vpop.f32.mrb[0].mxu0
        %v2731 = vadd.f32 %v2679, %v2730
        %v2732 = vpop.f32.mrb[0].mxu0
        %v2733 = vpop.f32.mrb[0].mxu0
        %v2734 = vpop.f32.mrb[0].mxu0
        %2735 = vdwg.mxu0
        %v2736 = vmax.f32 %v2731, 0.0
        %v2737 = vpack.c.bf16 %v2736, %v2736
        %v2738 = vld [vmem:[%s17] sm:$0xf]
        %v2739 = vld [vmem:[%s17 + $0x4] sm:$0xf]
        %v2740 = vld [vmem:[%s17 + $0x8] sm:$0xf]
        %v2741 = vld [vmem:[%s17 + $0xc] sm:$0xf]
        %v2742 = vld [vmem:[%s17 + $0x10] sm:$0xf]
        %v2743 = vld [vmem:[%s17 + $0x14] sm:$0xf]
        %v2744 = vld [vmem:[%s17 + $0x18] sm:$0xf]
        %v2745 = vld [vmem:[%s17 + $0x1c] sm:$0xf]
        %v2746 = vld [vmem:[%s18] sm:$0x1]
        %v2748 = vlaneseq
        %v2749 = vshrl.u32 %v2748, 7
        %v2750 = vsub.s32 0, %v2749
        %v2751 = vrot.slane %v2746, %v2750
        %v2761 = vunpack.c.l.b16 %v2738
        %v2762 = vunpack.c.l.b16 %v2739
        %v2763 = vunpack.c.l.b16 %v2740
        %v2764 = vunpack.c.l.b16 %v2741
        %v2765 = vunpack.c.l.b16 %v2742
        %v2766 = vunpack.c.l.b16 %v2743
        %v2767 = vunpack.c.l.b16 %v2744
        %v2768 = vunpack.c.l.b16 %v2745
        %v2769 = vpack.c.b16 %v2762, %v2761
        %v2770 = vpack.c.b16 %v2764, %v2763
        %v2771 = vpack.c.b16 %v2766, %v2765
        %v2772 = vpack.c.b16 %v2768, %v2767
        %vm2777 = vcmask 523264
        %v2779 = vsel %vm2777, %v2737, 0
        %2781 = vmatprep.subr.bf16.mxu0 0
        %2782 = vmatpush1.bf16.msra.mxu0 %v2769
        %2783 = vmatprep.subr.bf16.mxu0 0
        %2784 = vmatpush1.bf16.msra.mxu0 %v2770
        %2785 = vmatprep.subr.bf16.mxu0 0
        %2786 = vmatpush1.bf16.msra.mxu0 %v2771
        %2787 = vmatprep.subr.bf16.mxu0 0
        %2788 = vmatpush1.bf16.msra.mxu0 %v2772
        %2789 = vmatprep.subr.bf16.mxu0 0
        %2790 = vmatpush1.bf16.msra.mxu0 0
        %2791 = vmatprep.subr.bf16.mxu0 0
        %2792 = vmatpush1.bf16.msra.mxu0 0
        %2793 = vmatprep.subr.bf16.mxu0 0
        %2794 = vmatpush1.bf16.msra.mxu0 0
        %2795 = vmatprep.subr.bf16.mxu0 0
        %2796 = vmatpush1.bf16.msra.mxu0 0
        %2797 = vmatprep.subr.bf16.mxu0 0
        %2798 = vmatpush1.bf16.msra.mxu0 0
        %2799 = vmatprep.subr.bf16.mxu0 0
        %2800 = vmatpush1.bf16.msra.mxu0 0
        %2801 = vmatprep.subr.bf16.mxu0 0
        %2802 = vmatpush1.bf16.msra.mxu0 0
        %2803 = vmatprep.subr.bf16.mxu0 0
        %2804 = vmatpush1.bf16.msra.mxu0 0
        %2805 = vmatprep.subr.bf16.mxu0 0
        %2806 = vmatpush1.bf16.msra.mxu0 0
        %2807 = vmatprep.subr.bf16.mxu0 0
        %2808 = vmatpush1.bf16.msra.mxu0 0
        %2809 = vmatprep.subr.bf16.mxu0 0
        %2810 = vmatpush1.bf16.msra.mxu0 0
        %2811 = vmatprep.subr.bf16.mxu0 0
        %2812 = vmatpush1.bf16.msra.mxu0 0
        %2813 = vmatprep.mubr.bf16.mxu0 0
        %2814 = vmatmul.mubr.bf16.gmra.mrb[0].mxu0 %v2779
        %v2815 = vpop.f32.mrb[0].mxu0
        %v2816 = vadd.f32 %v2751, %v2815
        %v2817 = vpop.f32.mrb[0].mxu0
        %v2818 = vpop.f32.mrb[0].mxu0
        %v2819 = vpop.f32.mrb[0].mxu0
        %2820 = vdwg.mxu0
        %v2821 = vadd.f32 %v2668, %v2816
        %v2822 = vld [vmem:[#allocation16 + $0x2] sm:$0x1]
        %v2823 = vld [vmem:[%s14 + $0x2] sm:$0x1]
        %v2824 = vsel %vm804, %v2821, 0.0
        %2825 = vadd.xlane.f32.xlu0 %v2824
        %v2826 = vpop.xlane.xlu0 %2825
        %v2827 = vmul.f32 %v2826, %v1704
        %v2828 = vsub.f32 %v2821, %v2827
        %v2829 = vmul.f32 %v2828, %v2828
        %v2830 = vsel %vm804, %v2829, 0.0
        %2831 = vadd.xlane.f32.xlu0 %v2830
        %v2832 = vpop.xlane.xlu0 %2831
        %v2833 = vmul.f32 %v2832, %v1704
        %v2834 = vadd.f32 %v2833, 1e-05
        %v2835 = vrsqrt.pop %v2834
        %v2836 = vmul.f32 %v2828, %v2835
        %v2837 = vlaneseq
        %v2838 = vshrl.u32 %v2837, 7
        %v2839 = vsub.s32 0, %v2838
        %v2840 = vrot.slane %v2822, %v2839
        %v2841 = vmul.f32 %v2836, %v2840
        %v2842 = vlaneseq
        %v2843 = vshrl.u32 %v2842, 7
        %v2844 = vsub.s32 0, %v2843
        %v2845 = vrot.slane %v2823, %v2844
        %v2846 = vadd.f32 %v2841, %v2845
        %2847 = vst.msk [vmem:[%s763] sm:$0xff] %vm804, %v2846
        %s2848 = sand.u32 %s467, 1
        %s2849 = scalar_lea.sflag [#allocation4], %s2848
        %s2850 = sand.u32 %s467, 1
        %s2851 = smul.addr %s2850, 8
        %s2852 = scalar_lea.vmem [#allocation17], %s2851
        // Predicated region
        $region133: #{tpu_custom_call.1} parent=95 // pred_check
          %p2853 = pneg %p477
        $region134: #{tpu_custom_call.1} parent=95 // pred_check_branch
          %2855 = sbr.rel (%p2853) target = $region136
        $region135: #{tpu_custom_call.1} parent=95 // pred_region
          %s2857 = ssub.s32 128, 128
          %2858 = vsyncadd %s2849, %s2857
          %s2859 = smul.addr %s40, 128
          %s2860 = scalar_lea.hbm %s19, %s2859
          %s2862 = sshll.u32 %s2852, 4
          %s2863 = int_to_ptr.vmem [resolvable:$true] %s2862
          %2865 = dma.vmem_to_hbm [thread:$0]  %s2863, 128, %s2860, %s2849
        $region136: #{tpu_custom_call.1} parent=95 // pred_fallthru
          _
      $region96: #{tpu_custom_call.1} parent=5 // pred_fallthru
        _
      %p2866 = scmp.le.s32.totalorder 2, %s35
      // Predicated region
      $region137: #{tpu_custom_call.1} parent=5 // pred_check
        %p2867 = pneg %p2866
      $region138: #{tpu_custom_call.1} parent=5 // pred_check_branch
        %2869 = sbr.rel (%p2867) target = $region140
      $region139: #{tpu_custom_call.1} parent=5 // pred_region
        %s2870 = ssub.s32 %s35, 2
        // Predicated region
        $region141: #{tpu_custom_call.1} parent=139 // pred_check
          %p2871 = pneg %p483
        $region142: #{tpu_custom_call.1} parent=139 // pred_check_branch
          %2873 = sbr.rel (%p2871) target = $region144
        $region143: #{tpu_custom_call.1} parent=139 // pred_region
          %s2874 = sand.u32 %s468, 1
          %s2875 = scalar_lea.sflag [#allocation4], %s2874
          %s2876 = sand.u32 %s468, 1
          %s2877 = smul.addr %s2876, 8
          %s2878 = scalar_lea.vmem [#allocation17], %s2877
          %2879 = dma.done %s2875, 128
        $region144: #{tpu_custom_call.1} parent=139 // pred_fallthru
          _
      $region140: #{tpu_custom_call.1} parent=5 // pred_fallthru
        _
    $region6: #{tpu_custom_call.1} parent=1 // loop_footer
      %s39 = sadd.s32 1, %s35
    $region7: #{tpu_custom_call.1} parent=1 // loop_footer_branch
      %34 = sbr.rel target = $region3
    $region8: #{tpu_custom_call.1} parent=1 // loop_exit
      _
    %2880 = vsyncpa [#allocation3], 1
    %s2881 = scalar_lea.sflag [#allocation3], 1
    %2882 = vsyncpa %s2881, 1
    %2883 = vsyncpa [#allocation6], 1
    %s2884 = scalar_lea.sflag [#allocation6], 1
    %2885 = vsyncpa %s2884, 1
    %2886 = vsyncpa [#allocation9], 1
    %2887 = vsyncpa [#allocation12], 1
    %2888 = vsyncpa [#allocation15], 1
    %2889 = vsyncpa [#allocation4], 1
    %s2890 = scalar_lea.sflag [#allocation4], 1
    %2891 = vsyncpa %s2890, 1

</llo_original>
